<compile_context>
chip_gen: v7x
topology: tpu7x:2x2x1
jax: 0.10.0
libtpu: 0.0.40
codegen_flags: <defaults>
</compile_context>

<pallas_src>
import jax
import jax.numpy as jnp
from jax.experimental import pallas as pl
from jax.experimental.pallas import tpu as pltpu

# ----------------------------- configuration -------------------------------
B = 2            # batch
DIM = 32         # channels of the feature map (dim)
SP = 16          # spatial size (SP x SP); seq = SP*SP = 256 (<=32 => no downsample)
NUM_HEADS = 2
HEAD_DIM = 64
INNER = NUM_HEADS * HEAD_DIM          # 128
SEQ = SP * SP                         # 256
SCALE = HEAD_DIM ** (-0.5)
TQ = 128                              # query-tile width (lane-aligned)


# ------------------------------- kernel ------------------------------------
def cross_attention_kernel(x_ref, e_ref,
                           wq_ref, bq_ref,
                           wkv_ref, bkv_ref,
                           wo_ref, bo_ref,
                           o_ref,
                           qT_ref, kvT_ref, ohT_ref):
    """Channel-major (lane-dense) cross-attention for `nb` batch rows.

    x_ref/e_ref : [nb, C, S]
    wq_ref      : [INNER, C]   (pre-scaled by SCALE), bq_ref: [INNER, 1]
    wkv_ref     : [2*INNER, C] (K rows then V rows),  bkv_ref: [2*INNER, 1]
    wo_ref      : [C, INNER],  bo_ref: [C, 1]
    o_ref       : [nb, C, S]   (out^T, lane-dense)
    qT_ref      : VMEM [nb, INNER, S]    scratch (q^T, already scaled)
    kvT_ref     : VMEM [nb, 2*INNER, S]  scratch ([k; v]^T)
    ohT_ref     : VMEM [nb, INNER, S]    scratch (per-head attention out^T)
    """
    nb = x_ref.shape[0]
    seq = x_ref.shape[2]
    n_q_tiles = seq // TQ

    for b in range(nb):
        # Fused projections (MXU) into lane-dense scratch:
        #   q^T = (scale*Wq) @ x^T + scale*bq ; [k; v]^T = Wkv @ e^T + bkv
        qT_ref[b] = (jnp.dot(wq_ref[...], x_ref[b],
                             preferred_element_type=jnp.float32)
                     + bq_ref[...])                                   # [INNER, S]
        kvT_ref[b] = (jnp.dot(wkv_ref[...], e_ref[b],
                              preferred_element_type=jnp.float32)
                      + bkv_ref[...])                                 # [2*INNER, S]

        for h in range(NUM_HEADS):
            r0 = h * HEAD_DIM
            for qc in range(n_q_tiles):
                c0 = qc * TQ
                # scores^T for this query tile: contract over the head dim of
                # both channel-major operands -> [S_k, TQ] (no explicit
                # transpose; Mosaic handles the operand orientation).
                sT = jax.lax.dot_general(
                    kvT_ref[b, r0:r0 + HEAD_DIM, :],                  # k^T [D, S]
                    qT_ref[b, r0:r0 + HEAD_DIM, c0:c0 + TQ],          # q^T [D, TQ]
                    dimension_numbers=(((0,), (0,)), ((), ())),
                    preferred_element_type=jnp.float32)               # [S_k, TQ]

                # softmax over the key axis (axis 0 of the transposed tile)
                m = jnp.max(sT, axis=0, keepdims=True)                # [1, TQ]
                p = jnp.exp(sT - m)                                   # [S_k, TQ]
                denom = jnp.sum(p, axis=0, keepdims=True)             # [1, TQ]

                # Un-normalized attention output, deferred normalization with
                # an exact reciprocal (single vreg -> essentially free).
                ohT = jnp.dot(
                    kvT_ref[b, INNER + r0:INNER + r0 + HEAD_DIM, :],  # v^T [D, S]
                    p, preferred_element_type=jnp.float32)            # [D, TQ]
                ohT_ref[b, r0:r0 + HEAD_DIM, c0:c0 + TQ] = (
                    ohT * pl.reciprocal(denom, approx=False))

        # Single fused output projection (K = INNER = 128, N = S = 256):
        #   out^T = Wo @ ohT_all + bo
        o_ref[b] = (jnp.dot(wo_ref[...], ohT_ref[b],
                            preferred_element_type=jnp.float32)
                    + bo_ref[...])


# ------------------------------ wrapper -------------------------------------
def _single_tensorcore_device() -> bool:
    """Best-effort: True for single-TC parts (v5e / v6e)."""
    try:
        kind = jax.devices()[0].device_kind.lower()
    except Exception:
        return False
    return any(t in kind for t in
               ("v5e", "v5 lite", "v5lite", "v6e", "v6 lite", "v6lite"))


@jax.jit
def cross_attention(x, embedding, params):
    """x, embedding: NCHW float32 [B, C, H, W] with identical shapes.

    params are in PyTorch nn.Linear layout: weight [out, in], bias [out].
    """
    b, c, h, w = x.shape
    s = h * w
    # Only the main (no-downsample, matching-shape) branch is implemented.
    assert embedding.shape == x.shape, "x/embedding shape mismatch branches not implemented"
    assert int(round(s ** 0.5)) <= 32, "adaptive-pool downsample branch not implemented"
    assert s % TQ == 0 and c % 8 == 0

    # NCHW -> [B, C, S]  (pure reshape; stays channel-major, no HBM transpose)
    x_cm = x.reshape(b, c, s)
    e_cm = embedding.reshape(b, c, s)

    wq, bq, wk, bk, wv, bv, wo, bo = params
    inner = wq.shape[0]

    # Fold the attention scale into the Q projection (free, host-side).
    wq_s = wq * SCALE                                 # [INNER, C]
    bq_s = (bq * SCALE)[:, None]                      # [INNER, 1]
    # Fuse K and V into one projection; biases as [rows, 1] columns so they
    # broadcast along the lane (seq) axis in-kernel.
    wkv = jnp.concatenate([wk, wv], axis=0)           # [2*INNER, C]
    bkv = jnp.concatenate([bk, bv], axis=0)[:, None]  # [2*INNER, 1]
    bo2 = bo[:, None]                                 # [C, 1]

    # Single-TC (v5e/v6e): fold the batch into one grid step (saves one
    # ~0.35us grid step).  Multi-TC (v7x / megacore): grid=(B,) "parallel"
    # shards the batch across TensorCores.  Same kernel body for both.
    if _single_tensorcore_device():
        nb_step, grid = b, (1,)
    else:
        nb_step, grid = 1, (b,)

    grid_spec = pltpu.PrefetchScalarGridSpec(
        num_scalar_prefetch=0,
        grid=grid,
        in_specs=[
            pl.BlockSpec((nb_step, c, s), lambda i: (i, 0, 0)),        # x  [nb,C,S]
            pl.BlockSpec((nb_step, c, s), lambda i: (i, 0, 0)),        # e  [nb,C,S]
            pl.BlockSpec((inner, c), lambda i: (0, 0)),                # Wq*scale
            pl.BlockSpec((inner, 1), lambda i: (0, 0)),                # bq*scale
            pl.BlockSpec((2 * inner, c), lambda i: (0, 0)),            # Wkv
            pl.BlockSpec((2 * inner, 1), lambda i: (0, 0)),            # bkv
            pl.BlockSpec((c, inner), lambda i: (0, 0)),                # Wo
            pl.BlockSpec((c, 1), lambda i: (0, 0)),                    # bo
        ],
        out_specs=pl.BlockSpec((nb_step, c, s), lambda i: (i, 0, 0)),  # out^T
        scratch_shapes=[
            pltpu.VMEM((nb_step, inner, s), jnp.float32),      # q^T
            pltpu.VMEM((nb_step, 2 * inner, s), jnp.float32),  # [k; v]^T
            pltpu.VMEM((nb_step, inner, s), jnp.float32),      # per-head out^T
        ],
    )

    out_cm = pl.pallas_call(
        cross_attention_kernel,
        out_shape=jax.ShapeDtypeStruct((b, c, s), jnp.float32),
        grid_spec=grid_spec,
        compiler_params=pltpu.CompilerParams(
            dimension_semantics=("parallel",)),
    )(x_cm, e_cm, wq_s, bq_s, wkv, bkv, wo, bo2)

    # [B, C, S] -> NCHW  (pure reshape, no transpose)
    return out_cm.reshape(b, c, h, w)


# --------------------------- pure-JAX reference ------------------------------
def cross_attention_ref(x, embedding, params):
    wq, bq, wk, bk, wv, bv, wo, bo = params   # torch layout: w [out,in], b [out]
    b, c, h, w = x.shape
    s = h * w
    x_flat = jnp.transpose(x.reshape(b, c, s), (0, 2, 1))
    e_flat = jnp.transpose(embedding.reshape(b, c, s), (0, 2, 1))

    def split_heads(t):  # [B,S,INNER] -> [B,H,S,Dh]
        return jnp.transpose(t.reshape(b, s, NUM_HEADS, HEAD_DIM), (0, 2, 1, 3))

    q = split_heads(x_flat @ wq.T + bq)
    k = split_heads(e_flat @ wk.T + bk)
    v = split_heads(e_flat @ wv.T + bv)
    attn = jax.nn.softmax(jnp.einsum("bhqd,bhkd->bhqk", q, k) * SCALE, axis=-1)
    out = jnp.einsum("bhqk,bhkd->bhqd", attn, v)
    out = jnp.transpose(out, (0, 2, 1, 3)).reshape(b, s, INNER)
    out = out @ wo.T + bo
    return jnp.transpose(out, (0, 2, 1)).reshape(b, c, h, w)


# --------------------------------- main --------------------------------------
if __name__ == "__main__":
    key = jax.random.PRNGKey(0)
    keys = jax.random.split(key, 10)

    # inputs (NCHW, same spatial dims for x and embedding, as the module assumes)
    x = jax.random.normal(keys[0], (B, DIM, SP, SP), dtype=jnp.float32)
    embedding = jax.random.normal(keys[1], (B, DIM, SP, SP), dtype=jnp.float32)

    # deterministic synthetic parameters in PyTorch nn.Linear layout:
    # weight [out, in], bias [out]; y = x @ W^T + b.
    def lin(kw, kb, fan_in, fan_out):
        w_ = jax.random.normal(kw, (fan_out, fan_in), dtype=jnp.float32) * 0.05
        b_ = jax.random.normal(kb, (fan_out,), dtype=jnp.float32) * 0.05
        return w_, b_

    wq, bq = lin(keys[2], keys[3], DIM, INNER)
    wk, bk = lin(keys[4], keys[5], DIM, INNER)
    wv, bv = lin(keys[6], keys[7], DIM, INNER)
    wo, bo = lin(keys[8], keys[9], INNER, DIM)
    params = (wq, bq, wk, bk, wv, bv, wo, bo)

    out = cross_attention(x, embedding, params)
    jax.block_until_ready(out)

    ref = cross_attention_ref(x, embedding, params)
    assert out.shape == x.shape
    # Tight f32 tolerance restored (exact softmax-denominator reciprocal).
    err = float(jnp.max(jnp.abs(out - ref)))
    assert jnp.allclose(out, ref, rtol=1e-4, atol=1e-4), err

    print("KERNEL_OK")
</pallas_src>

<mosaic_0001>
module attributes {stable_mosaic.version = 11 : i64} {
  func.func @cross_attention_kernel(%arg0: i32, %arg1: memref<1x32x256xf32, #tpu.memory_space<vmem>>, %arg2: memref<1x32x256xf32, #tpu.memory_space<vmem>>, %arg3: memref<128x32xf32, #tpu.memory_space<vmem>>, %arg4: memref<128x1xf32, #tpu.memory_space<vmem>>, %arg5: memref<256x32xf32, #tpu.memory_space<vmem>>, %arg6: memref<256x1xf32, #tpu.memory_space<vmem>>, %arg7: memref<32x128xf32, #tpu.memory_space<vmem>>, %arg8: memref<32x1xf32, #tpu.memory_space<vmem>>, %arg9: memref<1x32x256xf32, #tpu.memory_space<vmem>>, %arg10: memref<1x128x256xf32, #tpu.memory_space<vmem>>, %arg11: memref<1x256x256xf32, #tpu.memory_space<vmem>>, %arg12: memref<1x128x256xf32, #tpu.memory_space<vmem>>) attributes {dimension_semantics = [#tpu.dimension_semantics<parallel>], iteration_bounds = array<i64: 2>, scalar_prefetch = 0 : i64, scratch_operands = 3 : i64, tpu.core_type = #tpu.core_type<tc>, window_params = [{transform_indices = @transform_0, window_bounds = array<i64: 1, 32, 256>}, {transform_indices = @transform_1, window_bounds = array<i64: 1, 32, 256>}, {pipeline_mode = #tpu.pipeline_mode<synchronous>, transform_indices = @transform_2, window_bounds = array<i64: 128, 32>}, {pipeline_mode = #tpu.pipeline_mode<synchronous>, transform_indices = @transform_3, window_bounds = array<i64: 128, 1>}, {pipeline_mode = #tpu.pipeline_mode<synchronous>, transform_indices = @transform_4, window_bounds = array<i64: 256, 32>}, {pipeline_mode = #tpu.pipeline_mode<synchronous>, transform_indices = @transform_5, window_bounds = array<i64: 256, 1>}, {pipeline_mode = #tpu.pipeline_mode<synchronous>, transform_indices = @transform_6, window_bounds = array<i64: 32, 128>}, {pipeline_mode = #tpu.pipeline_mode<synchronous>, transform_indices = @transform_7, window_bounds = array<i64: 32, 1>}, {transform_indices = @transform_8, window_bounds = array<i64: 1, 32, 256>}]} {
    %c0 = arith.constant 0 : index
    %c0_0 = arith.constant 0 : index
    %0 = vector.load %arg3[%c0, %c0_0] : memref<128x32xf32, #tpu.memory_space<vmem>>, vector<128x32xf32>
    %c0_1 = arith.constant 0 : index
    %c0_2 = arith.constant 0 : index
    %c0_3 = arith.constant 0 : index
    %1 = vector.load %arg1[%c0_1, %c0_2, %c0_3] : memref<1x32x256xf32, #tpu.memory_space<vmem>>, vector<1x32x256xf32>
    %2 = vector.shape_cast %1 : vector<1x32x256xf32> to vector<32x256xf32>
    %cst = arith.constant dense<0.000000e+00> : vector<128x256xf32>
    %3 = tpu.matmul %0, %2, %cst {dimension_numbers = #tpu.dot_dimension_numbers<[1], [0], [0], [1], [0, 0, 1, 1], [], []>} : vector<128x32xf32>, vector<32x256xf32>, vector<128x256xf32> -> vector<128x256xf32>
    %c0_4 = arith.constant 0 : index
    %c0_5 = arith.constant 0 : index
    %4 = vector.load %arg4[%c0_4, %c0_5] : memref<128x1xf32, #tpu.memory_space<vmem>>, vector<128x1xf32>
    %5 = vector.broadcast %4 : vector<128x1xf32> to vector<128x256xf32>
    %6 = arith.addf %3, %5 : vector<128x256xf32>
    %c0_6 = arith.constant 0 : index
    %c0_7 = arith.constant 0 : index
    %c0_8 = arith.constant 0 : index
    %7 = vector.load %arg10[%c0_6, %c0_7, %c0_8] : memref<1x128x256xf32, #tpu.memory_space<vmem>>, vector<1x128x256xf32>
    %8 = vector.shape_cast %7 : vector<1x128x256xf32> to vector<128x256xf32>
    %9 = vector.shape_cast %6 : vector<128x256xf32> to vector<1x128x256xf32>
    tpu.vector_store %arg10[%c0_6, %c0_7, %c0_8], %9 {strides = array<i32>} : memref<1x128x256xf32, #tpu.memory_space<vmem>>, vector<1x128x256xf32>,
    %c0_9 = arith.constant 0 : index
    %c0_10 = arith.constant 0 : index
    %10 = vector.load %arg5[%c0_9, %c0_10] : memref<256x32xf32, #tpu.memory_space<vmem>>, vector<256x32xf32>
    %c0_11 = arith.constant 0 : index
    %c0_12 = arith.constant 0 : index
    %c0_13 = arith.constant 0 : index
    %11 = vector.load %arg2[%c0_11, %c0_12, %c0_13] : memref<1x32x256xf32, #tpu.memory_space<vmem>>, vector<1x32x256xf32>
    %12 = vector.shape_cast %11 : vector<1x32x256xf32> to vector<32x256xf32>
    %cst_14 = arith.constant dense<0.000000e+00> : vector<256x256xf32>
    %13 = tpu.matmul %10, %12, %cst_14 {dimension_numbers = #tpu.dot_dimension_numbers<[1], [0], [0], [1], [0, 0, 1, 1], [], []>} : vector<256x32xf32>, vector<32x256xf32>, vector<256x256xf32> -> vector<256x256xf32>
    %c0_15 = arith.constant 0 : index
    %c0_16 = arith.constant 0 : index
    %14 = vector.load %arg6[%c0_15, %c0_16] : memref<256x1xf32, #tpu.memory_space<vmem>>, vector<256x1xf32>
    %15 = vector.broadcast %14 : vector<256x1xf32> to vector<256x256xf32>
    %16 = arith.addf %13, %15 : vector<256x256xf32>
    %c0_17 = arith.constant 0 : index
    %c0_18 = arith.constant 0 : index
    %c0_19 = arith.constant 0 : index
    %17 = vector.load %arg11[%c0_17, %c0_18, %c0_19] : memref<1x256x256xf32, #tpu.memory_space<vmem>>, vector<1x256x256xf32>
    %18 = vector.shape_cast %17 : vector<1x256x256xf32> to vector<256x256xf32>
    %19 = vector.shape_cast %16 : vector<256x256xf32> to vector<1x256x256xf32>
    tpu.vector_store %arg11[%c0_17, %c0_18, %c0_19], %19 {strides = array<i32>} : memref<1x256x256xf32, #tpu.memory_space<vmem>>, vector<1x256x256xf32>,
    %c0_20 = arith.constant 0 : index
    %c0_21 = arith.constant 0 : index
    %c0_22 = arith.constant 0 : index
    %20 = vector.load %arg11[%c0_20, %c0_21, %c0_22] : memref<1x256x256xf32, #tpu.memory_space<vmem>>, vector<1x64x256xf32>
    %21 = vector.shape_cast %20 : vector<1x64x256xf32> to vector<64x256xf32>
    %c0_23 = arith.constant 0 : index
    %c0_24 = arith.constant 0 : index
    %c0_25 = arith.constant 0 : index
    %22 = vector.load %arg10[%c0_23, %c0_24, %c0_25] : memref<1x128x256xf32, #tpu.memory_space<vmem>>, vector<1x64x128xf32>
    %23 = vector.shape_cast %22 : vector<1x64x128xf32> to vector<64x128xf32>
    %cst_26 = arith.constant dense<0.000000e+00> : vector<256x128xf32>
    %24 = tpu.matmul %21, %23, %cst_26 {dimension_numbers = #tpu.dot_dimension_numbers<[0], [0], [1], [1], [0, 1, 1, 1], [], []>} : vector<64x256xf32>, vector<64x128xf32>, vector<256x128xf32> -> vector<256x128xf32>
    %cst_27 = arith.constant dense<0xFF800000> : vector<128xf32>
    %25 = vector.multi_reduction <maximumf>, %24, %cst_27 [0] : vector<256x128xf32> to vector<128xf32>
    %26 = vector.shape_cast %25 : vector<128xf32> to vector<1x128xf32>
    %27 = vector.broadcast %26 : vector<1x128xf32> to vector<256x128xf32>
    %28 = arith.subf %24, %27 : vector<256x128xf32>
    %29 = math.exp %28 : vector<256x128xf32>
    %cst_28 = arith.constant dense<0.000000e+00> : vector<128xf32>
    %30 = vector.multi_reduction <add>, %29, %cst_28 [0] : vector<256x128xf32> to vector<128xf32>
    %31 = vector.shape_cast %30 : vector<128xf32> to vector<1x128xf32>
    %c0_29 = arith.constant 0 : index
    %c128 = arith.constant 128 : index
    %c0_30 = arith.constant 0 : index
    %32 = vector.load %arg11[%c0_29, %c128, %c0_30] : memref<1x256x256xf32, #tpu.memory_space<vmem>>, vector<1x64x256xf32>
    %33 = vector.shape_cast %32 : vector<1x64x256xf32> to vector<64x256xf32>
    %cst_31 = arith.constant dense<0.000000e+00> : vector<64x128xf32>
    %34 = tpu.matmul %33, %29, %cst_31 {dimension_numbers = #tpu.dot_dimension_numbers<[1], [0], [0], [1], [0, 0, 1, 1], [], []>} : vector<64x256xf32>, vector<256x128xf32>, vector<64x128xf32> -> vector<64x128xf32>
    %35 = tpu.reciprocal %31 : vector<1x128xf32> -> vector<1x128xf32>
    %36 = vector.broadcast %35 : vector<1x128xf32> to vector<64x128xf32>
    %37 = arith.mulf %34, %36 : vector<64x128xf32>
    %c0_32 = arith.constant 0 : index
    %c0_33 = arith.constant 0 : index
    %c0_34 = arith.constant 0 : index
    %38 = vector.load %arg12[%c0_32, %c0_33, %c0_34] : memref<1x128x256xf32, #tpu.memory_space<vmem>>, vector<1x64x128xf32>
    %39 = vector.shape_cast %38 : vector<1x64x128xf32> to vector<64x128xf32>
    %40 = vector.shape_cast %37 : vector<64x128xf32> to vector<1x64x128xf32>
    tpu.vector_store %arg12[%c0_32, %c0_33, %c0_34], %40 {strides = array<i32>} : memref<1x128x256xf32, #tpu.memory_space<vmem>>, vector<1x64x128xf32>,
    %c0_35 = arith.constant 0 : index
    %c0_36 = arith.constant 0 : index
    %c0_37 = arith.constant 0 : index
    %41 = vector.load %arg11[%c0_35, %c0_36, %c0_37] : memref<1x256x256xf32, #tpu.memory_space<vmem>>, vector<1x64x256xf32>
    %42 = vector.shape_cast %41 : vector<1x64x256xf32> to vector<64x256xf32>
    %c0_38 = arith.constant 0 : index
    %c0_39 = arith.constant 0 : index
    %c128_40 = arith.constant 128 : index
    %43 = vector.load %arg10[%c0_38, %c0_39, %c128_40] : memref<1x128x256xf32, #tpu.memory_space<vmem>>, vector<1x64x128xf32>
    %44 = vector.shape_cast %43 : vector<1x64x128xf32> to vector<64x128xf32>
    %cst_41 = arith.constant dense<0.000000e+00> : vector<256x128xf32>
    %45 = tpu.matmul %42, %44, %cst_41 {dimension_numbers = #tpu.dot_dimension_numbers<[0], [0], [1], [1], [0, 1, 1, 1], [], []>} : vector<64x256xf32>, vector<64x128xf32>, vector<256x128xf32> -> vector<256x128xf32>
    %cst_42 = arith.constant dense<0xFF800000> : vector<128xf32>
    %46 = vector.multi_reduction <maximumf>, %45, %cst_42 [0] : vector<256x128xf32> to vector<128xf32>
    %47 = vector.shape_cast %46 : vector<128xf32> to vector<1x128xf32>
    %48 = vector.broadcast %47 : vector<1x128xf32> to vector<256x128xf32>
    %49 = arith.subf %45, %48 : vector<256x128xf32>
    %50 = math.exp %49 : vector<256x128xf32>
    %cst_43 = arith.constant dense<0.000000e+00> : vector<128xf32>
    %51 = vector.multi_reduction <add>, %50, %cst_43 [0] : vector<256x128xf32> to vector<128xf32>
    %52 = vector.shape_cast %51 : vector<128xf32> to vector<1x128xf32>
    %c0_44 = arith.constant 0 : index
    %c128_45 = arith.constant 128 : index
    %c0_46 = arith.constant 0 : index
    %53 = vector.load %arg11[%c0_44, %c128_45, %c0_46] : memref<1x256x256xf32, #tpu.memory_space<vmem>>, vector<1x64x256xf32>
    %54 = vector.shape_cast %53 : vector<1x64x256xf32> to vector<64x256xf32>
    %cst_47 = arith.constant dense<0.000000e+00> : vector<64x128xf32>
    %55 = tpu.matmul %54, %50, %cst_47 {dimension_numbers = #tpu.dot_dimension_numbers<[1], [0], [0], [1], [0, 0, 1, 1], [], []>} : vector<64x256xf32>, vector<256x128xf32>, vector<64x128xf32> -> vector<64x128xf32>
    %56 = tpu.reciprocal %52 : vector<1x128xf32> -> vector<1x128xf32>
    %57 = vector.broadcast %56 : vector<1x128xf32> to vector<64x128xf32>
    %58 = arith.mulf %55, %57 : vector<64x128xf32>
    %c0_48 = arith.constant 0 : index
    %c0_49 = arith.constant 0 : index
    %c128_50 = arith.constant 128 : index
    %59 = vector.load %arg12[%c0_48, %c0_49, %c128_50] : memref<1x128x256xf32, #tpu.memory_space<vmem>>, vector<1x64x128xf32>
    %60 = vector.shape_cast %59 : vector<1x64x128xf32> to vector<64x128xf32>
    %61 = vector.shape_cast %58 : vector<64x128xf32> to vector<1x64x128xf32>
    tpu.vector_store %arg12[%c0_48, %c0_49, %c128_50], %61 {strides = array<i32>} : memref<1x128x256xf32, #tpu.memory_space<vmem>>, vector<1x64x128xf32>,
    %c0_51 = arith.constant 0 : index
    %c64 = arith.constant 64 : index
    %c0_52 = arith.constant 0 : index
    %62 = vector.load %arg11[%c0_51, %c64, %c0_52] : memref<1x256x256xf32, #tpu.memory_space<vmem>>, vector<1x64x256xf32>
    %63 = vector.shape_cast %62 : vector<1x64x256xf32> to vector<64x256xf32>
    %c0_53 = arith.constant 0 : index
    %c64_54 = arith.constant 64 : index
    %c0_55 = arith.constant 0 : index
    %64 = vector.load %arg10[%c0_53, %c64_54, %c0_55] : memref<1x128x256xf32, #tpu.memory_space<vmem>>, vector<1x64x128xf32>
    %65 = vector.shape_cast %64 : vector<1x64x128xf32> to vector<64x128xf32>
    %cst_56 = arith.constant dense<0.000000e+00> : vector<256x128xf32>
    %66 = tpu.matmul %63, %65, %cst_56 {dimension_numbers = #tpu.dot_dimension_numbers<[0], [0], [1], [1], [0, 1, 1, 1], [], []>} : vector<64x256xf32>, vector<64x128xf32>, vector<256x128xf32> -> vector<256x128xf32>
    %cst_57 = arith.constant dense<0xFF800000> : vector<128xf32>
    %67 = vector.multi_reduction <maximumf>, %66, %cst_57 [0] : vector<256x128xf32> to vector<128xf32>
    %68 = vector.shape_cast %67 : vector<128xf32> to vector<1x128xf32>
    %69 = vector.broadcast %68 : vector<1x128xf32> to vector<256x128xf32>
    %70 = arith.subf %66, %69 : vector<256x128xf32>
    %71 = math.exp %70 : vector<256x128xf32>
    %cst_58 = arith.constant dense<0.000000e+00> : vector<128xf32>
    %72 = vector.multi_reduction <add>, %71, %cst_58 [0] : vector<256x128xf32> to vector<128xf32>
    %73 = vector.shape_cast %72 : vector<128xf32> to vector<1x128xf32>
    %c0_59 = arith.constant 0 : index
    %c192 = arith.constant 192 : index
    %c0_60 = arith.constant 0 : index
    %74 = vector.load %arg11[%c0_59, %c192, %c0_60] : memref<1x256x256xf32, #tpu.memory_space<vmem>>, vector<1x64x256xf32>
    %75 = vector.shape_cast %74 : vector<1x64x256xf32> to vector<64x256xf32>
    %cst_61 = arith.constant dense<0.000000e+00> : vector<64x128xf32>
    %76 = tpu.matmul %75, %71, %cst_61 {dimension_numbers = #tpu.dot_dimension_numbers<[1], [0], [0], [1], [0, 0, 1, 1], [], []>} : vector<64x256xf32>, vector<256x128xf32>, vector<64x128xf32> -> vector<64x128xf32>
    %77 = tpu.reciprocal %73 : vector<1x128xf32> -> vector<1x128xf32>
    %78 = vector.broadcast %77 : vector<1x128xf32> to vector<64x128xf32>
    %79 = arith.mulf %76, %78 : vector<64x128xf32>
    %c0_62 = arith.constant 0 : index
    %c64_63 = arith.constant 64 : index
    %c0_64 = arith.constant 0 : index
    %80 = vector.load %arg12[%c0_62, %c64_63, %c0_64] : memref<1x128x256xf32, #tpu.memory_space<vmem>>, vector<1x64x128xf32>
    %81 = vector.shape_cast %80 : vector<1x64x128xf32> to vector<64x128xf32>
    %82 = vector.shape_cast %79 : vector<64x128xf32> to vector<1x64x128xf32>
    tpu.vector_store %arg12[%c0_62, %c64_63, %c0_64], %82 {strides = array<i32>} : memref<1x128x256xf32, #tpu.memory_space<vmem>>, vector<1x64x128xf32>,
    %c0_65 = arith.constant 0 : index
    %c64_66 = arith.constant 64 : index
    %c0_67 = arith.constant 0 : index
    %83 = vector.load %arg11[%c0_65, %c64_66, %c0_67] : memref<1x256x256xf32, #tpu.memory_space<vmem>>, vector<1x64x256xf32>
    %84 = vector.shape_cast %83 : vector<1x64x256xf32> to vector<64x256xf32>
    %c0_68 = arith.constant 0 : index
    %c64_69 = arith.constant 64 : index
    %c128_70 = arith.constant 128 : index
    %85 = vector.load %arg10[%c0_68, %c64_69, %c128_70] : memref<1x128x256xf32, #tpu.memory_space<vmem>>, vector<1x64x128xf32>
    %86 = vector.shape_cast %85 : vector<1x64x128xf32> to vector<64x128xf32>
    %cst_71 = arith.constant dense<0.000000e+00> : vector<256x128xf32>
    %87 = tpu.matmul %84, %86, %cst_71 {dimension_numbers = #tpu.dot_dimension_numbers<[0], [0], [1], [1], [0, 1, 1, 1], [], []>} : vector<64x256xf32>, vector<64x128xf32>, vector<256x128xf32> -> vector<256x128xf32>
    %cst_72 = arith.constant dense<0xFF800000> : vector<128xf32>
    %88 = vector.multi_reduction <maximumf>, %87, %cst_72 [0] : vector<256x128xf32> to vector<128xf32>
    %89 = vector.shape_cast %88 : vector<128xf32> to vector<1x128xf32>
    %90 = vector.broadcast %89 : vector<1x128xf32> to vector<256x128xf32>
    %91 = arith.subf %87, %90 : vector<256x128xf32>
    %92 = math.exp %91 : vector<256x128xf32>
    %cst_73 = arith.constant dense<0.000000e+00> : vector<128xf32>
    %93 = vector.multi_reduction <add>, %92, %cst_73 [0] : vector<256x128xf32> to vector<128xf32>
    %94 = vector.shape_cast %93 : vector<128xf32> to vector<1x128xf32>
    %c0_74 = arith.constant 0 : index
    %c192_75 = arith.constant 192 : index
    %c0_76 = arith.constant 0 : index
    %95 = vector.load %arg11[%c0_74, %c192_75, %c0_76] : memref<1x256x256xf32, #tpu.memory_space<vmem>>, vector<1x64x256xf32>
    %96 = vector.shape_cast %95 : vector<1x64x256xf32> to vector<64x256xf32>
    %cst_77 = arith.constant dense<0.000000e+00> : vector<64x128xf32>
    %97 = tpu.matmul %96, %92, %cst_77 {dimension_numbers = #tpu.dot_dimension_numbers<[1], [0], [0], [1], [0, 0, 1, 1], [], []>} : vector<64x256xf32>, vector<256x128xf32>, vector<64x128xf32> -> vector<64x128xf32>
    %98 = tpu.reciprocal %94 : vector<1x128xf32> -> vector<1x128xf32>
    %99 = vector.broadcast %98 : vector<1x128xf32> to vector<64x128xf32>
    %100 = arith.mulf %97, %99 : vector<64x128xf32>
    %c0_78 = arith.constant 0 : index
    %c64_79 = arith.constant 64 : index
    %c128_80 = arith.constant 128 : index
    %101 = vector.load %arg12[%c0_78, %c64_79, %c128_80] : memref<1x128x256xf32, #tpu.memory_space<vmem>>, vector<1x64x128xf32>
    %102 = vector.shape_cast %101 : vector<1x64x128xf32> to vector<64x128xf32>
    %103 = vector.shape_cast %100 : vector<64x128xf32> to vector<1x64x128xf32>
    tpu.vector_store %arg12[%c0_78, %c64_79, %c128_80], %103 {strides = array<i32>} : memref<1x128x256xf32, #tpu.memory_space<vmem>>, vector<1x64x128xf32>,
    %c0_81 = arith.constant 0 : index
    %c0_82 = arith.constant 0 : index
    %104 = vector.load %arg7[%c0_81, %c0_82] : memref<32x128xf32, #tpu.memory_space<vmem>>, vector<32x128xf32>
    %c0_83 = arith.constant 0 : index
    %c0_84 = arith.constant 0 : index
    %c0_85 = arith.constant 0 : index
    %105 = vector.load %arg12[%c0_83, %c0_84, %c0_85] : memref<1x128x256xf32, #tpu.memory_space<vmem>>, vector<1x128x256xf32>
    %106 = vector.shape_cast %105 : vector<1x128x256xf32> to vector<128x256xf32>
    %cst_86 = arith.constant dense<0.000000e+00> : vector<32x256xf32>
    %107 = tpu.matmul %104, %106, %cst_86 {dimension_numbers = #tpu.dot_dimension_numbers<[1], [0], [0], [1], [0, 0, 1, 1], [], []>} : vector<32x128xf32>, vector<128x256xf32>, vector<32x256xf32> -> vector<32x256xf32>
    %c0_87 = arith.constant 0 : index
    %c0_88 = arith.constant 0 : index
    %108 = vector.load %arg8[%c0_87, %c0_88] : memref<32x1xf32, #tpu.memory_space<vmem>>, vector<32x1xf32>
    %109 = vector.broadcast %108 : vector<32x1xf32> to vector<32x256xf32>
    %110 = arith.addf %107, %109 : vector<32x256xf32>
    %c0_89 = arith.constant 0 : index
    %c0_90 = arith.constant 0 : index
    %c0_91 = arith.constant 0 : index
    %111 = vector.load %arg9[%c0_89, %c0_90, %c0_91] : memref<1x32x256xf32, #tpu.memory_space<vmem>>, vector<1x32x256xf32>
    %112 = vector.shape_cast %111 : vector<1x32x256xf32> to vector<32x256xf32>
    %113 = vector.shape_cast %110 : vector<32x256xf32> to vector<1x32x256xf32>
    tpu.vector_store %arg9[%c0_89, %c0_90, %c0_91], %113 {strides = array<i32>} : memref<1x32x256xf32, #tpu.memory_space<vmem>>, vector<1x32x256xf32>,
    return
  }
  func.func @transform_0(%arg0: i32) -> (i32, i32, i32) {
    %c0_i32 = arith.constant 0 : i32
    %c0_i32_0 = arith.constant 0 : i32
    %c0_i32_1 = arith.constant 0 : i32
    return %arg0, %c0_i32, %c0_i32_0 : i32, i32, i32
  }
  func.func @transform_1(%arg0: i32) -> (i32, i32, i32) {
    %c0_i32 = arith.constant 0 : i32
    %c0_i32_0 = arith.constant 0 : i32
    %c0_i32_1 = arith.constant 0 : i32
    return %arg0, %c0_i32, %c0_i32_0 : i32, i32, i32
  }
  func.func @transform_2(%arg0: i32) -> (i32, i32) {
    %c0_i32 = arith.constant 0 : i32
    %c0_i32_0 = arith.constant 0 : i32
    %c0_i32_1 = arith.constant 0 : i32
    return %c0_i32, %c0_i32_0 : i32, i32
  }
  func.func @transform_3(%arg0: i32) -> (i32, i32) {
    %c0_i32 = arith.constant 0 : i32
    %c0_i32_0 = arith.constant 0 : i32
    %c0_i32_1 = arith.constant 0 : i32
    return %c0_i32, %c0_i32_0 : i32, i32
  }
  func.func @transform_4(%arg0: i32) -> (i32, i32) {
    %c0_i32 = arith.constant 0 : i32
    %c0_i32_0 = arith.constant 0 : i32
    %c0_i32_1 = arith.constant 0 : i32
    return %c0_i32, %c0_i32_0 : i32, i32
  }
  func.func @transform_5(%arg0: i32) -> (i32, i32) {
    %c0_i32 = arith.constant 0 : i32
    %c0_i32_0 = arith.constant 0 : i32
    %c0_i32_1 = arith.constant 0 : i32
    return %c0_i32, %c0_i32_0 : i32, i32
  }
  func.func @transform_6(%arg0: i32) -> (i32, i32) {
    %c0_i32 = arith.constant 0 : i32
    %c0_i32_0 = arith.constant 0 : i32
    %c0_i32_1 = arith.constant 0 : i32
    return %c0_i32, %c0_i32_0 : i32, i32
  }
  func.func @transform_7(%arg0: i32) -> (i32, i32) {
    %c0_i32 = arith.constant 0 : i32
    %c0_i32_0 = arith.constant 0 : i32
    %c0_i32_1 = arith.constant 0 : i32
    return %c0_i32, %c0_i32_0 : i32, i32
  }
  func.func @transform_8(%arg0: i32) -> (i32, i32, i32) {
    %c0_i32 = arith.constant 0 : i32
    %c0_i32_0 = arith.constant 0 : i32
    %c0_i32_1 = arith.constant 0 : i32
    return %arg0, %c0_i32, %c0_i32_0 : i32, i32, i32
  }
}

</mosaic_0001>

<llo_original>
// kernel: cross_attention.1
$region0: #{cross_attention.1}
  #allocation0 [shape = 'u32[]', space=smem, size = 0x4, offset = 0x4, fixed_abs, tag = 'smem constant byte address 0x4 - core index']
  #allocation1 [shape = 'u32[144,128]{1,0:T(1,128)}', space=vmem, size = 0x12000, scoped, tag = 'internal scratch']
  #allocation2 [shape = 'f32[1,128,256]{2,1,0:T(8,128)}', space=vmem, size = 0x20000, scoped, tag = 'scratch operand']
  #allocation3 [shape = 'f32[1,256,256]{2,1,0:T(8,128)}', space=vmem, size = 0x40000, scoped, tag = 'scratch operand']
  #allocation4 [shape = 'f32[1,128,256]{2,1,0:T(8,128)}', space=vmem, size = 0x20000, scoped, tag = 'scratch operand']
  %s0 = inlined_call_operand.vmem [shape: f32[2,32,256], index: 0, kind: input, shape index: {}]
  %s1 = inlined_call_operand.vmem [shape: f32[2,32,256], index: 1, kind: input, shape index: {}]
  %s2 = inlined_call_operand.vmem [shape: f32[128,32], index: 2, kind: input, shape index: {}]
  %s3 = inlined_call_operand.vmem [shape: f32[128,1], index: 3, kind: input, shape index: {}]
  %s4 = inlined_call_operand.vmem [shape: f32[256,32], index: 4, kind: input, shape index: {}]
  %s5 = inlined_call_operand.vmem [shape: f32[256,1], index: 5, kind: input, shape index: {}]
  %s6 = inlined_call_operand.vmem [shape: f32[32,128], index: 6, kind: input, shape index: {}]
  %s7 = inlined_call_operand.vmem [shape: f32[32,1], index: 7, kind: input, shape index: {}]
  %s8 = inlined_call_operand.vmem [shape: f32[2,32,256], index: 8, kind: output, shape index: {}]
  %s9 = sld [smem:[#allocation0]]
  $region65: #{cross_attention.1} parent=0
    _
  %s11 = ssub.s32 1, %s9
  %s12 = scalar_select 0, %s11, %s9
  loop: start=0, step=1, limit=4
  $region2: #{cross_attention.1} parent=0 // loop_pre_header
    _
  $region3: #{cross_attention.1} parent=0 // loop_header
    %s14 = sphi 0, %s18
    %p15 = scmp.ge.s32.totalorder %s14, 4
    %s24 = sphi 0, %s26
    %s27 = sphi 0, %s24
    %s28 = sphi 0, %s27
    %s44 = sphi 0, %s28
    %s50 = sphi 0, %s52
    %s53 = sphi 0, %s50
    %s54 = sphi 0, %s53
    %s70 = sphi 0, %s54
    %s74 = sphi 0, %s74
    %s76 = sphi 0, %s74
    %s77 = sphi 0, %s76
    %s91 = sphi 0, %s77
    %s95 = sphi 0, %s95
    %s97 = sphi 0, %s95
    %s98 = sphi 0, %s97
    %s112 = sphi 0, %s98
    %s116 = sphi 0, %s116
    %s118 = sphi 0, %s116
    %s119 = sphi 0, %s118
    %s133 = sphi 0, %s119
    %s137 = sphi 0, %s137
    %s139 = sphi 0, %s137
    %s140 = sphi 0, %s139
    %s154 = sphi 0, %s140
    %s158 = sphi 0, %s158
    %s160 = sphi 0, %s158
    %s161 = sphi 0, %s160
    %s175 = sphi 0, %s161
    %s179 = sphi 0, %s179
    %s181 = sphi 0, %s179
    %s182 = sphi 0, %s181
    %s196 = sphi 0, %s182
    %s202 = sphi 0, %s204
    %s205 = sphi 0, %s202
    %s206 = sphi 0, %s205
    %s222 = sphi 0, %s206
  $region4: #{cross_attention.1} parent=0 // loop_header_branch
    %17 = sbr.rel (%p15) target = $region8
  $region5: #{cross_attention.1} parent=0 // loop_body
    %s19 = ssub.s32 %s14, 1
    %s20 = ssub.s32 %s14, 2
    %s21 = sadd.s32 %s14, 1
    %s22 = ssub.s32 %s14, %s21
    %p23 = scmp.eq.s32.totalorder %s22, 0
    %s25 = sadd.s32 %s24, 1
    %s26 = scalar_select %p23, %s24, %s25
    %p29 = pneg %p23
    %p30 = scmp.eq.s32.totalorder %s14, 1
    %p31 = por %p29, %p30
    %p32 = scmp.ne.s32.totalorder %s24, %s27
    %p33 = scmp.eq.s32.totalorder %s14, 0
    %p34 = por %p32, %p33
    %p35 = scmp.ne.s32.totalorder %s24, %s27
    %p36 = scmp.eq.s32.totalorder %s19, 1
    %p37 = por %p35, %p36
    %p38 = scmp.ne.s32.totalorder %s27, %s28
    %p39 = scmp.eq.s32.totalorder %s19, 0
    %p40 = por %p38, %p39
    %p41 = scmp.ne.s32.totalorder %s27, %s28
    %p42 = scmp.eq.s32.totalorder %s20, 1
    %p43 = por %p41, %p42
    %p45 = scmp.ne.s32.totalorder %s28, %s44
    %p46 = scmp.eq.s32.totalorder %s20, 0
    %p47 = por %p45, %p46
    %s48 = ssub.s32 %s14, %s21
    %p49 = scmp.eq.s32.totalorder %s48, 0
    %s51 = sadd.s32 %s50, 1
    %s52 = scalar_select %p49, %s50, %s51
    %p55 = pneg %p49
    %p56 = scmp.eq.s32.totalorder %s14, 1
    %p57 = por %p55, %p56
    %p58 = scmp.ne.s32.totalorder %s50, %s53
    %p59 = scmp.eq.s32.totalorder %s14, 0
    %p60 = por %p58, %p59
    %p61 = scmp.ne.s32.totalorder %s50, %s53
    %p62 = scmp.eq.s32.totalorder %s19, 1
    %p63 = por %p61, %p62
    %p64 = scmp.ne.s32.totalorder %s53, %s54
    %p65 = scmp.eq.s32.totalorder %s19, 0
    %p66 = por %p64, %p65
    %p67 = scmp.ne.s32.totalorder %s53, %s54
    %p68 = scmp.eq.s32.totalorder %s20, 1
    %p69 = por %p67, %p68
    %p71 = scmp.ne.s32.totalorder %s54, %s70
    %p72 = scmp.eq.s32.totalorder %s20, 0
    %p73 = por %p71, %p72
    %s75 = sadd.s32 %s74, 1
    %p78 = scmp.eq.s32.totalorder %s14, 1
    %p79 = scmp.ne.s32.totalorder %s74, %s76
    %p80 = scmp.eq.s32.totalorder %s14, 0
    %p81 = por %p79, %p80
    %p82 = scmp.ne.s32.totalorder %s74, %s76
    %p83 = scmp.eq.s32.totalorder %s19, 1
    %p84 = por %p82, %p83
    %p85 = scmp.ne.s32.totalorder %s76, %s77
    %p86 = scmp.eq.s32.totalorder %s19, 0
    %p87 = por %p85, %p86
    %p88 = scmp.ne.s32.totalorder %s76, %s77
    %p89 = scmp.eq.s32.totalorder %s20, 1
    %p90 = por %p88, %p89
    %p92 = scmp.ne.s32.totalorder %s77, %s91
    %p93 = scmp.eq.s32.totalorder %s20, 0
    %p94 = por %p92, %p93
    %s96 = sadd.s32 %s95, 1
    %p99 = scmp.eq.s32.totalorder %s14, 1
    %p100 = scmp.ne.s32.totalorder %s95, %s97
    %p101 = scmp.eq.s32.totalorder %s14, 0
    %p102 = por %p100, %p101
    %p103 = scmp.ne.s32.totalorder %s95, %s97
    %p104 = scmp.eq.s32.totalorder %s19, 1
    %p105 = por %p103, %p104
    %p106 = scmp.ne.s32.totalorder %s97, %s98
    %p107 = scmp.eq.s32.totalorder %s19, 0
    %p108 = por %p106, %p107
    %p109 = scmp.ne.s32.totalorder %s97, %s98
    %p110 = scmp.eq.s32.totalorder %s20, 1
    %p111 = por %p109, %p110
    %p113 = scmp.ne.s32.totalorder %s98, %s112
    %p114 = scmp.eq.s32.totalorder %s20, 0
    %p115 = por %p113, %p114
    %s117 = sadd.s32 %s116, 1
    %p120 = scmp.eq.s32.totalorder %s14, 1
    %p121 = scmp.ne.s32.totalorder %s116, %s118
    %p122 = scmp.eq.s32.totalorder %s14, 0
    %p123 = por %p121, %p122
    %p124 = scmp.ne.s32.totalorder %s116, %s118
    %p125 = scmp.eq.s32.totalorder %s19, 1
    %p126 = por %p124, %p125
    %p127 = scmp.ne.s32.totalorder %s118, %s119
    %p128 = scmp.eq.s32.totalorder %s19, 0
    %p129 = por %p127, %p128
    %p130 = scmp.ne.s32.totalorder %s118, %s119
    %p131 = scmp.eq.s32.totalorder %s20, 1
    %p132 = por %p130, %p131
    %p134 = scmp.ne.s32.totalorder %s119, %s133
    %p135 = scmp.eq.s32.totalorder %s20, 0
    %p136 = por %p134, %p135
    %s138 = sadd.s32 %s137, 1
    %p141 = scmp.eq.s32.totalorder %s14, 1
    %p142 = scmp.ne.s32.totalorder %s137, %s139
    %p143 = scmp.eq.s32.totalorder %s14, 0
    %p144 = por %p142, %p143
    %p145 = scmp.ne.s32.totalorder %s137, %s139
    %p146 = scmp.eq.s32.totalorder %s19, 1
    %p147 = por %p145, %p146
    %p148 = scmp.ne.s32.totalorder %s139, %s140
    %p149 = scmp.eq.s32.totalorder %s19, 0
    %p150 = por %p148, %p149
    %p151 = scmp.ne.s32.totalorder %s139, %s140
    %p152 = scmp.eq.s32.totalorder %s20, 1
    %p153 = por %p151, %p152
    %p155 = scmp.ne.s32.totalorder %s140, %s154
    %p156 = scmp.eq.s32.totalorder %s20, 0
    %p157 = por %p155, %p156
    %s159 = sadd.s32 %s158, 1
    %p162 = scmp.eq.s32.totalorder %s14, 1
    %p163 = scmp.ne.s32.totalorder %s158, %s160
    %p164 = scmp.eq.s32.totalorder %s14, 0
    %p165 = por %p163, %p164
    %p166 = scmp.ne.s32.totalorder %s158, %s160
    %p167 = scmp.eq.s32.totalorder %s19, 1
    %p168 = por %p166, %p167
    %p169 = scmp.ne.s32.totalorder %s160, %s161
    %p170 = scmp.eq.s32.totalorder %s19, 0
    %p171 = por %p169, %p170
    %p172 = scmp.ne.s32.totalorder %s160, %s161
    %p173 = scmp.eq.s32.totalorder %s20, 1
    %p174 = por %p172, %p173
    %p176 = scmp.ne.s32.totalorder %s161, %s175
    %p177 = scmp.eq.s32.totalorder %s20, 0
    %p178 = por %p176, %p177
    %s180 = sadd.s32 %s179, 1
    %p183 = scmp.eq.s32.totalorder %s14, 1
    %p184 = scmp.ne.s32.totalorder %s179, %s181
    %p185 = scmp.eq.s32.totalorder %s14, 0
    %p186 = por %p184, %p185
    %p187 = scmp.ne.s32.totalorder %s179, %s181
    %p188 = scmp.eq.s32.totalorder %s19, 1
    %p189 = por %p187, %p188
    %p190 = scmp.ne.s32.totalorder %s181, %s182
    %p191 = scmp.eq.s32.totalorder %s19, 0
    %p192 = por %p190, %p191
    %p193 = scmp.ne.s32.totalorder %s181, %s182
    %p194 = scmp.eq.s32.totalorder %s20, 1
    %p195 = por %p193, %p194
    %p197 = scmp.ne.s32.totalorder %s182, %s196
    %p198 = scmp.eq.s32.totalorder %s20, 0
    %p199 = por %p197, %p198
    %s200 = ssub.s32 %s14, %s21
    %p201 = scmp.eq.s32.totalorder %s200, 0
    %s203 = sadd.s32 %s202, 1
    %s204 = scalar_select %p201, %s202, %s203
    %p207 = pneg %p201
    %p208 = scmp.eq.s32.totalorder %s14, 1
    %p209 = por %p207, %p208
    %p210 = scmp.ne.s32.totalorder %s202, %s205
    %p211 = scmp.eq.s32.totalorder %s14, 0
    %p212 = por %p210, %p211
    %p213 = scmp.ne.s32.totalorder %s202, %s205
    %p214 = scmp.eq.s32.totalorder %s19, 1
    %p215 = por %p213, %p214
    %p216 = scmp.ne.s32.totalorder %s205, %s206
    %p217 = scmp.eq.s32.totalorder %s19, 0
    %p218 = por %p216, %p217
    %p219 = scmp.ne.s32.totalorder %s205, %s206
    %p220 = scmp.eq.s32.totalorder %s20, 1
    %p221 = por %p219, %p220
    %p223 = scmp.ne.s32.totalorder %s206, %s222
    %p224 = scmp.eq.s32.totalorder %s20, 0
    %p225 = por %p223, %p224
    %p226 = scmp.le.s32.totalorder 1, %s14
    %p227 = scmp.lt.s32.totalorder %s14, 3
    %p228 = pnand %p226, %p227
    %p229 = pneg %p228
    // Predicated region
    $region9: #{cross_attention.1} parent=5 // pred_check
      _
    $region10: #{cross_attention.1} parent=5 // pred_check_branch
      %231 = sbr.rel (%p228) target = $region12
    $region11: #{cross_attention.1} parent=5 // pred_region
      %s232 = ssub.s32 %s14, 1
      // Predicated region
      $region13: #{cross_attention.1} parent=11 // pred_check
        %p233 = pneg %p87
      $region14: #{cross_attention.1} parent=11 // pred_check_branch
        %235 = sbr.rel (%p233) target = $region16
      $region15: #{cross_attention.1} parent=11 // pred_region
        _
      $region16: #{cross_attention.1} parent=11 // pred_fallthru
        _
      // Predicated region
      $region17: #{cross_attention.1} parent=11 // pred_check
        %p236 = pneg %p108
      $region18: #{cross_attention.1} parent=11 // pred_check_branch
        %238 = sbr.rel (%p236) target = $region20
      $region19: #{cross_attention.1} parent=11 // pred_region
        _
      $region20: #{cross_attention.1} parent=11 // pred_fallthru
        _
      // Predicated region
      $region21: #{cross_attention.1} parent=11 // pred_check
        %p239 = pneg %p129
      $region22: #{cross_attention.1} parent=11 // pred_check_branch
        %241 = sbr.rel (%p239) target = $region24
      $region23: #{cross_attention.1} parent=11 // pred_region
        _
      $region24: #{cross_attention.1} parent=11 // pred_fallthru
        _
      // Predicated region
      $region25: #{cross_attention.1} parent=11 // pred_check
        %p242 = pneg %p150
      $region26: #{cross_attention.1} parent=11 // pred_check_branch
        %244 = sbr.rel (%p242) target = $region28
      $region27: #{cross_attention.1} parent=11 // pred_region
        _
      $region28: #{cross_attention.1} parent=11 // pred_fallthru
        _
      // Predicated region
      $region29: #{cross_attention.1} parent=11 // pred_check
        %p245 = pneg %p171
      $region30: #{cross_attention.1} parent=11 // pred_check_branch
        %247 = sbr.rel (%p245) target = $region32
      $region31: #{cross_attention.1} parent=11 // pred_region
        _
      $region32: #{cross_attention.1} parent=11 // pred_fallthru
        _
      // Predicated region
      $region33: #{cross_attention.1} parent=11 // pred_check
        %p248 = pneg %p192
      $region34: #{cross_attention.1} parent=11 // pred_check_branch
        %250 = sbr.rel (%p248) target = $region36
      $region35: #{cross_attention.1} parent=11 // pred_region
        _
      $region36: #{cross_attention.1} parent=11 // pred_fallthru
        _
    $region12: #{cross_attention.1} parent=5 // pred_fallthru
      _
    %p251 = scmp.lt.s32.totalorder %s14, 2
    // Predicated region
    $region37: #{cross_attention.1} parent=5 // pred_check
      %p252 = pneg %p251
    $region38: #{cross_attention.1} parent=5 // pred_check_branch
      %254 = sbr.rel (%p252) target = $region40
    $region39: #{cross_attention.1} parent=5 // pred_region
      // Predicated region
      $region41: #{cross_attention.1} parent=39 // pred_check
        %p255 = pneg %p34
      $region42: #{cross_attention.1} parent=39 // pred_check_branch
        %257 = sbr.rel (%p255) target = $region44
      $region43: #{cross_attention.1} parent=39 // pred_region
        %p258 = scmp.lt.s32.totalorder %s14, 1
        %s259 = scalar_select %p258, %s14, 1
        %s260 = smul.addr %s259, 8
        %s261 = smul.addr %s260, 8
        %s262 = scalar_lea.vmem %s0, %s261
      $region44: #{cross_attention.1} parent=39 // pred_fallthru
        _
      // Predicated region
      $region45: #{cross_attention.1} parent=39 // pred_check
        %p263 = pneg %p60
      $region46: #{cross_attention.1} parent=39 // pred_check_branch
        %265 = sbr.rel (%p263) target = $region48
      $region47: #{cross_attention.1} parent=39 // pred_region
        %p266 = scmp.lt.s32.totalorder %s14, 1
        %s267 = scalar_select %p266, %s14, 1
        %s268 = smul.addr %s267, 8
        %s269 = smul.addr %s268, 8
        %s270 = scalar_lea.vmem %s1, %s269
      $region48: #{cross_attention.1} parent=39 // pred_fallthru
        _
    $region40: #{cross_attention.1} parent=5 // pred_fallthru
      _
    %p271 = scmp.le.s32.totalorder 1, %s14
    %p272 = scmp.lt.s32.totalorder %s14, 3
    %p273 = pnand %p271, %p272
    %p274 = pneg %p273
    // Predicated region
    $region49: #{cross_attention.1} parent=5 // pred_check
      _
    $region50: #{cross_attention.1} parent=5 // pred_check_branch
      %276 = sbr.rel (%p273) target = $region52
    $region51: #{cross_attention.1} parent=5 // pred_region
      %s277 = ssub.s32 %s14, 1
      %p278 = scmp.lt.s32.totalorder %s19, 1
      %s279 = scalar_select %p278, %s19, 1
      %s280 = smul.addr %s279, 8
      %s281 = smul.addr %s280, 8
      %s282 = scalar_lea.vmem %s0, %s281
      %p283 = pneg %p40
      %p284 = pneg %p37
      %p285 = scmp.lt.s32.totalorder %s19, 1
      %s286 = scalar_select %p285, %s19, 1
      %s287 = smul.addr %s286, 8
      %s288 = smul.addr %s287, 8
      %s289 = scalar_lea.vmem %s1, %s288
      %p290 = pneg %p66
      %p291 = pneg %p63
      %p292 = pneg %p87
      %p293 = pneg %p84
      %p294 = pneg %p108
      %p295 = pneg %p105
      %p296 = pneg %p129
      %p297 = pneg %p126
      %p298 = pneg %p150
      %p299 = pneg %p147
      %p300 = pneg %p171
      %p301 = pneg %p168
      %p302 = pneg %p192
      %p303 = pneg %p189
      %p304 = pneg %p218
      %p305 = pneg %p215
      %p306 = scmp.lt.s32.totalorder %s19, 1
      %s307 = scalar_select %p306, %s19, 1
      %s308 = smul.addr %s307, 8
      %s309 = smul.addr %s308, 8
      %s310 = scalar_lea.vmem %s8, %s309
      %p311 = scmp.lt.s32.totalorder %s19, 1
      %s312 = scalar_select %p311, %s19, 1
      %s313 = smul.addr %s312, 8
      %s314 = smul.addr %s313, 8
      %s315 = scalar_lea.vmem %s0, %s314
      %p316 = scmp.lt.s32.totalorder %s19, 1
      %s317 = scalar_select %p316, %s19, 1
      %s318 = smul.addr %s317, 8
      %s319 = smul.addr %s318, 8
      %s320 = scalar_lea.vmem %s1, %s319
      %p321 = scmp.lt.s32.totalorder %s19, 1
      %s322 = scalar_select %p321, %s19, 1
      %s323 = smul.addr %s322, 8
      %s324 = smul.addr %s323, 8
      %s325 = scalar_lea.vmem %s8, %s324
      %v326 = vld [vmem:[%s2] sm:$0xff]
      %v327 = vld [vmem:[%s2 + $0x8] sm:$0xff]
      %v328 = vld [vmem:[%s2 + $0x10] sm:$0xff]
      %v329 = vld [vmem:[%s2 + $0x18] sm:$0xff]
      %v330 = vld [vmem:[%s2 + $0x20] sm:$0xff]
      %v331 = vld [vmem:[%s2 + $0x28] sm:$0xff]
      %v332 = vld [vmem:[%s2 + $0x30] sm:$0xff]
      %v333 = vld [vmem:[%s2 + $0x38] sm:$0xff]
      %v334 = vld [vmem:[%s2 + $0x40] sm:$0xff]
      %v335 = vld [vmem:[%s2 + $0x48] sm:$0xff]
      %v336 = vld [vmem:[%s2 + $0x50] sm:$0xff]
      %v337 = vld [vmem:[%s2 + $0x58] sm:$0xff]
      %v338 = vld [vmem:[%s2 + $0x60] sm:$0xff]
      %v339 = vld [vmem:[%s2 + $0x68] sm:$0xff]
      %v340 = vld [vmem:[%s2 + $0x70] sm:$0xff]
      %v341 = vld [vmem:[%s2 + $0x78] sm:$0xff]
      %v342 = vld [vmem:[%s315] sm:$0xff]
      %v343 = vld [vmem:[%s315 + $0x8] sm:$0xff]
      %v344 = vld [vmem:[%s315 + $0x10] sm:$0xff]
      %v345 = vld [vmem:[%s315 + $0x18] sm:$0xff]
      %v346 = vld [vmem:[%s315 + $0x20] sm:$0xff]
      %v347 = vld [vmem:[%s315 + $0x28] sm:$0xff]
      %v348 = vld [vmem:[%s315 + $0x30] sm:$0xff]
      %v349 = vld [vmem:[%s315 + $0x38] sm:$0xff]
      %v350 = vld [vmem:[%s3] sm:$0xff]
      %v351 = vld [vmem:[%s3 + $0x8] sm:$0xff]
      %v352 = vld [vmem:[%s3 + $0x10] sm:$0xff]
      %v353 = vld [vmem:[%s3 + $0x18] sm:$0xff]
      %v354 = vld [vmem:[%s3 + $0x20] sm:$0xff]
      %v355 = vld [vmem:[%s3 + $0x28] sm:$0xff]
      %v356 = vld [vmem:[%s3 + $0x30] sm:$0xff]
      %v357 = vld [vmem:[%s3 + $0x38] sm:$0xff]
      %v358 = vld [vmem:[%s3 + $0x40] sm:$0xff]
      %v359 = vld [vmem:[%s3 + $0x48] sm:$0xff]
      %v360 = vld [vmem:[%s3 + $0x50] sm:$0xff]
      %v361 = vld [vmem:[%s3 + $0x58] sm:$0xff]
      %v362 = vld [vmem:[%s3 + $0x60] sm:$0xff]
      %v363 = vld [vmem:[%s3 + $0x68] sm:$0xff]
      %v364 = vld [vmem:[%s3 + $0x70] sm:$0xff]
      %v365 = vld [vmem:[%s3 + $0x78] sm:$0xff]
      %367 = vset.pattern.permute.xlu0 0
      %368 = vperm.xlu0 %367, %v350
      %v369 = vpop.permute.xlu0 %368
      %372 = vset.pattern.permute.xlu0 0
      %373 = vperm.xlu0 %372, %v351
      %v374 = vpop.permute.xlu0 %373
      %377 = vset.pattern.permute.xlu0 0
      %378 = vperm.xlu0 %377, %v352
      %v379 = vpop.permute.xlu0 %378
      %382 = vset.pattern.permute.xlu0 0
      %383 = vperm.xlu0 %382, %v353
      %v384 = vpop.permute.xlu0 %383
      %387 = vset.pattern.permute.xlu0 0
      %388 = vperm.xlu0 %387, %v354
      %v389 = vpop.permute.xlu0 %388
      %392 = vset.pattern.permute.xlu0 0
      %393 = vperm.xlu0 %392, %v355
      %v394 = vpop.permute.xlu0 %393
      %397 = vset.pattern.permute.xlu0 0
      %398 = vperm.xlu0 %397, %v356
      %v399 = vpop.permute.xlu0 %398
      %402 = vset.pattern.permute.xlu0 0
      %403 = vperm.xlu0 %402, %v357
      %v404 = vpop.permute.xlu0 %403
      %407 = vset.pattern.permute.xlu0 0
      %408 = vperm.xlu0 %407, %v358
      %v409 = vpop.permute.xlu0 %408
      %412 = vset.pattern.permute.xlu0 0
      %413 = vperm.xlu0 %412, %v359
      %v414 = vpop.permute.xlu0 %413
      %417 = vset.pattern.permute.xlu0 0
      %418 = vperm.xlu0 %417, %v360
      %v419 = vpop.permute.xlu0 %418
      %422 = vset.pattern.permute.xlu0 0
      %423 = vperm.xlu0 %422, %v361
      %v424 = vpop.permute.xlu0 %423
      %427 = vset.pattern.permute.xlu0 0
      %428 = vperm.xlu0 %427, %v362
      %v429 = vpop.permute.xlu0 %428
      %432 = vset.pattern.permute.xlu0 0
      %433 = vperm.xlu0 %432, %v363
      %v434 = vpop.permute.xlu0 %433
      %437 = vset.pattern.permute.xlu0 0
      %438 = vperm.xlu0 %437, %v364
      %v439 = vpop.permute.xlu0 %438
      %442 = vset.pattern.permute.xlu0 0
      %443 = vperm.xlu0 %442, %v365
      %v444 = vpop.permute.xlu0 %443
      %vm446 = vcmask 261120
      %v448 = vsel %vm446, %v326, 0
      %v451 = vsel %vm446, %v327, 0
      %v454 = vsel %vm446, %v328, 0
      %v457 = vsel %vm446, %v329, 0
      %v460 = vsel %vm446, %v330, 0
      %v463 = vsel %vm446, %v331, 0
      %v466 = vsel %vm446, %v332, 0
      %v469 = vsel %vm446, %v333, 0
      %v472 = vsel %vm446, %v334, 0
      %v475 = vsel %vm446, %v335, 0
      %v478 = vsel %vm446, %v336, 0
      %v481 = vsel %vm446, %v337, 0
      %v484 = vsel %vm446, %v338, 0
      %v487 = vsel %vm446, %v339, 0
      %v490 = vsel %vm446, %v340, 0
      %v493 = vsel %vm446, %v341, 0
      %495 = vmatprep.subr.mxu0 %v343
      %496 = vmatpush1.msra.mxu0 %v342
      %497 = vmatprep.subr.mxu0 %v345
      %498 = vmatpush1.msra.mxu0 %v344
      %499 = vmatprep.subr.mxu0 %v347
      %500 = vmatpush1.msra.mxu0 %v346
      %501 = vmatprep.subr.mxu0 %v349
      %502 = vmatpush1.msra.mxu0 %v348
      %503 = vmatprep.subr.mxu0 0.0
      %504 = vmatpush1.msra.mxu0 0.0
      %505 = vmatprep.subr.mxu0 0.0
      %506 = vmatpush1.msra.mxu0 0.0
      %507 = vmatprep.subr.mxu0 0.0
      %508 = vmatpush1.msra.mxu0 0.0
      %509 = vmatprep.subr.mxu0 0.0
      %510 = vmatpush1.msra.mxu0 0.0
      %511 = vmatprep.subr.mxu0 0.0
      %512 = vmatpush1.msra.mxu0 0.0
      %513 = vmatprep.subr.mxu0 0.0
      %514 = vmatpush1.msra.mxu0 0.0
      %515 = vmatprep.subr.mxu0 0.0
      %516 = vmatpush1.msra.mxu0 0.0
      %517 = vmatprep.subr.mxu0 0.0
      %518 = vmatpush1.msra.mxu0 0.0
      %519 = vmatprep.subr.mxu0 0.0
      %520 = vmatpush1.msra.mxu0 0.0
      %521 = vmatprep.subr.mxu0 0.0
      %522 = vmatpush1.msra.mxu0 0.0
      %523 = vmatprep.subr.mxu0 0.0
      %524 = vmatpush1.msra.mxu0 0.0
      %525 = vmatprep.subr.mxu0 0.0
      %526 = vmatpush1.msra.mxu0 0.0
      %527 = vmatprep.subr.mxu0 0.0
      %528 = vmatpush1.msra.mxu0 0.0
      %529 = vmatprep.subr.mxu0 0.0
      %530 = vmatpush1.msra.mxu0 0.0
      %531 = vmatprep.subr.mxu0 0.0
      %532 = vmatpush1.msra.mxu0 0.0
      %533 = vmatprep.subr.mxu0 0.0
      %534 = vmatpush1.msra.mxu0 0.0
      %535 = vmatprep.subr.mxu0 0.0
      %536 = vmatpush1.msra.mxu0 0.0
      %537 = vmatprep.subr.mxu0 0.0
      %538 = vmatpush1.msra.mxu0 0.0
      %539 = vmatprep.subr.mxu0 0.0
      %540 = vmatpush1.msra.mxu0 0.0
      %541 = vmatprep.subr.mxu0 0.0
      %542 = vmatpush1.msra.mxu0 0.0
      %543 = vmatprep.subr.mxu0 0.0
      %544 = vmatpush1.msra.mxu0 0.0
      %545 = vmatprep.subr.mxu0 0.0
      %546 = vmatpush1.msra.mxu0 0.0
      %547 = vmatprep.subr.mxu0 0.0
      %548 = vmatpush1.msra.mxu0 0.0
      %549 = vmatprep.subr.mxu0 0.0
      %550 = vmatpush1.msra.mxu0 0.0
      %551 = vmatprep.subr.mxu0 0.0
      %552 = vmatpush1.msra.mxu0 0.0
      %553 = vmatprep.subr.mxu0 0.0
      %554 = vmatpush1.msra.mxu0 0.0
      %555 = vmatprep.subr.mxu0 0.0
      %556 = vmatpush1.msra.mxu0 0.0
      %557 = vmatprep.subr.mxu0 0.0
      %558 = vmatpush1.msra.mxu0 0.0
      %559 = vmatprep.mubr.f32.mxu0 0.0
      %560 = vmatmul.mubr.f32.gmra.mrb[0].mxu0 %v448
      %v561 = vpop.f32.mrb[0].mxu0
      %v562 = vadd.f32 %v369, %v561
      %v563 = vpop.f32.mrb[0].mxu0
      %v564 = vadd.f32 %v369, %v563
      %565 = vmatprep.mubr.f32.mxu0 0.0
      %566 = vmatmul.mubr.f32.gmra.mrb[0].mxu0 %v451
      %v567 = vpop.f32.mrb[0].mxu0
      %v568 = vadd.f32 %v374, %v567
      %v569 = vpop.f32.mrb[0].mxu0
      %v570 = vadd.f32 %v374, %v569
      %571 = vmatprep.mubr.f32.mxu0 0.0
      %572 = vmatmul.mubr.f32.gmra.mrb[0].mxu0 %v454
      %v573 = vpop.f32.mrb[0].mxu0
      %v574 = vadd.f32 %v379, %v573
      %v575 = vpop.f32.mrb[0].mxu0
      %v576 = vadd.f32 %v379, %v575
      %577 = vmatprep.mubr.f32.mxu0 0.0
      %578 = vmatmul.mubr.f32.gmra.mrb[0].mxu0 %v457
      %v579 = vpop.f32.mrb[0].mxu0
      %v580 = vadd.f32 %v384, %v579
      %v581 = vpop.f32.mrb[0].mxu0
      %v582 = vadd.f32 %v384, %v581
      %583 = vmatprep.mubr.f32.mxu0 0.0
      %584 = vmatmul.mubr.f32.gmra.mrb[0].mxu0 %v460
      %v585 = vpop.f32.mrb[0].mxu0
      %v586 = vadd.f32 %v389, %v585
      %v587 = vpop.f32.mrb[0].mxu0
      %v588 = vadd.f32 %v389, %v587
      %589 = vmatprep.mubr.f32.mxu0 0.0
      %590 = vmatmul.mubr.f32.gmra.mrb[0].mxu0 %v463
      %v591 = vpop.f32.mrb[0].mxu0
      %v592 = vadd.f32 %v394, %v591
      %v593 = vpop.f32.mrb[0].mxu0
      %v594 = vadd.f32 %v394, %v593
      %595 = vmatprep.mubr.f32.mxu0 0.0
      %596 = vmatmul.mubr.f32.gmra.mrb[0].mxu0 %v466
      %v597 = vpop.f32.mrb[0].mxu0
      %v598 = vadd.f32 %v399, %v597
      %v599 = vpop.f32.mrb[0].mxu0
      %v600 = vadd.f32 %v399, %v599
      %601 = vmatprep.mubr.f32.mxu0 0.0
      %602 = vmatmul.mubr.f32.gmra.mrb[0].mxu0 %v469
      %v603 = vpop.f32.mrb[0].mxu0
      %v604 = vadd.f32 %v404, %v603
      %v605 = vpop.f32.mrb[0].mxu0
      %v606 = vadd.f32 %v404, %v605
      %607 = vmatprep.mubr.f32.mxu0 0.0
      %608 = vmatmul.mubr.f32.gmra.mrb[0].mxu0 %v472
      %v609 = vpop.f32.mrb[0].mxu0
      %v610 = vadd.f32 %v409, %v609
      %v611 = vpop.f32.mrb[0].mxu0
      %v612 = vadd.f32 %v409, %v611
      %613 = vmatprep.mubr.f32.mxu0 0.0
      %614 = vmatmul.mubr.f32.gmra.mrb[0].mxu0 %v475
      %v615 = vpop.f32.mrb[0].mxu0
      %v616 = vadd.f32 %v414, %v615
      %v617 = vpop.f32.mrb[0].mxu0
      %v618 = vadd.f32 %v414, %v617
      %619 = vmatprep.mubr.f32.mxu0 0.0
      %620 = vmatmul.mubr.f32.gmra.mrb[0].mxu0 %v478
      %v621 = vpop.f32.mrb[0].mxu0
      %v622 = vadd.f32 %v419, %v621
      %v623 = vpop.f32.mrb[0].mxu0
      %v624 = vadd.f32 %v419, %v623
      %625 = vmatprep.mubr.f32.mxu0 0.0
      %626 = vmatmul.mubr.f32.gmra.mrb[0].mxu0 %v481
      %v627 = vpop.f32.mrb[0].mxu0
      %v628 = vadd.f32 %v424, %v627
      %v629 = vpop.f32.mrb[0].mxu0
      %v630 = vadd.f32 %v424, %v629
      %631 = vmatprep.mubr.f32.mxu0 0.0
      %632 = vmatmul.mubr.f32.gmra.mrb[0].mxu0 %v484
      %v633 = vpop.f32.mrb[0].mxu0
      %v634 = vadd.f32 %v429, %v633
      %v635 = vpop.f32.mrb[0].mxu0
      %v636 = vadd.f32 %v429, %v635
      %637 = vmatprep.mubr.f32.mxu0 0.0
      %638 = vmatmul.mubr.f32.gmra.mrb[0].mxu0 %v487
      %v639 = vpop.f32.mrb[0].mxu0
      %v640 = vadd.f32 %v434, %v639
      %v641 = vpop.f32.mrb[0].mxu0
      %v642 = vadd.f32 %v434, %v641
      %643 = vmatprep.mubr.f32.mxu0 0.0
      %644 = vmatmul.mubr.f32.gmra.mrb[0].mxu0 %v490
      %v645 = vpop.f32.mrb[0].mxu0
      %v646 = vadd.f32 %v439, %v645
      %v647 = vpop.f32.mrb[0].mxu0
      %v648 = vadd.f32 %v439, %v647
      %649 = vmatprep.mubr.f32.mxu0 0.0
      %650 = vmatmul.mubr.f32.gmra.mrb[0].mxu0 %v493
      %v651 = vpop.f32.mrb[0].mxu0
      %v652 = vadd.f32 %v444, %v651
      %v653 = vpop.f32.mrb[0].mxu0
      %v654 = vadd.f32 %v444, %v653
      %655 = vdwg.mxu0
      %656 = vst [vmem:[#allocation2] sm:$0xff] %v562
      %657 = vst [vmem:[#allocation2 + $0x8] sm:$0xff] %v564
      %658 = vst [vmem:[#allocation2 + $0x10] sm:$0xff] %v568
      %659 = vst [vmem:[#allocation2 + $0x18] sm:$0xff] %v570
      %660 = vst [vmem:[#allocation2 + $0x20] sm:$0xff] %v574
      %661 = vst [vmem:[#allocation2 + $0x28] sm:$0xff] %v576
      %662 = vst [vmem:[#allocation2 + $0x30] sm:$0xff] %v580
      %663 = vst [vmem:[#allocation2 + $0x38] sm:$0xff] %v582
      %664 = vst [vmem:[#allocation2 + $0x40] sm:$0xff] %v586
      %665 = vst [vmem:[#allocation2 + $0x48] sm:$0xff] %v588
      %666 = vst [vmem:[#allocation2 + $0x50] sm:$0xff] %v592
      %667 = vst [vmem:[#allocation2 + $0x58] sm:$0xff] %v594
      %668 = vst [vmem:[#allocation2 + $0x60] sm:$0xff] %v598
      %669 = vst [vmem:[#allocation2 + $0x68] sm:$0xff] %v600
      %670 = vst [vmem:[#allocation2 + $0x70] sm:$0xff] %v604
      %671 = vst [vmem:[#allocation2 + $0x78] sm:$0xff] %v606
      %672 = vst [vmem:[#allocation2 + $0x80] sm:$0xff] %v610
      %673 = vst [vmem:[#allocation2 + $0x88] sm:$0xff] %v612
      %674 = vst [vmem:[#allocation2 + $0x90] sm:$0xff] %v616
      %675 = vst [vmem:[#allocation2 + $0x98] sm:$0xff] %v618
      %676 = vst [vmem:[#allocation2 + $0xa0] sm:$0xff] %v622
      %677 = vst [vmem:[#allocation2 + $0xa8] sm:$0xff] %v624
      %678 = vst [vmem:[#allocation2 + $0xb0] sm:$0xff] %v628
      %679 = vst [vmem:[#allocation2 + $0xb8] sm:$0xff] %v630
      %680 = vst [vmem:[#allocation2 + $0xc0] sm:$0xff] %v634
      %681 = vst [vmem:[#allocation2 + $0xc8] sm:$0xff] %v636
      %682 = vst [vmem:[#allocation2 + $0xd0] sm:$0xff] %v640
      %683 = vst [vmem:[#allocation2 + $0xd8] sm:$0xff] %v642
      %684 = vst [vmem:[#allocation2 + $0xe0] sm:$0xff] %v646
      %685 = vst [vmem:[#allocation2 + $0xe8] sm:$0xff] %v648
      %686 = vst [vmem:[#allocation2 + $0xf0] sm:$0xff] %v652
      %687 = vst [vmem:[#allocation2 + $0xf8] sm:$0xff] %v654
      %v688 = vld [vmem:[%s4] sm:$0xff]
      %v689 = vld [vmem:[%s4 + $0x8] sm:$0xff]
      %v690 = vld [vmem:[%s4 + $0x10] sm:$0xff]
      %v691 = vld [vmem:[%s4 + $0x18] sm:$0xff]
      %v692 = vld [vmem:[%s4 + $0x20] sm:$0xff]
      %v693 = vld [vmem:[%s4 + $0x28] sm:$0xff]
      %v694 = vld [vmem:[%s4 + $0x30] sm:$0xff]
      %v695 = vld [vmem:[%s4 + $0x38] sm:$0xff]
      %v696 = vld [vmem:[%s4 + $0x40] sm:$0xff]
      %v697 = vld [vmem:[%s4 + $0x48] sm:$0xff]
      %v698 = vld [vmem:[%s4 + $0x50] sm:$0xff]
      %v699 = vld [vmem:[%s4 + $0x58] sm:$0xff]
      %v700 = vld [vmem:[%s4 + $0x60] sm:$0xff]
      %v701 = vld [vmem:[%s4 + $0x68] sm:$0xff]
      %v702 = vld [vmem:[%s4 + $0x70] sm:$0xff]
      %v703 = vld [vmem:[%s4 + $0x78] sm:$0xff]
      %v704 = vld [vmem:[%s4 + $0x80] sm:$0xff]
      %v705 = vld [vmem:[%s4 + $0x88] sm:$0xff]
      %v706 = vld [vmem:[%s4 + $0x90] sm:$0xff]
      %v707 = vld [vmem:[%s4 + $0x98] sm:$0xff]
      %v708 = vld [vmem:[%s4 + $0xa0] sm:$0xff]
      %v709 = vld [vmem:[%s4 + $0xa8] sm:$0xff]
      %v710 = vld [vmem:[%s4 + $0xb0] sm:$0xff]
      %v711 = vld [vmem:[%s4 + $0xb8] sm:$0xff]
      %v712 = vld [vmem:[%s4 + $0xc0] sm:$0xff]
      %v713 = vld [vmem:[%s4 + $0xc8] sm:$0xff]
      %v714 = vld [vmem:[%s4 + $0xd0] sm:$0xff]
      %v715 = vld [vmem:[%s4 + $0xd8] sm:$0xff]
      %v716 = vld [vmem:[%s4 + $0xe0] sm:$0xff]
      %v717 = vld [vmem:[%s4 + $0xe8] sm:$0xff]
      %v718 = vld [vmem:[%s4 + $0xf0] sm:$0xff]
      %v719 = vld [vmem:[%s4 + $0xf8] sm:$0xff]
      %v720 = vld [vmem:[%s320] sm:$0xff]
      %v721 = vld [vmem:[%s320 + $0x8] sm:$0xff]
      %v722 = vld [vmem:[%s320 + $0x10] sm:$0xff]
      %v723 = vld [vmem:[%s320 + $0x18] sm:$0xff]
      %v724 = vld [vmem:[%s320 + $0x20] sm:$0xff]
      %v725 = vld [vmem:[%s320 + $0x28] sm:$0xff]
      %v726 = vld [vmem:[%s320 + $0x30] sm:$0xff]
      %v727 = vld [vmem:[%s320 + $0x38] sm:$0xff]
      %v728 = vld [vmem:[%s5] sm:$0xff]
      %v729 = vld [vmem:[%s5 + $0x8] sm:$0xff]
      %v730 = vld [vmem:[%s5 + $0x10] sm:$0xff]
      %v731 = vld [vmem:[%s5 + $0x18] sm:$0xff]
      %v732 = vld [vmem:[%s5 + $0x20] sm:$0xff]
      %v733 = vld [vmem:[%s5 + $0x28] sm:$0xff]
      %v734 = vld [vmem:[%s5 + $0x30] sm:$0xff]
      %v735 = vld [vmem:[%s5 + $0x38] sm:$0xff]
      %v736 = vld [vmem:[%s5 + $0x40] sm:$0xff]
      %v737 = vld [vmem:[%s5 + $0x48] sm:$0xff]
      %v738 = vld [vmem:[%s5 + $0x50] sm:$0xff]
      %v739 = vld [vmem:[%s5 + $0x58] sm:$0xff]
      %v740 = vld [vmem:[%s5 + $0x60] sm:$0xff]
      %v741 = vld [vmem:[%s5 + $0x68] sm:$0xff]
      %v742 = vld [vmem:[%s5 + $0x70] sm:$0xff]
      %v743 = vld [vmem:[%s5 + $0x78] sm:$0xff]
      %v744 = vld [vmem:[%s5 + $0x80] sm:$0xff]
      %v745 = vld [vmem:[%s5 + $0x88] sm:$0xff]
      %v746 = vld [vmem:[%s5 + $0x90] sm:$0xff]
      %v747 = vld [vmem:[%s5 + $0x98] sm:$0xff]
      %v748 = vld [vmem:[%s5 + $0xa0] sm:$0xff]
      %v749 = vld [vmem:[%s5 + $0xa8] sm:$0xff]
      %v750 = vld [vmem:[%s5 + $0xb0] sm:$0xff]
      %v751 = vld [vmem:[%s5 + $0xb8] sm:$0xff]
      %v752 = vld [vmem:[%s5 + $0xc0] sm:$0xff]
      %v753 = vld [vmem:[%s5 + $0xc8] sm:$0xff]
      %v754 = vld [vmem:[%s5 + $0xd0] sm:$0xff]
      %v755 = vld [vmem:[%s5 + $0xd8] sm:$0xff]
      %v756 = vld [vmem:[%s5 + $0xe0] sm:$0xff]
      %v757 = vld [vmem:[%s5 + $0xe8] sm:$0xff]
      %v758 = vld [vmem:[%s5 + $0xf0] sm:$0xff]
      %v759 = vld [vmem:[%s5 + $0xf8] sm:$0xff]
      %761 = vset.pattern.permute.xlu0 0
      %762 = vperm.xlu0 %761, %v728
      %v763 = vpop.permute.xlu0 %762
      %766 = vset.pattern.permute.xlu0 0
      %767 = vperm.xlu0 %766, %v729
      %v768 = vpop.permute.xlu0 %767
      %771 = vset.pattern.permute.xlu0 0
      %772 = vperm.xlu0 %771, %v730
      %v773 = vpop.permute.xlu0 %772
      %776 = vset.pattern.permute.xlu0 0
      %777 = vperm.xlu0 %776, %v731
      %v778 = vpop.permute.xlu0 %777
      %781 = vset.pattern.permute.xlu0 0
      %782 = vperm.xlu0 %781, %v732
      %v783 = vpop.permute.xlu0 %782
      %786 = vset.pattern.permute.xlu0 0
      %787 = vperm.xlu0 %786, %v733
      %v788 = vpop.permute.xlu0 %787
      %791 = vset.pattern.permute.xlu0 0
      %792 = vperm.xlu0 %791, %v734
      %v793 = vpop.permute.xlu0 %792
      %796 = vset.pattern.permute.xlu0 0
      %797 = vperm.xlu0 %796, %v735
      %v798 = vpop.permute.xlu0 %797
      %801 = vset.pattern.permute.xlu0 0
      %802 = vperm.xlu0 %801, %v736
      %v803 = vpop.permute.xlu0 %802
      %806 = vset.pattern.permute.xlu0 0
      %807 = vperm.xlu0 %806, %v737
      %v808 = vpop.permute.xlu0 %807
      %811 = vset.pattern.permute.xlu0 0
      %812 = vperm.xlu0 %811, %v738
      %v813 = vpop.permute.xlu0 %812
      %816 = vset.pattern.permute.xlu0 0
      %817 = vperm.xlu0 %816, %v739
      %v818 = vpop.permute.xlu0 %817
      %821 = vset.pattern.permute.xlu0 0
      %822 = vperm.xlu0 %821, %v740
      %v823 = vpop.permute.xlu0 %822
      %826 = vset.pattern.permute.xlu0 0
      %827 = vperm.xlu0 %826, %v741
      %v828 = vpop.permute.xlu0 %827
      %831 = vset.pattern.permute.xlu0 0
      %832 = vperm.xlu0 %831, %v742
      %v833 = vpop.permute.xlu0 %832
      %836 = vset.pattern.permute.xlu0 0
      %837 = vperm.xlu0 %836, %v743
      %v838 = vpop.permute.xlu0 %837
      %841 = vset.pattern.permute.xlu0 0
      %842 = vperm.xlu0 %841, %v744
      %v843 = vpop.permute.xlu0 %842
      %846 = vset.pattern.permute.xlu0 0
      %847 = vperm.xlu0 %846, %v745
      %v848 = vpop.permute.xlu0 %847
      %851 = vset.pattern.permute.xlu0 0
      %852 = vperm.xlu0 %851, %v746
      %v853 = vpop.permute.xlu0 %852
      %856 = vset.pattern.permute.xlu0 0
      %857 = vperm.xlu0 %856, %v747
      %v858 = vpop.permute.xlu0 %857
      %861 = vset.pattern.permute.xlu0 0
      %862 = vperm.xlu0 %861, %v748
      %v863 = vpop.permute.xlu0 %862
      %866 = vset.pattern.permute.xlu0 0
      %867 = vperm.xlu0 %866, %v749
      %v868 = vpop.permute.xlu0 %867
      %871 = vset.pattern.permute.xlu0 0
      %872 = vperm.xlu0 %871, %v750
      %v873 = vpop.permute.xlu0 %872
      %876 = vset.pattern.permute.xlu0 0
      %877 = vperm.xlu0 %876, %v751
      %v878 = vpop.permute.xlu0 %877
      %881 = vset.pattern.permute.xlu0 0
      %882 = vperm.xlu0 %881, %v752
      %v883 = vpop.permute.xlu0 %882
      %886 = vset.pattern.permute.xlu0 0
      %887 = vperm.xlu0 %886, %v753
      %v888 = vpop.permute.xlu0 %887
      %891 = vset.pattern.permute.xlu0 0
      %892 = vperm.xlu0 %891, %v754
      %v893 = vpop.permute.xlu0 %892
      %896 = vset.pattern.permute.xlu0 0
      %897 = vperm.xlu0 %896, %v755
      %v898 = vpop.permute.xlu0 %897
      %901 = vset.pattern.permute.xlu0 0
      %902 = vperm.xlu0 %901, %v756
      %v903 = vpop.permute.xlu0 %902
      %906 = vset.pattern.permute.xlu0 0
      %907 = vperm.xlu0 %906, %v757
      %v908 = vpop.permute.xlu0 %907
      %911 = vset.pattern.permute.xlu0 0
      %912 = vperm.xlu0 %911, %v758
      %v913 = vpop.permute.xlu0 %912
      %916 = vset.pattern.permute.xlu0 0
      %917 = vperm.xlu0 %916, %v759
      %v918 = vpop.permute.xlu0 %917
      %v921 = vsel %vm446, %v688, 0
      %v924 = vsel %vm446, %v689, 0
      %v927 = vsel %vm446, %v690, 0
      %v930 = vsel %vm446, %v691, 0
      %v933 = vsel %vm446, %v692, 0
      %v936 = vsel %vm446, %v693, 0
      %v939 = vsel %vm446, %v694, 0
      %v942 = vsel %vm446, %v695, 0
      %v945 = vsel %vm446, %v696, 0
      %v948 = vsel %vm446, %v697, 0
      %v951 = vsel %vm446, %v698, 0
      %v954 = vsel %vm446, %v699, 0
      %v957 = vsel %vm446, %v700, 0
      %v960 = vsel %vm446, %v701, 0
      %v963 = vsel %vm446, %v702, 0
      %v966 = vsel %vm446, %v703, 0
      %v969 = vsel %vm446, %v704, 0
      %v972 = vsel %vm446, %v705, 0
      %v975 = vsel %vm446, %v706, 0
      %v978 = vsel %vm446, %v707, 0
      %v981 = vsel %vm446, %v708, 0
      %v984 = vsel %vm446, %v709, 0
      %v987 = vsel %vm446, %v710, 0
      %v990 = vsel %vm446, %v711, 0
      %v993 = vsel %vm446, %v712, 0
      %v996 = vsel %vm446, %v713, 0
      %v999 = vsel %vm446, %v714, 0
      %v1002 = vsel %vm446, %v715, 0
      %v1005 = vsel %vm446, %v716, 0
      %v1008 = vsel %vm446, %v717, 0
      %v1011 = vsel %vm446, %v718, 0
      %v1014 = vsel %vm446, %v719, 0
      %1016 = vmatprep.subr.mxu0 %v721
      %1017 = vmatpush1.msra.mxu0 %v720
      %1018 = vmatprep.subr.mxu0 %v723
      %1019 = vmatpush1.msra.mxu0 %v722
      %1020 = vmatprep.subr.mxu0 %v725
      %1021 = vmatpush1.msra.mxu0 %v724
      %1022 = vmatprep.subr.mxu0 %v727
      %1023 = vmatpush1.msra.mxu0 %v726
      %1024 = vmatprep.subr.mxu0 0.0
      %1025 = vmatpush1.msra.mxu0 0.0
      %1026 = vmatprep.subr.mxu0 0.0
      %1027 = vmatpush1.msra.mxu0 0.0
      %1028 = vmatprep.subr.mxu0 0.0
      %1029 = vmatpush1.msra.mxu0 0.0
      %1030 = vmatprep.subr.mxu0 0.0
      %1031 = vmatpush1.msra.mxu0 0.0
      %1032 = vmatprep.subr.mxu0 0.0
      %1033 = vmatpush1.msra.mxu0 0.0
      %1034 = vmatprep.subr.mxu0 0.0
      %1035 = vmatpush1.msra.mxu0 0.0
      %1036 = vmatprep.subr.mxu0 0.0
      %1037 = vmatpush1.msra.mxu0 0.0
      %1038 = vmatprep.subr.mxu0 0.0
      %1039 = vmatpush1.msra.mxu0 0.0
      %1040 = vmatprep.subr.mxu0 0.0
      %1041 = vmatpush1.msra.mxu0 0.0
      %1042 = vmatprep.subr.mxu0 0.0
      %1043 = vmatpush1.msra.mxu0 0.0
      %1044 = vmatprep.subr.mxu0 0.0
      %1045 = vmatpush1.msra.mxu0 0.0
      %1046 = vmatprep.subr.mxu0 0.0
      %1047 = vmatpush1.msra.mxu0 0.0
      %1048 = vmatprep.subr.mxu0 0.0
      %1049 = vmatpush1.msra.mxu0 0.0
      %1050 = vmatprep.subr.mxu0 0.0
      %1051 = vmatpush1.msra.mxu0 0.0
      %1052 = vmatprep.subr.mxu0 0.0
      %1053 = vmatpush1.msra.mxu0 0.0
      %1054 = vmatprep.subr.mxu0 0.0
      %1055 = vmatpush1.msra.mxu0 0.0
      %1056 = vmatprep.subr.mxu0 0.0
      %1057 = vmatpush1.msra.mxu0 0.0
      %1058 = vmatprep.subr.mxu0 0.0
      %1059 = vmatpush1.msra.mxu0 0.0
      %1060 = vmatprep.subr.mxu0 0.0
      %1061 = vmatpush1.msra.mxu0 0.0
      %1062 = vmatprep.subr.mxu0 0.0
      %1063 = vmatpush1.msra.mxu0 0.0
      %1064 = vmatprep.subr.mxu0 0.0
      %1065 = vmatpush1.msra.mxu0 0.0
      %1066 = vmatprep.subr.mxu0 0.0
      %1067 = vmatpush1.msra.mxu0 0.0
      %1068 = vmatprep.subr.mxu0 0.0
      %1069 = vmatpush1.msra.mxu0 0.0
      %1070 = vmatprep.subr.mxu0 0.0
      %1071 = vmatpush1.msra.mxu0 0.0
      %1072 = vmatprep.subr.mxu0 0.0
      %1073 = vmatpush1.msra.mxu0 0.0
      %1074 = vmatprep.subr.mxu0 0.0
      %1075 = vmatpush1.msra.mxu0 0.0
      %1076 = vmatprep.subr.mxu0 0.0
      %1077 = vmatpush1.msra.mxu0 0.0
      %1078 = vmatprep.subr.mxu0 0.0
      %1079 = vmatpush1.msra.mxu0 0.0
      %1080 = vmatprep.mubr.f32.mxu0 0.0
      %1081 = vmatmul.mubr.f32.gmra.mrb[0].mxu0 %v921
      %v1082 = vpop.f32.mrb[0].mxu0
      %v1083 = vadd.f32 %v763, %v1082
      %v1084 = vpop.f32.mrb[0].mxu0
      %v1085 = vadd.f32 %v763, %v1084
      %1086 = vmatprep.mubr.f32.mxu0 0.0
      %1087 = vmatmul.mubr.f32.gmra.mrb[0].mxu0 %v924
      %v1088 = vpop.f32.mrb[0].mxu0
      %v1089 = vadd.f32 %v768, %v1088
      %v1090 = vpop.f32.mrb[0].mxu0
      %v1091 = vadd.f32 %v768, %v1090
      %1092 = vmatprep.mubr.f32.mxu0 0.0
      %1093 = vmatmul.mubr.f32.gmra.mrb[0].mxu0 %v927
      %v1094 = vpop.f32.mrb[0].mxu0
      %v1095 = vadd.f32 %v773, %v1094
      %v1096 = vpop.f32.mrb[0].mxu0
      %v1097 = vadd.f32 %v773, %v1096
      %1098 = vmatprep.mubr.f32.mxu0 0.0
      %1099 = vmatmul.mubr.f32.gmra.mrb[0].mxu0 %v930
      %v1100 = vpop.f32.mrb[0].mxu0
      %v1101 = vadd.f32 %v778, %v1100
      %v1102 = vpop.f32.mrb[0].mxu0
      %v1103 = vadd.f32 %v778, %v1102
      %1104 = vmatprep.mubr.f32.mxu0 0.0
      %1105 = vmatmul.mubr.f32.gmra.mrb[0].mxu0 %v933
      %v1106 = vpop.f32.mrb[0].mxu0
      %v1107 = vadd.f32 %v783, %v1106
      %v1108 = vpop.f32.mrb[0].mxu0
      %v1109 = vadd.f32 %v783, %v1108
      %1110 = vmatprep.mubr.f32.mxu0 0.0
      %1111 = vmatmul.mubr.f32.gmra.mrb[0].mxu0 %v936
      %v1112 = vpop.f32.mrb[0].mxu0
      %v1113 = vadd.f32 %v788, %v1112
      %v1114 = vpop.f32.mrb[0].mxu0
      %v1115 = vadd.f32 %v788, %v1114
      %1116 = vmatprep.mubr.f32.mxu0 0.0
      %1117 = vmatmul.mubr.f32.gmra.mrb[0].mxu0 %v939
      %v1118 = vpop.f32.mrb[0].mxu0
      %v1119 = vadd.f32 %v793, %v1118
      %v1120 = vpop.f32.mrb[0].mxu0
      %v1121 = vadd.f32 %v793, %v1120
      %1122 = vmatprep.mubr.f32.mxu0 0.0
      %1123 = vmatmul.mubr.f32.gmra.mrb[0].mxu0 %v942
      %v1124 = vpop.f32.mrb[0].mxu0
      %v1125 = vadd.f32 %v798, %v1124
      %v1126 = vpop.f32.mrb[0].mxu0
      %v1127 = vadd.f32 %v798, %v1126
      %1128 = vmatprep.mubr.f32.mxu0 0.0
      %1129 = vmatmul.mubr.f32.gmra.mrb[0].mxu0 %v945
      %v1130 = vpop.f32.mrb[0].mxu0
      %v1131 = vadd.f32 %v803, %v1130
      %v1132 = vpop.f32.mrb[0].mxu0
      %v1133 = vadd.f32 %v803, %v1132
      %1134 = vmatprep.mubr.f32.mxu0 0.0
      %1135 = vmatmul.mubr.f32.gmra.mrb[0].mxu0 %v948
      %v1136 = vpop.f32.mrb[0].mxu0
      %v1137 = vadd.f32 %v808, %v1136
      %v1138 = vpop.f32.mrb[0].mxu0
      %v1139 = vadd.f32 %v808, %v1138
      %1140 = vmatprep.mubr.f32.mxu0 0.0
      %1141 = vmatmul.mubr.f32.gmra.mrb[0].mxu0 %v951
      %v1142 = vpop.f32.mrb[0].mxu0
      %v1143 = vadd.f32 %v813, %v1142
      %v1144 = vpop.f32.mrb[0].mxu0
      %v1145 = vadd.f32 %v813, %v1144
      %1146 = vmatprep.mubr.f32.mxu0 0.0
      %1147 = vmatmul.mubr.f32.gmra.mrb[0].mxu0 %v954
      %v1148 = vpop.f32.mrb[0].mxu0
      %v1149 = vadd.f32 %v818, %v1148
      %v1150 = vpop.f32.mrb[0].mxu0
      %v1151 = vadd.f32 %v818, %v1150
      %1152 = vmatprep.mubr.f32.mxu0 0.0
      %1153 = vmatmul.mubr.f32.gmra.mrb[0].mxu0 %v957
      %v1154 = vpop.f32.mrb[0].mxu0
      %v1155 = vadd.f32 %v823, %v1154
      %v1156 = vpop.f32.mrb[0].mxu0
      %v1157 = vadd.f32 %v823, %v1156
      %1158 = vmatprep.mubr.f32.mxu0 0.0
      %1159 = vmatmul.mubr.f32.gmra.mrb[0].mxu0 %v960
      %v1160 = vpop.f32.mrb[0].mxu0
      %v1161 = vadd.f32 %v828, %v1160
      %v1162 = vpop.f32.mrb[0].mxu0
      %v1163 = vadd.f32 %v828, %v1162
      %1164 = vmatprep.mubr.f32.mxu0 0.0
      %1165 = vmatmul.mubr.f32.gmra.mrb[0].mxu0 %v963
      %v1166 = vpop.f32.mrb[0].mxu0
      %v1167 = vadd.f32 %v833, %v1166
      %v1168 = vpop.f32.mrb[0].mxu0
      %v1169 = vadd.f32 %v833, %v1168
      %1170 = vmatprep.mubr.f32.mxu0 0.0
      %1171 = vmatmul.mubr.f32.gmra.mrb[0].mxu0 %v966
      %v1172 = vpop.f32.mrb[0].mxu0
      %v1173 = vadd.f32 %v838, %v1172
      %v1174 = vpop.f32.mrb[0].mxu0
      %v1175 = vadd.f32 %v838, %v1174
      %1176 = vmatprep.mubr.f32.mxu0 0.0
      %1177 = vmatmul.mubr.f32.gmra.mrb[0].mxu0 %v969
      %v1178 = vpop.f32.mrb[0].mxu0
      %v1179 = vadd.f32 %v843, %v1178
      %v1180 = vpop.f32.mrb[0].mxu0
      %v1181 = vadd.f32 %v843, %v1180
      %1182 = vmatprep.mubr.f32.mxu0 0.0
      %1183 = vmatmul.mubr.f32.gmra.mrb[0].mxu0 %v972
      %v1184 = vpop.f32.mrb[0].mxu0
      %v1185 = vadd.f32 %v848, %v1184
      %v1186 = vpop.f32.mrb[0].mxu0
      %v1187 = vadd.f32 %v848, %v1186
      %1188 = vmatprep.mubr.f32.mxu0 0.0
      %1189 = vmatmul.mubr.f32.gmra.mrb[0].mxu0 %v975
      %v1190 = vpop.f32.mrb[0].mxu0
      %v1191 = vadd.f32 %v853, %v1190
      %v1192 = vpop.f32.mrb[0].mxu0
      %v1193 = vadd.f32 %v853, %v1192
      %1194 = vmatprep.mubr.f32.mxu0 0.0
      %1195 = vmatmul.mubr.f32.gmra.mrb[0].mxu0 %v978
      %v1196 = vpop.f32.mrb[0].mxu0
      %v1197 = vadd.f32 %v858, %v1196
      %v1198 = vpop.f32.mrb[0].mxu0
      %v1199 = vadd.f32 %v858, %v1198
      %1200 = vmatprep.mubr.f32.mxu0 0.0
      %1201 = vmatmul.mubr.f32.gmra.mrb[0].mxu0 %v981
      %v1202 = vpop.f32.mrb[0].mxu0
      %v1203 = vadd.f32 %v863, %v1202
      %v1204 = vpop.f32.mrb[0].mxu0
      %v1205 = vadd.f32 %v863, %v1204
      %1206 = vmatprep.mubr.f32.mxu0 0.0
      %1207 = vmatmul.mubr.f32.gmra.mrb[0].mxu0 %v984
      %v1208 = vpop.f32.mrb[0].mxu0
      %v1209 = vadd.f32 %v868, %v1208
      %v1210 = vpop.f32.mrb[0].mxu0
      %v1211 = vadd.f32 %v868, %v1210
      %1212 = vmatprep.mubr.f32.mxu0 0.0
      %1213 = vmatmul.mubr.f32.gmra.mrb[0].mxu0 %v987
      %v1214 = vpop.f32.mrb[0].mxu0
      %v1215 = vadd.f32 %v873, %v1214
      %v1216 = vpop.f32.mrb[0].mxu0
      %v1217 = vadd.f32 %v873, %v1216
      %1218 = vmatprep.mubr.f32.mxu0 0.0
      %1219 = vmatmul.mubr.f32.gmra.mrb[0].mxu0 %v990
      %v1220 = vpop.f32.mrb[0].mxu0
      %v1221 = vadd.f32 %v878, %v1220
      %v1222 = vpop.f32.mrb[0].mxu0
      %v1223 = vadd.f32 %v878, %v1222
      %1224 = vmatprep.mubr.f32.mxu0 0.0
      %1225 = vmatmul.mubr.f32.gmra.mrb[0].mxu0 %v993
      %v1226 = vpop.f32.mrb[0].mxu0
      %v1227 = vadd.f32 %v883, %v1226
      %v1228 = vpop.f32.mrb[0].mxu0
      %v1229 = vadd.f32 %v883, %v1228
      %1230 = vmatprep.mubr.f32.mxu0 0.0
      %1231 = vmatmul.mubr.f32.gmra.mrb[0].mxu0 %v996
      %v1232 = vpop.f32.mrb[0].mxu0
      %v1233 = vadd.f32 %v888, %v1232
      %v1234 = vpop.f32.mrb[0].mxu0
      %v1235 = vadd.f32 %v888, %v1234
      %1236 = vmatprep.mubr.f32.mxu0 0.0
      %1237 = vmatmul.mubr.f32.gmra.mrb[0].mxu0 %v999
      %v1238 = vpop.f32.mrb[0].mxu0
      %v1239 = vadd.f32 %v893, %v1238
      %v1240 = vpop.f32.mrb[0].mxu0
      %v1241 = vadd.f32 %v893, %v1240
      %1242 = vmatprep.mubr.f32.mxu0 0.0
      %1243 = vmatmul.mubr.f32.gmra.mrb[0].mxu0 %v1002
      %v1244 = vpop.f32.mrb[0].mxu0
      %v1245 = vadd.f32 %v898, %v1244
      %v1246 = vpop.f32.mrb[0].mxu0
      %v1247 = vadd.f32 %v898, %v1246
      %1248 = vmatprep.mubr.f32.mxu0 0.0
      %1249 = vmatmul.mubr.f32.gmra.mrb[0].mxu0 %v1005
      %v1250 = vpop.f32.mrb[0].mxu0
      %v1251 = vadd.f32 %v903, %v1250
      %v1252 = vpop.f32.mrb[0].mxu0
      %v1253 = vadd.f32 %v903, %v1252
      %1254 = vmatprep.mubr.f32.mxu0 0.0
      %1255 = vmatmul.mubr.f32.gmra.mrb[0].mxu0 %v1008
      %v1256 = vpop.f32.mrb[0].mxu0
      %v1257 = vadd.f32 %v908, %v1256
      %v1258 = vpop.f32.mrb[0].mxu0
      %v1259 = vadd.f32 %v908, %v1258
      %1260 = vmatprep.mubr.f32.mxu0 0.0
      %1261 = vmatmul.mubr.f32.gmra.mrb[0].mxu0 %v1011
      %v1262 = vpop.f32.mrb[0].mxu0
      %v1263 = vadd.f32 %v913, %v1262
      %v1264 = vpop.f32.mrb[0].mxu0
      %v1265 = vadd.f32 %v913, %v1264
      %1266 = vmatprep.mubr.f32.mxu0 0.0
      %1267 = vmatmul.mubr.f32.gmra.mrb[0].mxu0 %v1014
      %v1268 = vpop.f32.mrb[0].mxu0
      %v1269 = vadd.f32 %v918, %v1268
      %v1270 = vpop.f32.mrb[0].mxu0
      %v1271 = vadd.f32 %v918, %v1270
      %1272 = vdwg.mxu0
      %1273 = vst [vmem:[#allocation3] sm:$0xff] %v1083
      %1274 = vst [vmem:[#allocation3 + $0x8] sm:$0xff] %v1085
      %1275 = vst [vmem:[#allocation3 + $0x10] sm:$0xff] %v1089
      %1276 = vst [vmem:[#allocation3 + $0x18] sm:$0xff] %v1091
      %1277 = vst [vmem:[#allocation3 + $0x20] sm:$0xff] %v1095
      %1278 = vst [vmem:[#allocation3 + $0x28] sm:$0xff] %v1097
      %1279 = vst [vmem:[#allocation3 + $0x30] sm:$0xff] %v1101
      %1280 = vst [vmem:[#allocation3 + $0x38] sm:$0xff] %v1103
      %1281 = vst [vmem:[#allocation3 + $0x40] sm:$0xff] %v1107
      %1282 = vst [vmem:[#allocation3 + $0x48] sm:$0xff] %v1109
      %1283 = vst [vmem:[#allocation3 + $0x50] sm:$0xff] %v1113
      %1284 = vst [vmem:[#allocation3 + $0x58] sm:$0xff] %v1115
      %1285 = vst [vmem:[#allocation3 + $0x60] sm:$0xff] %v1119
      %1286 = vst [vmem:[#allocation3 + $0x68] sm:$0xff] %v1121
      %1287 = vst [vmem:[#allocation3 + $0x70] sm:$0xff] %v1125
      %1288 = vst [vmem:[#allocation3 + $0x78] sm:$0xff] %v1127
      %1289 = vst [vmem:[#allocation3 + $0x80] sm:$0xff] %v1131
      %1290 = vst [vmem:[#allocation3 + $0x88] sm:$0xff] %v1133
      %1291 = vst [vmem:[#allocation3 + $0x90] sm:$0xff] %v1137
      %1292 = vst [vmem:[#allocation3 + $0x98] sm:$0xff] %v1139
      %1293 = vst [vmem:[#allocation3 + $0xa0] sm:$0xff] %v1143
      %1294 = vst [vmem:[#allocation3 + $0xa8] sm:$0xff] %v1145
      %1295 = vst [vmem:[#allocation3 + $0xb0] sm:$0xff] %v1149
      %1296 = vst [vmem:[#allocation3 + $0xb8] sm:$0xff] %v1151
      %1297 = vst [vmem:[#allocation3 + $0xc0] sm:$0xff] %v1155
      %1298 = vst [vmem:[#allocation3 + $0xc8] sm:$0xff] %v1157
      %1299 = vst [vmem:[#allocation3 + $0xd0] sm:$0xff] %v1161
      %1300 = vst [vmem:[#allocation3 + $0xd8] sm:$0xff] %v1163
      %1301 = vst [vmem:[#allocation3 + $0xe0] sm:$0xff] %v1167
      %1302 = vst [vmem:[#allocation3 + $0xe8] sm:$0xff] %v1169
      %1303 = vst [vmem:[#allocation3 + $0xf0] sm:$0xff] %v1173
      %1304 = vst [vmem:[#allocation3 + $0xf8] sm:$0xff] %v1175
      %1305 = vst [vmem:[#allocation3 + $0x100] sm:$0xff] %v1179
      %1306 = vst [vmem:[#allocation3 + $0x108] sm:$0xff] %v1181
      %1307 = vst [vmem:[#allocation3 + $0x110] sm:$0xff] %v1185
      %1308 = vst [vmem:[#allocation3 + $0x118] sm:$0xff] %v1187
      %1309 = vst [vmem:[#allocation3 + $0x120] sm:$0xff] %v1191
      %1310 = vst [vmem:[#allocation3 + $0x128] sm:$0xff] %v1193
      %1311 = vst [vmem:[#allocation3 + $0x130] sm:$0xff] %v1197
      %1312 = vst [vmem:[#allocation3 + $0x138] sm:$0xff] %v1199
      %1313 = vst [vmem:[#allocation3 + $0x140] sm:$0xff] %v1203
      %1314 = vst [vmem:[#allocation3 + $0x148] sm:$0xff] %v1205
      %1315 = vst [vmem:[#allocation3 + $0x150] sm:$0xff] %v1209
      %1316 = vst [vmem:[#allocation3 + $0x158] sm:$0xff] %v1211
      %1317 = vst [vmem:[#allocation3 + $0x160] sm:$0xff] %v1215
      %1318 = vst [vmem:[#allocation3 + $0x168] sm:$0xff] %v1217
      %1319 = vst [vmem:[#allocation3 + $0x170] sm:$0xff] %v1221
      %1320 = vst [vmem:[#allocation3 + $0x178] sm:$0xff] %v1223
      %1321 = vst [vmem:[#allocation3 + $0x180] sm:$0xff] %v1227
      %1322 = vst [vmem:[#allocation3 + $0x188] sm:$0xff] %v1229
      %1323 = vst [vmem:[#allocation3 + $0x190] sm:$0xff] %v1233
      %1324 = vst [vmem:[#allocation3 + $0x198] sm:$0xff] %v1235
      %1325 = vst [vmem:[#allocation3 + $0x1a0] sm:$0xff] %v1239
      %1326 = vst [vmem:[#allocation3 + $0x1a8] sm:$0xff] %v1241
      %1327 = vst [vmem:[#allocation3 + $0x1b0] sm:$0xff] %v1245
      %1328 = vst [vmem:[#allocation3 + $0x1b8] sm:$0xff] %v1247
      %1329 = vst [vmem:[#allocation3 + $0x1c0] sm:$0xff] %v1251
      %1330 = vst [vmem:[#allocation3 + $0x1c8] sm:$0xff] %v1253
      %1331 = vst [vmem:[#allocation3 + $0x1d0] sm:$0xff] %v1257
      %1332 = vst [vmem:[#allocation3 + $0x1d8] sm:$0xff] %v1259
      %1333 = vst [vmem:[#allocation3 + $0x1e0] sm:$0xff] %v1263
      %1334 = vst [vmem:[#allocation3 + $0x1e8] sm:$0xff] %v1265
      %1335 = vst [vmem:[#allocation3 + $0x1f0] sm:$0xff] %v1269
      %1336 = vst [vmem:[#allocation3 + $0x1f8] sm:$0xff] %v1271
      %v1337 = vld [vmem:[#allocation3] sm:$0xff]
      %v1338 = vld [vmem:[#allocation3 + $0x8] sm:$0xff]
      %v1339 = vld [vmem:[#allocation3 + $0x10] sm:$0xff]
      %v1340 = vld [vmem:[#allocation3 + $0x18] sm:$0xff]
      %v1341 = vld [vmem:[#allocation3 + $0x20] sm:$0xff]
      %v1342 = vld [vmem:[#allocation3 + $0x28] sm:$0xff]
      %v1343 = vld [vmem:[#allocation3 + $0x30] sm:$0xff]
      %v1344 = vld [vmem:[#allocation3 + $0x38] sm:$0xff]
      %v1345 = vld [vmem:[#allocation3 + $0x40] sm:$0xff]
      %v1346 = vld [vmem:[#allocation3 + $0x48] sm:$0xff]
      %v1347 = vld [vmem:[#allocation3 + $0x50] sm:$0xff]
      %v1348 = vld [vmem:[#allocation3 + $0x58] sm:$0xff]
      %v1349 = vld [vmem:[#allocation3 + $0x60] sm:$0xff]
      %v1350 = vld [vmem:[#allocation3 + $0x68] sm:$0xff]
      %v1351 = vld [vmem:[#allocation3 + $0x70] sm:$0xff]
      %v1352 = vld [vmem:[#allocation3 + $0x78] sm:$0xff]
      %v1353 = vld [vmem:[#allocation2] sm:$0xff]
      %v1354 = vld [vmem:[#allocation2 + $0x10] sm:$0xff]
      %v1355 = vld [vmem:[#allocation2 + $0x20] sm:$0xff]
      %v1356 = vld [vmem:[#allocation2 + $0x30] sm:$0xff]
      %v1357 = vld [vmem:[#allocation2 + $0x40] sm:$0xff]
      %v1358 = vld [vmem:[#allocation2 + $0x50] sm:$0xff]
      %v1359 = vld [vmem:[#allocation2 + $0x60] sm:$0xff]
      %v1360 = vld [vmem:[#allocation2 + $0x70] sm:$0xff]
      %1361 = vxpose.xlu0.b32.start [1/16] %v1337, 128
      %1362 = vxpose.xlu0.b32.cont [2/16] %v1339, 128
      %1363 = vxpose.xlu0.b32.cont [3/16] %v1341, 128
      %1364 = vxpose.xlu0.b32.cont [4/16] %v1343, 128
      %1365 = vxpose.xlu0.b32.cont [5/16] %v1345, 128
      %1366 = vxpose.xlu0.b32.cont [6/16] %v1347, 128
      %1367 = vxpose.xlu0.b32.cont [7/16] %v1349, 128
      %1368 = vxpose.xlu0.b32.cont [8/16] %v1351, 128
      %1369 = vxpose.xlu0.b32.cont [9/16] 0.0, 128
      %1370 = vxpose.xlu0.b32.cont [10/16] 0.0, 128
      %1371 = vxpose.xlu0.b32.cont [11/16] 0.0, 128
      %1372 = vxpose.xlu0.b32.cont [12/16] 0.0, 128
      %1373 = vxpose.xlu0.b32.cont [13/16] 0.0, 128
      %1374 = vxpose.xlu0.b32.cont [14/16] 0.0, 128
      %1375 = vxpose.xlu0.b32.cont [15/16] 0.0, 128
      %1376 = vxpose.xlu0.b32.end [16/16] 0.0, 128
      %v1377 = vpop.trf.xlu0
      %v1378 = vpop.trf.xlu0
      %v1379 = vpop.trf.xlu0
      %v1380 = vpop.trf.xlu0
      %v1381 = vpop.trf.xlu0
      %v1382 = vpop.trf.xlu0
      %v1383 = vpop.trf.xlu0
      %v1384 = vpop.trf.xlu0
      %v1385 = vpop.trf.xlu0
      %v1386 = vpop.trf.xlu0
      %v1387 = vpop.trf.xlu0
      %v1388 = vpop.trf.xlu0
      %v1389 = vpop.trf.xlu0
      %v1390 = vpop.trf.xlu0
      %v1391 = vpop.trf.xlu0
      %v1392 = vpop.trf.xlu0
      %1393 = vxpose.xlu0.b32.start [1/16] %v1338, 128
      %1394 = vxpose.xlu0.b32.cont [2/16] %v1340, 128
      %1395 = vxpose.xlu0.b32.cont [3/16] %v1342, 128
      %1396 = vxpose.xlu0.b32.cont [4/16] %v1344, 128
      %1397 = vxpose.xlu0.b32.cont [5/16] %v1346, 128
      %1398 = vxpose.xlu0.b32.cont [6/16] %v1348, 128
      %1399 = vxpose.xlu0.b32.cont [7/16] %v1350, 128
      %1400 = vxpose.xlu0.b32.cont [8/16] %v1352, 128
      %1401 = vxpose.xlu0.b32.cont [9/16] 0.0, 128
      %1402 = vxpose.xlu0.b32.cont [10/16] 0.0, 128
      %1403 = vxpose.xlu0.b32.cont [11/16] 0.0, 128
      %1404 = vxpose.xlu0.b32.cont [12/16] 0.0, 128
      %1405 = vxpose.xlu0.b32.cont [13/16] 0.0, 128
      %1406 = vxpose.xlu0.b32.cont [14/16] 0.0, 128
      %1407 = vxpose.xlu0.b32.cont [15/16] 0.0, 128
      %1408 = vxpose.xlu0.b32.end [16/16] 0.0, 128
      %v1409 = vpop.trf.xlu0
      %v1410 = vpop.trf.xlu0
      %v1411 = vpop.trf.xlu0
      %v1412 = vpop.trf.xlu0
      %v1413 = vpop.trf.xlu0
      %v1414 = vpop.trf.xlu0
      %v1415 = vpop.trf.xlu0
      %v1416 = vpop.trf.xlu0
      %v1417 = vpop.trf.xlu0
      %v1418 = vpop.trf.xlu0
      %v1419 = vpop.trf.xlu0
      %v1420 = vpop.trf.xlu0
      %v1421 = vpop.trf.xlu0
      %v1422 = vpop.trf.xlu0
      %v1423 = vpop.trf.xlu0
      %v1424 = vpop.trf.xlu0
      %vm1425 = vcmask 523264
      %v1427 = vsel %vm1425, %v1377, 0
      %v1430 = vsel %vm1425, %v1378, 0
      %v1433 = vsel %vm1425, %v1379, 0
      %v1436 = vsel %vm1425, %v1380, 0
      %v1439 = vsel %vm1425, %v1381, 0
      %v1442 = vsel %vm1425, %v1382, 0
      %v1445 = vsel %vm1425, %v1383, 0
      %v1448 = vsel %vm1425, %v1384, 0
      %v1451 = vsel %vm1425, %v1385, 0
      %v1454 = vsel %vm1425, %v1386, 0
      %v1457 = vsel %vm1425, %v1387, 0
      %v1460 = vsel %vm1425, %v1388, 0
      %v1463 = vsel %vm1425, %v1389, 0
      %v1466 = vsel %vm1425, %v1390, 0
      %v1469 = vsel %vm1425, %v1391, 0
      %v1472 = vsel %vm1425, %v1392, 0
      %v1475 = vsel %vm1425, %v1409, 0
      %v1478 = vsel %vm1425, %v1410, 0
      %v1481 = vsel %vm1425, %v1411, 0
      %v1484 = vsel %vm1425, %v1412, 0
      %v1487 = vsel %vm1425, %v1413, 0
      %v1490 = vsel %vm1425, %v1414, 0
      %v1493 = vsel %vm1425, %v1415, 0
      %v1496 = vsel %vm1425, %v1416, 0
      %v1499 = vsel %vm1425, %v1417, 0
      %v1502 = vsel %vm1425, %v1418, 0
      %v1505 = vsel %vm1425, %v1419, 0
      %v1508 = vsel %vm1425, %v1420, 0
      %v1511 = vsel %vm1425, %v1421, 0
      %v1514 = vsel %vm1425, %v1422, 0
      %v1517 = vsel %vm1425, %v1423, 0
      %v1520 = vsel %vm1425, %v1424, 0
      %1522 = vmatprep.subr.mxu0 0.0
      %1523 = vmatpush1.msra.mxu0 %v1353
      %1524 = vmatprep.subr.mxu0 0.0
      %1525 = vmatpush1.msra.mxu0 %v1354
      %1526 = vmatprep.subr.mxu0 0.0
      %1527 = vmatpush1.msra.mxu0 %v1355
      %1528 = vmatprep.subr.mxu0 0.0
      %1529 = vmatpush1.msra.mxu0 %v1356
      %1530 = vmatprep.subr.mxu0 0.0
      %1531 = vmatpush1.msra.mxu0 %v1357
      %1532 = vmatprep.subr.mxu0 0.0
      %1533 = vmatpush1.msra.mxu0 %v1358
      %1534 = vmatprep.subr.mxu0 0.0
      %1535 = vmatpush1.msra.mxu0 %v1359
      %1536 = vmatprep.subr.mxu0 0.0
      %1537 = vmatpush1.msra.mxu0 %v1360
      %1538 = vmatprep.subr.mxu0 0.0
      %1539 = vmatpush1.msra.mxu0 0.0
      %1540 = vmatprep.subr.mxu0 0.0
      %1541 = vmatpush1.msra.mxu0 0.0
      %1542 = vmatprep.subr.mxu0 0.0
      %1543 = vmatpush1.msra.mxu0 0.0
      %1544 = vmatprep.subr.mxu0 0.0
      %1545 = vmatpush1.msra.mxu0 0.0
      %1546 = vmatprep.subr.mxu0 0.0
      %1547 = vmatpush1.msra.mxu0 0.0
      %1548 = vmatprep.subr.mxu0 0.0
      %1549 = vmatpush1.msra.mxu0 0.0
      %1550 = vmatprep.subr.mxu0 0.0
      %1551 = vmatpush1.msra.mxu0 0.0
      %1552 = vmatprep.subr.mxu0 0.0
      %1553 = vmatpush1.msra.mxu0 0.0
      %1554 = vmatprep.subr.mxu0 0.0
      %1555 = vmatpush1.msra.mxu0 0.0
      %1556 = vmatprep.subr.mxu0 0.0
      %1557 = vmatpush1.msra.mxu0 0.0
      %1558 = vmatprep.subr.mxu0 0.0
      %1559 = vmatpush1.msra.mxu0 0.0
      %1560 = vmatprep.subr.mxu0 0.0
      %1561 = vmatpush1.msra.mxu0 0.0
      %1562 = vmatprep.subr.mxu0 0.0
      %1563 = vmatpush1.msra.mxu0 0.0
      %1564 = vmatprep.subr.mxu0 0.0
      %1565 = vmatpush1.msra.mxu0 0.0
      %1566 = vmatprep.subr.mxu0 0.0
      %1567 = vmatpush1.msra.mxu0 0.0
      %1568 = vmatprep.subr.mxu0 0.0
      %1569 = vmatpush1.msra.mxu0 0.0
      %1570 = vmatprep.subr.mxu0 0.0
      %1571 = vmatpush1.msra.mxu0 0.0
      %1572 = vmatprep.subr.mxu0 0.0
      %1573 = vmatpush1.msra.mxu0 0.0
      %1574 = vmatprep.subr.mxu0 0.0
      %1575 = vmatpush1.msra.mxu0 0.0
      %1576 = vmatprep.subr.mxu0 0.0
      %1577 = vmatpush1.msra.mxu0 0.0
      %1578 = vmatprep.subr.mxu0 0.0
      %1579 = vmatpush1.msra.mxu0 0.0
      %1580 = vmatprep.subr.mxu0 0.0
      %1581 = vmatpush1.msra.mxu0 0.0
      %1582 = vmatprep.subr.mxu0 0.0
      %1583 = vmatpush1.msra.mxu0 0.0
      %1584 = vmatprep.subr.mxu0 0.0
      %1585 = vmatpush1.msra.mxu0 0.0
      %1586 = vmatprep.mubr.f32.mxu0 0.0
      %1587 = vmatmul.mubr.f32.gmra.mrb[0].mxu0 %v1427
      %v1588 = vpop.f32.mrb[0].mxu0
      %v1589 = vadd.f32 0.0, %v1588
      %v1590 = vpop.f32.mrb[0].mxu0
      %1591 = vmatprep.mubr.f32.mxu0 0.0
      %1592 = vmatmul.mubr.f32.gmra.mrb[0].mxu0 %v1430
      %v1593 = vpop.f32.mrb[0].mxu0
      %v1594 = vadd.f32 0.0, %v1593
      %v1595 = vpop.f32.mrb[0].mxu0
      %1596 = vmatprep.mubr.f32.mxu0 0.0
      %1597 = vmatmul.mubr.f32.gmra.mrb[0].mxu0 %v1433
      %v1598 = vpop.f32.mrb[0].mxu0
      %v1599 = vadd.f32 0.0, %v1598
      %v1600 = vpop.f32.mrb[0].mxu0
      %1601 = vmatprep.mubr.f32.mxu0 0.0
      %1602 = vmatmul.mubr.f32.gmra.mrb[0].mxu0 %v1436
      %v1603 = vpop.f32.mrb[0].mxu0
      %v1604 = vadd.f32 0.0, %v1603
      %v1605 = vpop.f32.mrb[0].mxu0
      %1606 = vmatprep.mubr.f32.mxu0 0.0
      %1607 = vmatmul.mubr.f32.gmra.mrb[0].mxu0 %v1439
      %v1608 = vpop.f32.mrb[0].mxu0
      %v1609 = vadd.f32 0.0, %v1608
      %v1610 = vpop.f32.mrb[0].mxu0
      %1611 = vmatprep.mubr.f32.mxu0 0.0
      %1612 = vmatmul.mubr.f32.gmra.mrb[0].mxu0 %v1442
      %v1613 = vpop.f32.mrb[0].mxu0
      %v1614 = vadd.f32 0.0, %v1613
      %v1615 = vpop.f32.mrb[0].mxu0
      %1616 = vmatprep.mubr.f32.mxu0 0.0
      %1617 = vmatmul.mubr.f32.gmra.mrb[0].mxu0 %v1445
      %v1618 = vpop.f32.mrb[0].mxu0
      %v1619 = vadd.f32 0.0, %v1618
      %v1620 = vpop.f32.mrb[0].mxu0
      %1621 = vmatprep.mubr.f32.mxu0 0.0
      %1622 = vmatmul.mubr.f32.gmra.mrb[0].mxu0 %v1448
      %v1623 = vpop.f32.mrb[0].mxu0
      %v1624 = vadd.f32 0.0, %v1623
      %v1625 = vpop.f32.mrb[0].mxu0
      %1626 = vmatprep.mubr.f32.mxu0 0.0
      %1627 = vmatmul.mubr.f32.gmra.mrb[0].mxu0 %v1451
      %v1628 = vpop.f32.mrb[0].mxu0
      %v1629 = vadd.f32 0.0, %v1628
      %v1630 = vpop.f32.mrb[0].mxu0
      %1631 = vmatprep.mubr.f32.mxu0 0.0
      %1632 = vmatmul.mubr.f32.gmra.mrb[0].mxu0 %v1454
      %v1633 = vpop.f32.mrb[0].mxu0
      %v1634 = vadd.f32 0.0, %v1633
      %v1635 = vpop.f32.mrb[0].mxu0
      %1636 = vmatprep.mubr.f32.mxu0 0.0
      %1637 = vmatmul.mubr.f32.gmra.mrb[0].mxu0 %v1457
      %v1638 = vpop.f32.mrb[0].mxu0
      %v1639 = vadd.f32 0.0, %v1638
      %v1640 = vpop.f32.mrb[0].mxu0
      %1641 = vmatprep.mubr.f32.mxu0 0.0
      %1642 = vmatmul.mubr.f32.gmra.mrb[0].mxu0 %v1460
      %v1643 = vpop.f32.mrb[0].mxu0
      %v1644 = vadd.f32 0.0, %v1643
      %v1645 = vpop.f32.mrb[0].mxu0
      %1646 = vmatprep.mubr.f32.mxu0 0.0
      %1647 = vmatmul.mubr.f32.gmra.mrb[0].mxu0 %v1463
      %v1648 = vpop.f32.mrb[0].mxu0
      %v1649 = vadd.f32 0.0, %v1648
      %v1650 = vpop.f32.mrb[0].mxu0
      %1651 = vmatprep.mubr.f32.mxu0 0.0
      %1652 = vmatmul.mubr.f32.gmra.mrb[0].mxu0 %v1466
      %v1653 = vpop.f32.mrb[0].mxu0
      %v1654 = vadd.f32 0.0, %v1653
      %v1655 = vpop.f32.mrb[0].mxu0
      %1656 = vmatprep.mubr.f32.mxu0 0.0
      %1657 = vmatmul.mubr.f32.gmra.mrb[0].mxu0 %v1469
      %v1658 = vpop.f32.mrb[0].mxu0
      %v1659 = vadd.f32 0.0, %v1658
      %v1660 = vpop.f32.mrb[0].mxu0
      %1661 = vmatprep.mubr.f32.mxu0 0.0
      %1662 = vmatmul.mubr.f32.gmra.mrb[0].mxu0 %v1472
      %v1663 = vpop.f32.mrb[0].mxu0
      %v1664 = vadd.f32 0.0, %v1663
      %v1665 = vpop.f32.mrb[0].mxu0
      %1666 = vmatprep.mubr.f32.mxu0 0.0
      %1667 = vmatmul.mubr.f32.gmra.mrb[0].mxu0 %v1475
      %v1668 = vpop.f32.mrb[0].mxu0
      %v1669 = vadd.f32 0.0, %v1668
      %v1670 = vpop.f32.mrb[0].mxu0
      %1671 = vmatprep.mubr.f32.mxu0 0.0
      %1672 = vmatmul.mubr.f32.gmra.mrb[0].mxu0 %v1478
      %v1673 = vpop.f32.mrb[0].mxu0
      %v1674 = vadd.f32 0.0, %v1673
      %v1675 = vpop.f32.mrb[0].mxu0
      %1676 = vmatprep.mubr.f32.mxu0 0.0
      %1677 = vmatmul.mubr.f32.gmra.mrb[0].mxu0 %v1481
      %v1678 = vpop.f32.mrb[0].mxu0
      %v1679 = vadd.f32 0.0, %v1678
      %v1680 = vpop.f32.mrb[0].mxu0
      %1681 = vmatprep.mubr.f32.mxu0 0.0
      %1682 = vmatmul.mubr.f32.gmra.mrb[0].mxu0 %v1484
      %v1683 = vpop.f32.mrb[0].mxu0
      %v1684 = vadd.f32 0.0, %v1683
      %v1685 = vpop.f32.mrb[0].mxu0
      %1686 = vmatprep.mubr.f32.mxu0 0.0
      %1687 = vmatmul.mubr.f32.gmra.mrb[0].mxu0 %v1487
      %v1688 = vpop.f32.mrb[0].mxu0
      %v1689 = vadd.f32 0.0, %v1688
      %v1690 = vpop.f32.mrb[0].mxu0
      %1691 = vmatprep.mubr.f32.mxu0 0.0
      %1692 = vmatmul.mubr.f32.gmra.mrb[0].mxu0 %v1490
      %v1693 = vpop.f32.mrb[0].mxu0
      %v1694 = vadd.f32 0.0, %v1693
      %v1695 = vpop.f32.mrb[0].mxu0
      %1696 = vmatprep.mubr.f32.mxu0 0.0
      %1697 = vmatmul.mubr.f32.gmra.mrb[0].mxu0 %v1493
      %v1698 = vpop.f32.mrb[0].mxu0
      %v1699 = vadd.f32 0.0, %v1698
      %v1700 = vpop.f32.mrb[0].mxu0
      %1701 = vmatprep.mubr.f32.mxu0 0.0
      %1702 = vmatmul.mubr.f32.gmra.mrb[0].mxu0 %v1496
      %v1703 = vpop.f32.mrb[0].mxu0
      %v1704 = vadd.f32 0.0, %v1703
      %v1705 = vpop.f32.mrb[0].mxu0
      %1706 = vmatprep.mubr.f32.mxu0 0.0
      %1707 = vmatmul.mubr.f32.gmra.mrb[0].mxu0 %v1499
      %v1708 = vpop.f32.mrb[0].mxu0
      %v1709 = vadd.f32 0.0, %v1708
      %v1710 = vpop.f32.mrb[0].mxu0
      %1711 = vmatprep.mubr.f32.mxu0 0.0
      %1712 = vmatmul.mubr.f32.gmra.mrb[0].mxu0 %v1502
      %v1713 = vpop.f32.mrb[0].mxu0
      %v1714 = vadd.f32 0.0, %v1713
      %v1715 = vpop.f32.mrb[0].mxu0
      %1716 = vmatprep.mubr.f32.mxu0 0.0
      %1717 = vmatmul.mubr.f32.gmra.mrb[0].mxu0 %v1505
      %v1718 = vpop.f32.mrb[0].mxu0
      %v1719 = vadd.f32 0.0, %v1718
      %v1720 = vpop.f32.mrb[0].mxu0
      %1721 = vmatprep.mubr.f32.mxu0 0.0
      %1722 = vmatmul.mubr.f32.gmra.mrb[0].mxu0 %v1508
      %v1723 = vpop.f32.mrb[0].mxu0
      %v1724 = vadd.f32 0.0, %v1723
      %v1725 = vpop.f32.mrb[0].mxu0
      %1726 = vmatprep.mubr.f32.mxu0 0.0
      %1727 = vmatmul.mubr.f32.gmra.mrb[0].mxu0 %v1511
      %v1728 = vpop.f32.mrb[0].mxu0
      %v1729 = vadd.f32 0.0, %v1728
      %v1730 = vpop.f32.mrb[0].mxu0
      %1731 = vmatprep.mubr.f32.mxu0 0.0
      %1732 = vmatmul.mubr.f32.gmra.mrb[0].mxu0 %v1514
      %v1733 = vpop.f32.mrb[0].mxu0
      %v1734 = vadd.f32 0.0, %v1733
      %v1735 = vpop.f32.mrb[0].mxu0
      %1736 = vmatprep.mubr.f32.mxu0 0.0
      %1737 = vmatmul.mubr.f32.gmra.mrb[0].mxu0 %v1517
      %v1738 = vpop.f32.mrb[0].mxu0
      %v1739 = vadd.f32 0.0, %v1738
      %v1740 = vpop.f32.mrb[0].mxu0
      %1741 = vmatprep.mubr.f32.mxu0 0.0
      %1742 = vmatmul.mubr.f32.gmra.mrb[0].mxu0 %v1520
      %v1743 = vpop.f32.mrb[0].mxu0
      %v1744 = vadd.f32 0.0, %v1743
      %v1745 = vpop.f32.mrb[0].mxu0
      %1746 = vdwg.mxu0
      %v1747 = vmax.f32 %v1589, %v1609
      %v1748 = vmax.f32 %v1594, %v1614
      %v1749 = vmax.f32 %v1599, %v1619
      %v1750 = vmax.f32 %v1604, %v1624
      %v1751 = vmax.f32 %v1747, %v1629
      %v1752 = vmax.f32 %v1748, %v1634
      %v1753 = vmax.f32 %v1749, %v1639
      %v1754 = vmax.f32 %v1750, %v1644
      %v1755 = vmax.f32 %v1751, %v1649
      %v1756 = vmax.f32 %v1752, %v1654
      %v1757 = vmax.f32 %v1753, %v1659
      %v1758 = vmax.f32 %v1754, %v1664
      %v1759 = vmax.f32 %v1755, %v1669
      %v1760 = vmax.f32 %v1756, %v1674
      %v1761 = vmax.f32 %v1757, %v1679
      %v1762 = vmax.f32 %v1758, %v1684
      %v1763 = vmax.f32 %v1759, %v1689
      %v1764 = vmax.f32 %v1760, %v1694
      %v1765 = vmax.f32 %v1761, %v1699
      %v1766 = vmax.f32 %v1762, %v1704
      %v1767 = vmax.f32 %v1763, %v1709
      %v1768 = vmax.f32 %v1764, %v1714
      %v1769 = vmax.f32 %v1765, %v1719
      %v1770 = vmax.f32 %v1766, %v1724
      %v1771 = vmax.f32 %v1767, %v1729
      %v1772 = vmax.f32 %v1768, %v1734
      %v1773 = vmax.f32 %v1769, %v1739
      %v1774 = vmax.f32 %v1770, %v1744
      %v1775 = vmax.f32 %v1771, %v1772
      %v1776 = vmax.f32 %v1773, %v1774
      %v1777 = vmax.f32 %v1775, %v1776
      %v1778 = vrot.slane %v1777, 4
      %v1779 = vmax.f32 %v1777, %v1778
      %v1780 = vrot.slane %v1779, 2
      %v1781 = vmax.f32 %v1779, %v1780
      %v1782 = vrot.slane %v1781, 1
      %v1783 = vmax.f32 %v1781, %v1782
      %v1784 = vsub.f32 %v1589, %v1783
      %v1785 = vsub.f32 %v1594, %v1783
      %v1786 = vsub.f32 %v1599, %v1783
      %v1787 = vsub.f32 %v1604, %v1783
      %v1788 = vsub.f32 %v1609, %v1783
      %v1789 = vsub.f32 %v1614, %v1783
      %v1790 = vsub.f32 %v1619, %v1783
      %v1791 = vsub.f32 %v1624, %v1783
      %v1792 = vsub.f32 %v1629, %v1783
      %v1793 = vsub.f32 %v1634, %v1783
      %v1794 = vsub.f32 %v1639, %v1783
      %v1795 = vsub.f32 %v1644, %v1783
      %v1796 = vsub.f32 %v1649, %v1783
      %v1797 = vsub.f32 %v1654, %v1783
      %v1798 = vsub.f32 %v1659, %v1783
      %v1799 = vsub.f32 %v1664, %v1783
      %v1800 = vsub.f32 %v1669, %v1783
      %v1801 = vsub.f32 %v1674, %v1783
      %v1802 = vsub.f32 %v1679, %v1783
      %v1803 = vsub.f32 %v1684, %v1783
      %v1804 = vsub.f32 %v1689, %v1783
      %v1805 = vsub.f32 %v1694, %v1783
      %v1806 = vsub.f32 %v1699, %v1783
      %v1807 = vsub.f32 %v1704, %v1783
      %v1808 = vsub.f32 %v1709, %v1783
      %v1809 = vsub.f32 %v1714, %v1783
      %v1810 = vsub.f32 %v1719, %v1783
      %v1811 = vsub.f32 %v1724, %v1783
      %v1812 = vsub.f32 %v1729, %v1783
      %v1813 = vsub.f32 %v1734, %v1783
      %v1814 = vsub.f32 %v1739, %v1783
      %v1815 = vsub.f32 %v1744, %v1783
      %v1816 = vmul.f32 %v1784, 1.442695
      %v1817 = vpow.pop %v1816
      %v1818 = vmul.f32 %v1785, 1.442695
      %v1819 = vpow.pop %v1818
      %v1820 = vmul.f32 %v1786, 1.442695
      %v1821 = vpow.pop %v1820
      %v1822 = vmul.f32 %v1787, 1.442695
      %v1823 = vpow.pop %v1822
      %v1824 = vmul.f32 %v1788, 1.442695
      %v1825 = vpow.pop %v1824
      %v1826 = vmul.f32 %v1789, 1.442695
      %v1827 = vpow.pop %v1826
      %v1828 = vmul.f32 %v1790, 1.442695
      %v1829 = vpow.pop %v1828
      %v1830 = vmul.f32 %v1791, 1.442695
      %v1831 = vpow.pop %v1830
      %v1832 = vmul.f32 %v1792, 1.442695
      %v1833 = vpow.pop %v1832
      %v1834 = vmul.f32 %v1793, 1.442695
      %v1835 = vpow.pop %v1834
      %v1836 = vmul.f32 %v1794, 1.442695
      %v1837 = vpow.pop %v1836
      %v1838 = vmul.f32 %v1795, 1.442695
      %v1839 = vpow.pop %v1838
      %v1840 = vmul.f32 %v1796, 1.442695
      %v1841 = vpow.pop %v1840
      %v1842 = vmul.f32 %v1797, 1.442695
      %v1843 = vpow.pop %v1842
      %v1844 = vmul.f32 %v1798, 1.442695
      %v1845 = vpow.pop %v1844
      %v1846 = vmul.f32 %v1799, 1.442695
      %v1847 = vpow.pop %v1846
      %v1848 = vmul.f32 %v1800, 1.442695
      %v1849 = vpow.pop %v1848
      %v1850 = vmul.f32 %v1801, 1.442695
      %v1851 = vpow.pop %v1850
      %v1852 = vmul.f32 %v1802, 1.442695
      %v1853 = vpow.pop %v1852
      %v1854 = vmul.f32 %v1803, 1.442695
      %v1855 = vpow.pop %v1854
      %v1856 = vmul.f32 %v1804, 1.442695
      %v1857 = vpow.pop %v1856
      %v1858 = vmul.f32 %v1805, 1.442695
      %v1859 = vpow.pop %v1858
      %v1860 = vmul.f32 %v1806, 1.442695
      %v1861 = vpow.pop %v1860
      %v1862 = vmul.f32 %v1807, 1.442695
      %v1863 = vpow.pop %v1862
      %v1864 = vmul.f32 %v1808, 1.442695
      %v1865 = vpow.pop %v1864
      %v1866 = vmul.f32 %v1809, 1.442695
      %v1867 = vpow.pop %v1866
      %v1868 = vmul.f32 %v1810, 1.442695
      %v1869 = vpow.pop %v1868
      %v1870 = vmul.f32 %v1811, 1.442695
      %v1871 = vpow.pop %v1870
      %v1872 = vmul.f32 %v1812, 1.442695
      %v1873 = vpow.pop %v1872
      %v1874 = vmul.f32 %v1813, 1.442695
      %v1875 = vpow.pop %v1874
      %v1876 = vmul.f32 %v1814, 1.442695
      %v1877 = vpow.pop %v1876
      %v1878 = vmul.f32 %v1815, 1.442695
      %v1879 = vpow.pop %v1878
      %v1880 = vadd.f32 %v1817, %v1819
      %v1881 = vadd.f32 %v1880, %v1821
      %v1882 = vadd.f32 %v1881, %v1823
      %v1883 = vadd.f32 %v1882, %v1825
      %v1884 = vadd.f32 %v1883, %v1827
      %v1885 = vadd.f32 %v1884, %v1829
      %v1886 = vadd.f32 %v1885, %v1831
      %v1887 = vadd.f32 %v1886, %v1833
      %v1888 = vadd.f32 %v1887, %v1835
      %v1889 = vadd.f32 %v1888, %v1837
      %v1890 = vadd.f32 %v1889, %v1839
      %v1891 = vadd.f32 %v1890, %v1841
      %v1892 = vadd.f32 %v1891, %v1843
      %v1893 = vadd.f32 %v1892, %v1845
      %v1894 = vadd.f32 %v1893, %v1847
      %v1895 = vadd.f32 %v1894, %v1849
      %v1896 = vadd.f32 %v1895, %v1851
      %v1897 = vadd.f32 %v1896, %v1853
      %v1898 = vadd.f32 %v1897, %v1855
      %v1899 = vadd.f32 %v1898, %v1857
      %v1900 = vadd.f32 %v1899, %v1859
      %v1901 = vadd.f32 %v1900, %v1861
      %v1902 = vadd.f32 %v1901, %v1863
      %v1903 = vadd.f32 %v1902, %v1865
      %v1904 = vadd.f32 %v1903, %v1867
      %v1905 = vadd.f32 %v1904, %v1869
      %v1906 = vadd.f32 %v1905, %v1871
      %v1907 = vadd.f32 %v1906, %v1873
      %v1908 = vadd.f32 %v1907, %v1875
      %v1909 = vadd.f32 %v1908, %v1877
      %v1910 = vadd.f32 %v1909, %v1879
      %v1911 = vrot.slane %v1910, 4
      %v1912 = vadd.f32 %v1910, %v1911
      %v1913 = vrot.slane %v1912, 2
      %v1914 = vadd.f32 %v1912, %v1913
      %v1915 = vrot.slane %v1914, 1
      %v1916 = vadd.f32 %v1914, %v1915
      %v1917 = vld [vmem:[#allocation3 + $0x100] sm:$0xff]
      %v1918 = vld [vmem:[#allocation3 + $0x108] sm:$0xff]
      %v1919 = vld [vmem:[#allocation3 + $0x110] sm:$0xff]
      %v1920 = vld [vmem:[#allocation3 + $0x118] sm:$0xff]
      %v1921 = vld [vmem:[#allocation3 + $0x120] sm:$0xff]
      %v1922 = vld [vmem:[#allocation3 + $0x128] sm:$0xff]
      %v1923 = vld [vmem:[#allocation3 + $0x130] sm:$0xff]
      %v1924 = vld [vmem:[#allocation3 + $0x138] sm:$0xff]
      %v1925 = vld [vmem:[#allocation3 + $0x140] sm:$0xff]
      %v1926 = vld [vmem:[#allocation3 + $0x148] sm:$0xff]
      %v1927 = vld [vmem:[#allocation3 + $0x150] sm:$0xff]
      %v1928 = vld [vmem:[#allocation3 + $0x158] sm:$0xff]
      %v1929 = vld [vmem:[#allocation3 + $0x160] sm:$0xff]
      %v1930 = vld [vmem:[#allocation3 + $0x168] sm:$0xff]
      %v1931 = vld [vmem:[#allocation3 + $0x170] sm:$0xff]
      %v1932 = vld [vmem:[#allocation3 + $0x178] sm:$0xff]
      %1933 = vmatprep.subr.mxu0 0.0
      %1934 = vmatpush1.msra.mxu0 %v1817
      %1935 = vmatprep.subr.mxu0 0.0
      %1936 = vmatpush1.msra.mxu0 %v1819
      %1937 = vmatprep.subr.mxu0 0.0
      %1938 = vmatpush1.msra.mxu0 %v1821
      %1939 = vmatprep.subr.mxu0 0.0
      %1940 = vmatpush1.msra.mxu0 %v1823
      %1941 = vmatprep.subr.mxu0 0.0
      %1942 = vmatpush1.msra.mxu0 %v1825
      %1943 = vmatprep.subr.mxu0 0.0
      %1944 = vmatpush1.msra.mxu0 %v1827
      %1945 = vmatprep.subr.mxu0 0.0
      %1946 = vmatpush1.msra.mxu0 %v1829
      %1947 = vmatprep.subr.mxu0 0.0
      %1948 = vmatpush1.msra.mxu0 %v1831
      %1949 = vmatprep.subr.mxu0 0.0
      %1950 = vmatpush1.msra.mxu0 %v1833
      %1951 = vmatprep.subr.mxu0 0.0
      %1952 = vmatpush1.msra.mxu0 %v1835
      %1953 = vmatprep.subr.mxu0 0.0
      %1954 = vmatpush1.msra.mxu0 %v1837
      %1955 = vmatprep.subr.mxu0 0.0
      %1956 = vmatpush1.msra.mxu0 %v1839
      %1957 = vmatprep.subr.mxu0 0.0
      %1958 = vmatpush1.msra.mxu0 %v1841
      %1959 = vmatprep.subr.mxu0 0.0
      %1960 = vmatpush1.msra.mxu0 %v1843
      %1961 = vmatprep.subr.mxu0 0.0
      %1962 = vmatpush1.msra.mxu0 %v1845
      %1963 = vmatprep.subr.mxu0 0.0
      %1964 = vmatpush1.msra.mxu0 %v1847
      %1965 = vmatprep.subr.mxu0 0.0
      %1966 = vmatpush1.msra.mxu0 %v1849
      %1967 = vmatprep.subr.mxu0 0.0
      %1968 = vmatpush1.msra.mxu0 %v1851
      %1969 = vmatprep.subr.mxu0 0.0
      %1970 = vmatpush1.msra.mxu0 %v1853
      %1971 = vmatprep.subr.mxu0 0.0
      %1972 = vmatpush1.msra.mxu0 %v1855
      %1973 = vmatprep.subr.mxu0 0.0
      %1974 = vmatpush1.msra.mxu0 %v1857
      %1975 = vmatprep.subr.mxu0 0.0
      %1976 = vmatpush1.msra.mxu0 %v1859
      %1977 = vmatprep.subr.mxu0 0.0
      %1978 = vmatpush1.msra.mxu0 %v1861
      %1979 = vmatprep.subr.mxu0 0.0
      %1980 = vmatpush1.msra.mxu0 %v1863
      %1981 = vmatprep.subr.mxu0 0.0
      %1982 = vmatpush1.msra.mxu0 %v1865
      %1983 = vmatprep.subr.mxu0 0.0
      %1984 = vmatpush1.msra.mxu0 %v1867
      %1985 = vmatprep.subr.mxu0 0.0
      %1986 = vmatpush1.msra.mxu0 %v1869
      %1987 = vmatprep.subr.mxu0 0.0
      %1988 = vmatpush1.msra.mxu0 %v1871
      %1989 = vmatprep.subr.mxu0 0.0
      %1990 = vmatpush1.msra.mxu0 %v1873
      %1991 = vmatprep.subr.mxu0 0.0
      %1992 = vmatpush1.msra.mxu0 %v1875
      %1993 = vmatprep.subr.mxu0 0.0
      %1994 = vmatpush1.msra.mxu0 %v1877
      %1995 = vmatprep.subr.mxu0 0.0
      %1996 = vmatpush1.msra.mxu0 %v1879
      %1997 = vmatprep.mubr.f32.mxu0 %v1918
      %1998 = vmatmul.mubr.f32.gmra.mrb[0].mxu0 %v1917
      %v1999 = vpop.f32.mrb[0].mxu0
      %v2000 = vadd.f32 0.0, %v1999
      %v2001 = vpop.f32.mrb[0].mxu0
      %2002 = vmatprep.mubr.f32.mxu0 %v1920
      %2003 = vmatmul.mubr.f32.gmra.mrb[0].mxu0 %v1919
      %v2004 = vpop.f32.mrb[0].mxu0
      %v2005 = vadd.f32 0.0, %v2004
      %v2006 = vpop.f32.mrb[0].mxu0
      %2007 = vmatprep.mubr.f32.mxu0 %v1922
      %2008 = vmatmul.mubr.f32.gmra.mrb[0].mxu0 %v1921
      %v2009 = vpop.f32.mrb[0].mxu0
      %v2010 = vadd.f32 0.0, %v2009
      %v2011 = vpop.f32.mrb[0].mxu0
      %2012 = vmatprep.mubr.f32.mxu0 %v1924
      %2013 = vmatmul.mubr.f32.gmra.mrb[0].mxu0 %v1923
      %v2014 = vpop.f32.mrb[0].mxu0
      %v2015 = vadd.f32 0.0, %v2014
      %v2016 = vpop.f32.mrb[0].mxu0
      %2017 = vmatprep.mubr.f32.mxu0 %v1926
      %2018 = vmatmul.mubr.f32.gmra.mrb[0].mxu0 %v1925
      %v2019 = vpop.f32.mrb[0].mxu0
      %v2020 = vadd.f32 0.0, %v2019
      %v2021 = vpop.f32.mrb[0].mxu0
      %2022 = vmatprep.mubr.f32.mxu0 %v1928
      %2023 = vmatmul.mubr.f32.gmra.mrb[0].mxu0 %v1927
      %v2024 = vpop.f32.mrb[0].mxu0
      %v2025 = vadd.f32 0.0, %v2024
      %v2026 = vpop.f32.mrb[0].mxu0
      %2027 = vmatprep.mubr.f32.mxu0 %v1930
      %2028 = vmatmul.mubr.f32.gmra.mrb[0].mxu0 %v1929
      %v2029 = vpop.f32.mrb[0].mxu0
      %v2030 = vadd.f32 0.0, %v2029
      %v2031 = vpop.f32.mrb[0].mxu0
      %2032 = vmatprep.mubr.f32.mxu0 %v1932
      %2033 = vmatmul.mubr.f32.gmra.mrb[0].mxu0 %v1931
      %v2034 = vpop.f32.mrb[0].mxu0
      %v2035 = vadd.f32 0.0, %v2034
      %v2036 = vpop.f32.mrb[0].mxu0
      %2037 = vdwg.mxu0
      %v2038 = vrcp.pop %v1916
      %v2039 = vmul.f32 %v2000, %v2038
      %v2040 = vmul.f32 %v2005, %v2038
      %v2041 = vmul.f32 %v2010, %v2038
      %v2042 = vmul.f32 %v2015, %v2038
      %v2043 = vmul.f32 %v2020, %v2038
      %v2044 = vmul.f32 %v2025, %v2038
      %v2045 = vmul.f32 %v2030, %v2038
      %v2046 = vmul.f32 %v2035, %v2038
      %2047 = vst [vmem:[#allocation4] sm:$0xff] %v2039
      %2048 = vst [vmem:[#allocation4 + $0x10] sm:$0xff] %v2040
      %2049 = vst [vmem:[#allocation4 + $0x20] sm:$0xff] %v2041
      %2050 = vst [vmem:[#allocation4 + $0x30] sm:$0xff] %v2042
      %2051 = vst [vmem:[#allocation4 + $0x40] sm:$0xff] %v2043
      %2052 = vst [vmem:[#allocation4 + $0x50] sm:$0xff] %v2044
      %2053 = vst [vmem:[#allocation4 + $0x60] sm:$0xff] %v2045
      %2054 = vst [vmem:[#allocation4 + $0x70] sm:$0xff] %v2046
      %v2055 = vld [vmem:[#allocation3] sm:$0xff]
      %v2056 = vld [vmem:[#allocation3 + $0x8] sm:$0xff]
      %v2057 = vld [vmem:[#allocation3 + $0x10] sm:$0xff]
      %v2058 = vld [vmem:[#allocation3 + $0x18] sm:$0xff]
      %v2059 = vld [vmem:[#allocation3 + $0x20] sm:$0xff]
      %v2060 = vld [vmem:[#allocation3 + $0x28] sm:$0xff]
      %v2061 = vld [vmem:[#allocation3 + $0x30] sm:$0xff]
      %v2062 = vld [vmem:[#allocation3 + $0x38] sm:$0xff]
      %v2063 = vld [vmem:[#allocation3 + $0x40] sm:$0xff]
      %v2064 = vld [vmem:[#allocation3 + $0x48] sm:$0xff]
      %v2065 = vld [vmem:[#allocation3 + $0x50] sm:$0xff]
      %v2066 = vld [vmem:[#allocation3 + $0x58] sm:$0xff]
      %v2067 = vld [vmem:[#allocation3 + $0x60] sm:$0xff]
      %v2068 = vld [vmem:[#allocation3 + $0x68] sm:$0xff]
      %v2069 = vld [vmem:[#allocation3 + $0x70] sm:$0xff]
      %v2070 = vld [vmem:[#allocation3 + $0x78] sm:$0xff]
      %v2071 = vld [vmem:[#allocation2 + $0x8] sm:$0xff]
      %v2072 = vld [vmem:[#allocation2 + $0x18] sm:$0xff]
      %v2073 = vld [vmem:[#allocation2 + $0x28] sm:$0xff]
      %v2074 = vld [vmem:[#allocation2 + $0x38] sm:$0xff]
      %v2075 = vld [vmem:[#allocation2 + $0x48] sm:$0xff]
      %v2076 = vld [vmem:[#allocation2 + $0x58] sm:$0xff]
      %v2077 = vld [vmem:[#allocation2 + $0x68] sm:$0xff]
      %v2078 = vld [vmem:[#allocation2 + $0x78] sm:$0xff]
      %2079 = vxpose.xlu0.b32.start [1/16] %v2055, 128
      %2080 = vxpose.xlu0.b32.cont [2/16] %v2057, 128
      %2081 = vxpose.xlu0.b32.cont [3/16] %v2059, 128
      %2082 = vxpose.xlu0.b32.cont [4/16] %v2061, 128
      %2083 = vxpose.xlu0.b32.cont [5/16] %v2063, 128
      %2084 = vxpose.xlu0.b32.cont [6/16] %v2065, 128
      %2085 = vxpose.xlu0.b32.cont [7/16] %v2067, 128
      %2086 = vxpose.xlu0.b32.cont [8/16] %v2069, 128
      %2087 = vxpose.xlu0.b32.cont [9/16] 0.0, 128
      %2088 = vxpose.xlu0.b32.cont [10/16] 0.0, 128
      %2089 = vxpose.xlu0.b32.cont [11/16] 0.0, 128
      %2090 = vxpose.xlu0.b32.cont [12/16] 0.0, 128
      %2091 = vxpose.xlu0.b32.cont [13/16] 0.0, 128
      %2092 = vxpose.xlu0.b32.cont [14/16] 0.0, 128
      %2093 = vxpose.xlu0.b32.cont [15/16] 0.0, 128
      %2094 = vxpose.xlu0.b32.end [16/16] 0.0, 128
      %v2095 = vpop.trf.xlu0
      %v2096 = vpop.trf.xlu0
      %v2097 = vpop.trf.xlu0
      %v2098 = vpop.trf.xlu0
      %v2099 = vpop.trf.xlu0
      %v2100 = vpop.trf.xlu0
      %v2101 = vpop.trf.xlu0
      %v2102 = vpop.trf.xlu0
      %v2103 = vpop.trf.xlu0
      %v2104 = vpop.trf.xlu0
      %v2105 = vpop.trf.xlu0
      %v2106 = vpop.trf.xlu0
      %v2107 = vpop.trf.xlu0
      %v2108 = vpop.trf.xlu0
      %v2109 = vpop.trf.xlu0
      %v2110 = vpop.trf.xlu0
      %2111 = vxpose.xlu0.b32.start [1/16] %v2056, 128
      %2112 = vxpose.xlu0.b32.cont [2/16] %v2058, 128
      %2113 = vxpose.xlu0.b32.cont [3/16] %v2060, 128
      %2114 = vxpose.xlu0.b32.cont [4/16] %v2062, 128
      %2115 = vxpose.xlu0.b32.cont [5/16] %v2064, 128
      %2116 = vxpose.xlu0.b32.cont [6/16] %v2066, 128
      %2117 = vxpose.xlu0.b32.cont [7/16] %v2068, 128
      %2118 = vxpose.xlu0.b32.cont [8/16] %v2070, 128
      %2119 = vxpose.xlu0.b32.cont [9/16] 0.0, 128
      %2120 = vxpose.xlu0.b32.cont [10/16] 0.0, 128
      %2121 = vxpose.xlu0.b32.cont [11/16] 0.0, 128
      %2122 = vxpose.xlu0.b32.cont [12/16] 0.0, 128
      %2123 = vxpose.xlu0.b32.cont [13/16] 0.0, 128
      %2124 = vxpose.xlu0.b32.cont [14/16] 0.0, 128
      %2125 = vxpose.xlu0.b32.cont [15/16] 0.0, 128
      %2126 = vxpose.xlu0.b32.end [16/16] 0.0, 128
      %v2127 = vpop.trf.xlu0
      %v2128 = vpop.trf.xlu0
      %v2129 = vpop.trf.xlu0
      %v2130 = vpop.trf.xlu0
      %v2131 = vpop.trf.xlu0
      %v2132 = vpop.trf.xlu0
      %v2133 = vpop.trf.xlu0
      %v2134 = vpop.trf.xlu0
      %v2135 = vpop.trf.xlu0
      %v2136 = vpop.trf.xlu0
      %v2137 = vpop.trf.xlu0
      %v2138 = vpop.trf.xlu0
      %v2139 = vpop.trf.xlu0
      %v2140 = vpop.trf.xlu0
      %v2141 = vpop.trf.xlu0
      %v2142 = vpop.trf.xlu0
      %v2144 = vsel %vm1425, %v2095, 0
      %v2147 = vsel %vm1425, %v2096, 0
      %v2150 = vsel %vm1425, %v2097, 0
      %v2153 = vsel %vm1425, %v2098, 0
      %v2156 = vsel %vm1425, %v2099, 0
      %v2159 = vsel %vm1425, %v2100, 0
      %v2162 = vsel %vm1425, %v2101, 0
      %v2165 = vsel %vm1425, %v2102, 0
      %v2168 = vsel %vm1425, %v2103, 0
      %v2171 = vsel %vm1425, %v2104, 0
      %v2174 = vsel %vm1425, %v2105, 0
      %v2177 = vsel %vm1425, %v2106, 0
      %v2180 = vsel %vm1425, %v2107, 0
      %v2183 = vsel %vm1425, %v2108, 0
      %v2186 = vsel %vm1425, %v2109, 0
      %v2189 = vsel %vm1425, %v2110, 0
      %v2192 = vsel %vm1425, %v2127, 0
      %v2195 = vsel %vm1425, %v2128, 0
      %v2198 = vsel %vm1425, %v2129, 0
      %v2201 = vsel %vm1425, %v2130, 0
      %v2204 = vsel %vm1425, %v2131, 0
      %v2207 = vsel %vm1425, %v2132, 0
      %v2210 = vsel %vm1425, %v2133, 0
      %v2213 = vsel %vm1425, %v2134, 0
      %v2216 = vsel %vm1425, %v2135, 0
      %v2219 = vsel %vm1425, %v2136, 0
      %v2222 = vsel %vm1425, %v2137, 0
      %v2225 = vsel %vm1425, %v2138, 0
      %v2228 = vsel %vm1425, %v2139, 0
      %v2231 = vsel %vm1425, %v2140, 0
      %v2234 = vsel %vm1425, %v2141, 0
      %v2237 = vsel %vm1425, %v2142, 0
      %2239 = vmatprep.subr.mxu0 0.0
      %2240 = vmatpush1.msra.mxu0 %v2071
      %2241 = vmatprep.subr.mxu0 0.0
      %2242 = vmatpush1.msra.mxu0 %v2072
      %2243 = vmatprep.subr.mxu0 0.0
      %2244 = vmatpush1.msra.mxu0 %v2073
      %2245 = vmatprep.subr.mxu0 0.0
      %2246 = vmatpush1.msra.mxu0 %v2074
      %2247 = vmatprep.subr.mxu0 0.0
      %2248 = vmatpush1.msra.mxu0 %v2075
      %2249 = vmatprep.subr.mxu0 0.0
      %2250 = vmatpush1.msra.mxu0 %v2076
      %2251 = vmatprep.subr.mxu0 0.0
      %2252 = vmatpush1.msra.mxu0 %v2077
      %2253 = vmatprep.subr.mxu0 0.0
      %2254 = vmatpush1.msra.mxu0 %v2078
      %2255 = vmatprep.subr.mxu0 0.0
      %2256 = vmatpush1.msra.mxu0 0.0
      %2257 = vmatprep.subr.mxu0 0.0
      %2258 = vmatpush1.msra.mxu0 0.0
      %2259 = vmatprep.subr.mxu0 0.0
      %2260 = vmatpush1.msra.mxu0 0.0
      %2261 = vmatprep.subr.mxu0 0.0
      %2262 = vmatpush1.msra.mxu0 0.0
      %2263 = vmatprep.subr.mxu0 0.0
      %2264 = vmatpush1.msra.mxu0 0.0
      %2265 = vmatprep.subr.mxu0 0.0
      %2266 = vmatpush1.msra.mxu0 0.0
      %2267 = vmatprep.subr.mxu0 0.0
      %2268 = vmatpush1.msra.mxu0 0.0
      %2269 = vmatprep.subr.mxu0 0.0
      %2270 = vmatpush1.msra.mxu0 0.0
      %2271 = vmatprep.subr.mxu0 0.0
      %2272 = vmatpush1.msra.mxu0 0.0
      %2273 = vmatprep.subr.mxu0 0.0
      %2274 = vmatpush1.msra.mxu0 0.0
      %2275 = vmatprep.subr.mxu0 0.0
      %2276 = vmatpush1.msra.mxu0 0.0
      %2277 = vmatprep.subr.mxu0 0.0
      %2278 = vmatpush1.msra.mxu0 0.0
      %2279 = vmatprep.subr.mxu0 0.0
      %2280 = vmatpush1.msra.mxu0 0.0
      %2281 = vmatprep.subr.mxu0 0.0
      %2282 = vmatpush1.msra.mxu0 0.0
      %2283 = vmatprep.subr.mxu0 0.0
      %2284 = vmatpush1.msra.mxu0 0.0
      %2285 = vmatprep.subr.mxu0 0.0
      %2286 = vmatpush1.msra.mxu0 0.0
      %2287 = vmatprep.subr.mxu0 0.0
      %2288 = vmatpush1.msra.mxu0 0.0
      %2289 = vmatprep.subr.mxu0 0.0
      %2290 = vmatpush1.msra.mxu0 0.0
      %2291 = vmatprep.subr.mxu0 0.0
      %2292 = vmatpush1.msra.mxu0 0.0
      %2293 = vmatprep.subr.mxu0 0.0
      %2294 = vmatpush1.msra.mxu0 0.0
      %2295 = vmatprep.subr.mxu0 0.0
      %2296 = vmatpush1.msra.mxu0 0.0
      %2297 = vmatprep.subr.mxu0 0.0
      %2298 = vmatpush1.msra.mxu0 0.0
      %2299 = vmatprep.subr.mxu0 0.0
      %2300 = vmatpush1.msra.mxu0 0.0
      %2301 = vmatprep.subr.mxu0 0.0
      %2302 = vmatpush1.msra.mxu0 0.0
      %2303 = vmatprep.mubr.f32.mxu0 0.0
      %2304 = vmatmul.mubr.f32.gmra.mrb[0].mxu0 %v2144
      %v2305 = vpop.f32.mrb[0].mxu0
      %v2306 = vadd.f32 0.0, %v2305
      %v2307 = vpop.f32.mrb[0].mxu0
      %2308 = vmatprep.mubr.f32.mxu0 0.0
      %2309 = vmatmul.mubr.f32.gmra.mrb[0].mxu0 %v2147
      %v2310 = vpop.f32.mrb[0].mxu0
      %v2311 = vadd.f32 0.0, %v2310
      %v2312 = vpop.f32.mrb[0].mxu0
      %2313 = vmatprep.mubr.f32.mxu0 0.0
      %2314 = vmatmul.mubr.f32.gmra.mrb[0].mxu0 %v2150
      %v2315 = vpop.f32.mrb[0].mxu0
      %v2316 = vadd.f32 0.0, %v2315
      %v2317 = vpop.f32.mrb[0].mxu0
      %2318 = vmatprep.mubr.f32.mxu0 0.0
      %2319 = vmatmul.mubr.f32.gmra.mrb[0].mxu0 %v2153
      %v2320 = vpop.f32.mrb[0].mxu0
      %v2321 = vadd.f32 0.0, %v2320
      %v2322 = vpop.f32.mrb[0].mxu0
      %2323 = vmatprep.mubr.f32.mxu0 0.0
      %2324 = vmatmul.mubr.f32.gmra.mrb[0].mxu0 %v2156
      %v2325 = vpop.f32.mrb[0].mxu0
      %v2326 = vadd.f32 0.0, %v2325
      %v2327 = vpop.f32.mrb[0].mxu0
      %2328 = vmatprep.mubr.f32.mxu0 0.0
      %2329 = vmatmul.mubr.f32.gmra.mrb[0].mxu0 %v2159
      %v2330 = vpop.f32.mrb[0].mxu0
      %v2331 = vadd.f32 0.0, %v2330
      %v2332 = vpop.f32.mrb[0].mxu0
      %2333 = vmatprep.mubr.f32.mxu0 0.0
      %2334 = vmatmul.mubr.f32.gmra.mrb[0].mxu0 %v2162
      %v2335 = vpop.f32.mrb[0].mxu0
      %v2336 = vadd.f32 0.0, %v2335
      %v2337 = vpop.f32.mrb[0].mxu0
      %2338 = vmatprep.mubr.f32.mxu0 0.0
      %2339 = vmatmul.mubr.f32.gmra.mrb[0].mxu0 %v2165
      %v2340 = vpop.f32.mrb[0].mxu0
      %v2341 = vadd.f32 0.0, %v2340
      %v2342 = vpop.f32.mrb[0].mxu0
      %2343 = vmatprep.mubr.f32.mxu0 0.0
      %2344 = vmatmul.mubr.f32.gmra.mrb[0].mxu0 %v2168
      %v2345 = vpop.f32.mrb[0].mxu0
      %v2346 = vadd.f32 0.0, %v2345
      %v2347 = vpop.f32.mrb[0].mxu0
      %2348 = vmatprep.mubr.f32.mxu0 0.0
      %2349 = vmatmul.mubr.f32.gmra.mrb[0].mxu0 %v2171
      %v2350 = vpop.f32.mrb[0].mxu0
      %v2351 = vadd.f32 0.0, %v2350
      %v2352 = vpop.f32.mrb[0].mxu0
      %2353 = vmatprep.mubr.f32.mxu0 0.0
      %2354 = vmatmul.mubr.f32.gmra.mrb[0].mxu0 %v2174
      %v2355 = vpop.f32.mrb[0].mxu0
      %v2356 = vadd.f32 0.0, %v2355
      %v2357 = vpop.f32.mrb[0].mxu0
      %2358 = vmatprep.mubr.f32.mxu0 0.0
      %2359 = vmatmul.mubr.f32.gmra.mrb[0].mxu0 %v2177
      %v2360 = vpop.f32.mrb[0].mxu0
      %v2361 = vadd.f32 0.0, %v2360
      %v2362 = vpop.f32.mrb[0].mxu0
      %2363 = vmatprep.mubr.f32.mxu0 0.0
      %2364 = vmatmul.mubr.f32.gmra.mrb[0].mxu0 %v2180
      %v2365 = vpop.f32.mrb[0].mxu0
      %v2366 = vadd.f32 0.0, %v2365
      %v2367 = vpop.f32.mrb[0].mxu0
      %2368 = vmatprep.mubr.f32.mxu0 0.0
      %2369 = vmatmul.mubr.f32.gmra.mrb[0].mxu0 %v2183
      %v2370 = vpop.f32.mrb[0].mxu0
      %v2371 = vadd.f32 0.0, %v2370
      %v2372 = vpop.f32.mrb[0].mxu0
      %2373 = vmatprep.mubr.f32.mxu0 0.0
      %2374 = vmatmul.mubr.f32.gmra.mrb[0].mxu0 %v2186
      %v2375 = vpop.f32.mrb[0].mxu0
      %v2376 = vadd.f32 0.0, %v2375
      %v2377 = vpop.f32.mrb[0].mxu0
      %2378 = vmatprep.mubr.f32.mxu0 0.0
      %2379 = vmatmul.mubr.f32.gmra.mrb[0].mxu0 %v2189
      %v2380 = vpop.f32.mrb[0].mxu0
      %v2381 = vadd.f32 0.0, %v2380
      %v2382 = vpop.f32.mrb[0].mxu0
      %2383 = vmatprep.mubr.f32.mxu0 0.0
      %2384 = vmatmul.mubr.f32.gmra.mrb[0].mxu0 %v2192
      %v2385 = vpop.f32.mrb[0].mxu0
      %v2386 = vadd.f32 0.0, %v2385
      %v2387 = vpop.f32.mrb[0].mxu0
      %2388 = vmatprep.mubr.f32.mxu0 0.0
      %2389 = vmatmul.mubr.f32.gmra.mrb[0].mxu0 %v2195
      %v2390 = vpop.f32.mrb[0].mxu0
      %v2391 = vadd.f32 0.0, %v2390
      %v2392 = vpop.f32.mrb[0].mxu0
      %2393 = vmatprep.mubr.f32.mxu0 0.0
      %2394 = vmatmul.mubr.f32.gmra.mrb[0].mxu0 %v2198
      %v2395 = vpop.f32.mrb[0].mxu0
      %v2396 = vadd.f32 0.0, %v2395
      %v2397 = vpop.f32.mrb[0].mxu0
      %2398 = vmatprep.mubr.f32.mxu0 0.0
      %2399 = vmatmul.mubr.f32.gmra.mrb[0].mxu0 %v2201
      %v2400 = vpop.f32.mrb[0].mxu0
      %v2401 = vadd.f32 0.0, %v2400
      %v2402 = vpop.f32.mrb[0].mxu0
      %2403 = vmatprep.mubr.f32.mxu0 0.0
      %2404 = vmatmul.mubr.f32.gmra.mrb[0].mxu0 %v2204
      %v2405 = vpop.f32.mrb[0].mxu0
      %v2406 = vadd.f32 0.0, %v2405
      %v2407 = vpop.f32.mrb[0].mxu0
      %2408 = vmatprep.mubr.f32.mxu0 0.0
      %2409 = vmatmul.mubr.f32.gmra.mrb[0].mxu0 %v2207
      %v2410 = vpop.f32.mrb[0].mxu0
      %v2411 = vadd.f32 0.0, %v2410
      %v2412 = vpop.f32.mrb[0].mxu0
      %2413 = vmatprep.mubr.f32.mxu0 0.0
      %2414 = vmatmul.mubr.f32.gmra.mrb[0].mxu0 %v2210
      %v2415 = vpop.f32.mrb[0].mxu0
      %v2416 = vadd.f32 0.0, %v2415
      %v2417 = vpop.f32.mrb[0].mxu0
      %2418 = vmatprep.mubr.f32.mxu0 0.0
      %2419 = vmatmul.mubr.f32.gmra.mrb[0].mxu0 %v2213
      %v2420 = vpop.f32.mrb[0].mxu0
      %v2421 = vadd.f32 0.0, %v2420
      %v2422 = vpop.f32.mrb[0].mxu0
      %2423 = vmatprep.mubr.f32.mxu0 0.0
      %2424 = vmatmul.mubr.f32.gmra.mrb[0].mxu0 %v2216
      %v2425 = vpop.f32.mrb[0].mxu0
      %v2426 = vadd.f32 0.0, %v2425
      %v2427 = vpop.f32.mrb[0].mxu0
      %2428 = vmatprep.mubr.f32.mxu0 0.0
      %2429 = vmatmul.mubr.f32.gmra.mrb[0].mxu0 %v2219
      %v2430 = vpop.f32.mrb[0].mxu0
      %v2431 = vadd.f32 0.0, %v2430
      %v2432 = vpop.f32.mrb[0].mxu0
      %2433 = vmatprep.mubr.f32.mxu0 0.0
      %2434 = vmatmul.mubr.f32.gmra.mrb[0].mxu0 %v2222
      %v2435 = vpop.f32.mrb[0].mxu0
      %v2436 = vadd.f32 0.0, %v2435
      %v2437 = vpop.f32.mrb[0].mxu0
      %2438 = vmatprep.mubr.f32.mxu0 0.0
      %2439 = vmatmul.mubr.f32.gmra.mrb[0].mxu0 %v2225
      %v2440 = vpop.f32.mrb[0].mxu0
      %v2441 = vadd.f32 0.0, %v2440
      %v2442 = vpop.f32.mrb[0].mxu0
      %2443 = vmatprep.mubr.f32.mxu0 0.0
      %2444 = vmatmul.mubr.f32.gmra.mrb[0].mxu0 %v2228
      %v2445 = vpop.f32.mrb[0].mxu0
      %v2446 = vadd.f32 0.0, %v2445
      %v2447 = vpop.f32.mrb[0].mxu0
      %2448 = vmatprep.mubr.f32.mxu0 0.0
      %2449 = vmatmul.mubr.f32.gmra.mrb[0].mxu0 %v2231
      %v2450 = vpop.f32.mrb[0].mxu0
      %v2451 = vadd.f32 0.0, %v2450
      %v2452 = vpop.f32.mrb[0].mxu0
      %2453 = vmatprep.mubr.f32.mxu0 0.0
      %2454 = vmatmul.mubr.f32.gmra.mrb[0].mxu0 %v2234
      %v2455 = vpop.f32.mrb[0].mxu0
      %v2456 = vadd.f32 0.0, %v2455
      %v2457 = vpop.f32.mrb[0].mxu0
      %2458 = vmatprep.mubr.f32.mxu0 0.0
      %2459 = vmatmul.mubr.f32.gmra.mrb[0].mxu0 %v2237
      %v2460 = vpop.f32.mrb[0].mxu0
      %v2461 = vadd.f32 0.0, %v2460
      %v2462 = vpop.f32.mrb[0].mxu0
      %2463 = vdwg.mxu0
      %v2464 = vmax.f32 %v2306, %v2326
      %v2465 = vmax.f32 %v2311, %v2331
      %v2466 = vmax.f32 %v2316, %v2336
      %v2467 = vmax.f32 %v2321, %v2341
      %v2468 = vmax.f32 %v2464, %v2346
      %v2469 = vmax.f32 %v2465, %v2351
      %v2470 = vmax.f32 %v2466, %v2356
      %v2471 = vmax.f32 %v2467, %v2361
      %v2472 = vmax.f32 %v2468, %v2366
      %v2473 = vmax.f32 %v2469, %v2371
      %v2474 = vmax.f32 %v2470, %v2376
      %v2475 = vmax.f32 %v2471, %v2381
      %v2476 = vmax.f32 %v2472, %v2386
      %v2477 = vmax.f32 %v2473, %v2391
      %v2478 = vmax.f32 %v2474, %v2396
      %v2479 = vmax.f32 %v2475, %v2401
      %v2480 = vmax.f32 %v2476, %v2406
      %v2481 = vmax.f32 %v2477, %v2411
      %v2482 = vmax.f32 %v2478, %v2416
      %v2483 = vmax.f32 %v2479, %v2421
      %v2484 = vmax.f32 %v2480, %v2426
      %v2485 = vmax.f32 %v2481, %v2431
      %v2486 = vmax.f32 %v2482, %v2436
      %v2487 = vmax.f32 %v2483, %v2441
      %v2488 = vmax.f32 %v2484, %v2446
      %v2489 = vmax.f32 %v2485, %v2451
      %v2490 = vmax.f32 %v2486, %v2456
      %v2491 = vmax.f32 %v2487, %v2461
      %v2492 = vmax.f32 %v2488, %v2489
      %v2493 = vmax.f32 %v2490, %v2491
      %v2494 = vmax.f32 %v2492, %v2493
      %v2495 = vrot.slane %v2494, 4
      %v2496 = vmax.f32 %v2494, %v2495
      %v2497 = vrot.slane %v2496, 2
      %v2498 = vmax.f32 %v2496, %v2497
      %v2499 = vrot.slane %v2498, 1
      %v2500 = vmax.f32 %v2498, %v2499
      %v2501 = vsub.f32 %v2306, %v2500
      %v2502 = vsub.f32 %v2311, %v2500
      %v2503 = vsub.f32 %v2316, %v2500
      %v2504 = vsub.f32 %v2321, %v2500
      %v2505 = vsub.f32 %v2326, %v2500
      %v2506 = vsub.f32 %v2331, %v2500
      %v2507 = vsub.f32 %v2336, %v2500
      %v2508 = vsub.f32 %v2341, %v2500
      %v2509 = vsub.f32 %v2346, %v2500
      %v2510 = vsub.f32 %v2351, %v2500
      %v2511 = vsub.f32 %v2356, %v2500
      %v2512 = vsub.f32 %v2361, %v2500
      %v2513 = vsub.f32 %v2366, %v2500
      %v2514 = vsub.f32 %v2371, %v2500
      %v2515 = vsub.f32 %v2376, %v2500
      %v2516 = vsub.f32 %v2381, %v2500
      %v2517 = vsub.f32 %v2386, %v2500
      %v2518 = vsub.f32 %v2391, %v2500
      %v2519 = vsub.f32 %v2396, %v2500
      %v2520 = vsub.f32 %v2401, %v2500
      %v2521 = vsub.f32 %v2406, %v2500
      %v2522 = vsub.f32 %v2411, %v2500
      %v2523 = vsub.f32 %v2416, %v2500
      %v2524 = vsub.f32 %v2421, %v2500
      %v2525 = vsub.f32 %v2426, %v2500
      %v2526 = vsub.f32 %v2431, %v2500
      %v2527 = vsub.f32 %v2436, %v2500
      %v2528 = vsub.f32 %v2441, %v2500
      %v2529 = vsub.f32 %v2446, %v2500
      %v2530 = vsub.f32 %v2451, %v2500
      %v2531 = vsub.f32 %v2456, %v2500
      %v2532 = vsub.f32 %v2461, %v2500
      %v2533 = vmul.f32 %v2501, 1.442695
      %v2534 = vpow.pop %v2533
      %v2535 = vmul.f32 %v2502, 1.442695
      %v2536 = vpow.pop %v2535
      %v2537 = vmul.f32 %v2503, 1.442695
      %v2538 = vpow.pop %v2537
      %v2539 = vmul.f32 %v2504, 1.442695
      %v2540 = vpow.pop %v2539
      %v2541 = vmul.f32 %v2505, 1.442695
      %v2542 = vpow.pop %v2541
      %v2543 = vmul.f32 %v2506, 1.442695
      %v2544 = vpow.pop %v2543
      %v2545 = vmul.f32 %v2507, 1.442695
      %v2546 = vpow.pop %v2545
      %v2547 = vmul.f32 %v2508, 1.442695
      %v2548 = vpow.pop %v2547
      %v2549 = vmul.f32 %v2509, 1.442695
      %v2550 = vpow.pop %v2549
      %v2551 = vmul.f32 %v2510, 1.442695
      %v2552 = vpow.pop %v2551
      %v2553 = vmul.f32 %v2511, 1.442695
      %v2554 = vpow.pop %v2553
      %v2555 = vmul.f32 %v2512, 1.442695
      %v2556 = vpow.pop %v2555
      %v2557 = vmul.f32 %v2513, 1.442695
      %v2558 = vpow.pop %v2557
      %v2559 = vmul.f32 %v2514, 1.442695
      %v2560 = vpow.pop %v2559
      %v2561 = vmul.f32 %v2515, 1.442695
      %v2562 = vpow.pop %v2561
      %v2563 = vmul.f32 %v2516, 1.442695
      %v2564 = vpow.pop %v2563
      %v2565 = vmul.f32 %v2517, 1.442695
      %v2566 = vpow.pop %v2565
      %v2567 = vmul.f32 %v2518, 1.442695
      %v2568 = vpow.pop %v2567
      %v2569 = vmul.f32 %v2519, 1.442695
      %v2570 = vpow.pop %v2569
      %v2571 = vmul.f32 %v2520, 1.442695
      %v2572 = vpow.pop %v2571
      %v2573 = vmul.f32 %v2521, 1.442695
      %v2574 = vpow.pop %v2573
      %v2575 = vmul.f32 %v2522, 1.442695
      %v2576 = vpow.pop %v2575
      %v2577 = vmul.f32 %v2523, 1.442695
      %v2578 = vpow.pop %v2577
      %v2579 = vmul.f32 %v2524, 1.442695
      %v2580 = vpow.pop %v2579
      %v2581 = vmul.f32 %v2525, 1.442695
      %v2582 = vpow.pop %v2581
      %v2583 = vmul.f32 %v2526, 1.442695
      %v2584 = vpow.pop %v2583
      %v2585 = vmul.f32 %v2527, 1.442695
      %v2586 = vpow.pop %v2585
      %v2587 = vmul.f32 %v2528, 1.442695
      %v2588 = vpow.pop %v2587
      %v2589 = vmul.f32 %v2529, 1.442695
      %v2590 = vpow.pop %v2589
      %v2591 = vmul.f32 %v2530, 1.442695
      %v2592 = vpow.pop %v2591
      %v2593 = vmul.f32 %v2531, 1.442695
      %v2594 = vpow.pop %v2593
      %v2595 = vmul.f32 %v2532, 1.442695
      %v2596 = vpow.pop %v2595
      %v2597 = vadd.f32 %v2534, %v2536
      %v2598 = vadd.f32 %v2597, %v2538
      %v2599 = vadd.f32 %v2598, %v2540
      %v2600 = vadd.f32 %v2599, %v2542
      %v2601 = vadd.f32 %v2600, %v2544
      %v2602 = vadd.f32 %v2601, %v2546
      %v2603 = vadd.f32 %v2602, %v2548
      %v2604 = vadd.f32 %v2603, %v2550
      %v2605 = vadd.f32 %v2604, %v2552
      %v2606 = vadd.f32 %v2605, %v2554
      %v2607 = vadd.f32 %v2606, %v2556
      %v2608 = vadd.f32 %v2607, %v2558
      %v2609 = vadd.f32 %v2608, %v2560
      %v2610 = vadd.f32 %v2609, %v2562
      %v2611 = vadd.f32 %v2610, %v2564
      %v2612 = vadd.f32 %v2611, %v2566
      %v2613 = vadd.f32 %v2612, %v2568
      %v2614 = vadd.f32 %v2613, %v2570
      %v2615 = vadd.f32 %v2614, %v2572
      %v2616 = vadd.f32 %v2615, %v2574
      %v2617 = vadd.f32 %v2616, %v2576
      %v2618 = vadd.f32 %v2617, %v2578
      %v2619 = vadd.f32 %v2618, %v2580
      %v2620 = vadd.f32 %v2619, %v2582
      %v2621 = vadd.f32 %v2620, %v2584
      %v2622 = vadd.f32 %v2621, %v2586
      %v2623 = vadd.f32 %v2622, %v2588
      %v2624 = vadd.f32 %v2623, %v2590
      %v2625 = vadd.f32 %v2624, %v2592
      %v2626 = vadd.f32 %v2625, %v2594
      %v2627 = vadd.f32 %v2626, %v2596
      %v2628 = vrot.slane %v2627, 4
      %v2629 = vadd.f32 %v2627, %v2628
      %v2630 = vrot.slane %v2629, 2
      %v2631 = vadd.f32 %v2629, %v2630
      %v2632 = vrot.slane %v2631, 1
      %v2633 = vadd.f32 %v2631, %v2632
      %v2634 = vld [vmem:[#allocation3 + $0x100] sm:$0xff]
      %v2635 = vld [vmem:[#allocation3 + $0x108] sm:$0xff]
      %v2636 = vld [vmem:[#allocation3 + $0x110] sm:$0xff]
      %v2637 = vld [vmem:[#allocation3 + $0x118] sm:$0xff]
      %v2638 = vld [vmem:[#allocation3 + $0x120] sm:$0xff]
      %v2639 = vld [vmem:[#allocation3 + $0x128] sm:$0xff]
      %v2640 = vld [vmem:[#allocation3 + $0x130] sm:$0xff]
      %v2641 = vld [vmem:[#allocation3 + $0x138] sm:$0xff]
      %v2642 = vld [vmem:[#allocation3 + $0x140] sm:$0xff]
      %v2643 = vld [vmem:[#allocation3 + $0x148] sm:$0xff]
      %v2644 = vld [vmem:[#allocation3 + $0x150] sm:$0xff]
      %v2645 = vld [vmem:[#allocation3 + $0x158] sm:$0xff]
      %v2646 = vld [vmem:[#allocation3 + $0x160] sm:$0xff]
      %v2647 = vld [vmem:[#allocation3 + $0x168] sm:$0xff]
      %v2648 = vld [vmem:[#allocation3 + $0x170] sm:$0xff]
      %v2649 = vld [vmem:[#allocation3 + $0x178] sm:$0xff]
      %2650 = vmatprep.subr.mxu0 0.0
      %2651 = vmatpush1.msra.mxu0 %v2534
      %2652 = vmatprep.subr.mxu0 0.0
      %2653 = vmatpush1.msra.mxu0 %v2536
      %2654 = vmatprep.subr.mxu0 0.0
      %2655 = vmatpush1.msra.mxu0 %v2538
      %2656 = vmatprep.subr.mxu0 0.0
      %2657 = vmatpush1.msra.mxu0 %v2540
      %2658 = vmatprep.subr.mxu0 0.0
      %2659 = vmatpush1.msra.mxu0 %v2542
      %2660 = vmatprep.subr.mxu0 0.0
      %2661 = vmatpush1.msra.mxu0 %v2544
      %2662 = vmatprep.subr.mxu0 0.0
      %2663 = vmatpush1.msra.mxu0 %v2546
      %2664 = vmatprep.subr.mxu0 0.0
      %2665 = vmatpush1.msra.mxu0 %v2548
      %2666 = vmatprep.subr.mxu0 0.0
      %2667 = vmatpush1.msra.mxu0 %v2550
      %2668 = vmatprep.subr.mxu0 0.0
      %2669 = vmatpush1.msra.mxu0 %v2552
      %2670 = vmatprep.subr.mxu0 0.0
      %2671 = vmatpush1.msra.mxu0 %v2554
      %2672 = vmatprep.subr.mxu0 0.0
      %2673 = vmatpush1.msra.mxu0 %v2556
      %2674 = vmatprep.subr.mxu0 0.0
      %2675 = vmatpush1.msra.mxu0 %v2558
      %2676 = vmatprep.subr.mxu0 0.0
      %2677 = vmatpush1.msra.mxu0 %v2560
      %2678 = vmatprep.subr.mxu0 0.0
      %2679 = vmatpush1.msra.mxu0 %v2562
      %2680 = vmatprep.subr.mxu0 0.0
      %2681 = vmatpush1.msra.mxu0 %v2564
      %2682 = vmatprep.subr.mxu0 0.0
      %2683 = vmatpush1.msra.mxu0 %v2566
      %2684 = vmatprep.subr.mxu0 0.0
      %2685 = vmatpush1.msra.mxu0 %v2568
      %2686 = vmatprep.subr.mxu0 0.0
      %2687 = vmatpush1.msra.mxu0 %v2570
      %2688 = vmatprep.subr.mxu0 0.0
      %2689 = vmatpush1.msra.mxu0 %v2572
      %2690 = vmatprep.subr.mxu0 0.0
      %2691 = vmatpush1.msra.mxu0 %v2574
      %2692 = vmatprep.subr.mxu0 0.0
      %2693 = vmatpush1.msra.mxu0 %v2576
      %2694 = vmatprep.subr.mxu0 0.0
      %2695 = vmatpush1.msra.mxu0 %v2578
      %2696 = vmatprep.subr.mxu0 0.0
      %2697 = vmatpush1.msra.mxu0 %v2580
      %2698 = vmatprep.subr.mxu0 0.0
      %2699 = vmatpush1.msra.mxu0 %v2582
      %2700 = vmatprep.subr.mxu0 0.0
      %2701 = vmatpush1.msra.mxu0 %v2584
      %2702 = vmatprep.subr.mxu0 0.0
      %2703 = vmatpush1.msra.mxu0 %v2586
      %2704 = vmatprep.subr.mxu0 0.0
      %2705 = vmatpush1.msra.mxu0 %v2588
      %2706 = vmatprep.subr.mxu0 0.0
      %2707 = vmatpush1.msra.mxu0 %v2590
      %2708 = vmatprep.subr.mxu0 0.0
      %2709 = vmatpush1.msra.mxu0 %v2592
      %2710 = vmatprep.subr.mxu0 0.0
      %2711 = vmatpush1.msra.mxu0 %v2594
      %2712 = vmatprep.subr.mxu0 0.0
      %2713 = vmatpush1.msra.mxu0 %v2596
      %2714 = vmatprep.mubr.f32.mxu0 %v2635
      %2715 = vmatmul.mubr.f32.gmra.mrb[0].mxu0 %v2634
      %v2716 = vpop.f32.mrb[0].mxu0
      %v2717 = vadd.f32 0.0, %v2716
      %v2718 = vpop.f32.mrb[0].mxu0
      %2719 = vmatprep.mubr.f32.mxu0 %v2637
      %2720 = vmatmul.mubr.f32.gmra.mrb[0].mxu0 %v2636
      %v2721 = vpop.f32.mrb[0].mxu0
      %v2722 = vadd.f32 0.0, %v2721
      %v2723 = vpop.f32.mrb[0].mxu0
      %2724 = vmatprep.mubr.f32.mxu0 %v2639
      %2725 = vmatmul.mubr.f32.gmra.mrb[0].mxu0 %v2638
      %v2726 = vpop.f32.mrb[0].mxu0
      %v2727 = vadd.f32 0.0, %v2726
      %v2728 = vpop.f32.mrb[0].mxu0
      %2729 = vmatprep.mubr.f32.mxu0 %v2641
      %2730 = vmatmul.mubr.f32.gmra.mrb[0].mxu0 %v2640
      %v2731 = vpop.f32.mrb[0].mxu0
      %v2732 = vadd.f32 0.0, %v2731
      %v2733 = vpop.f32.mrb[0].mxu0
      %2734 = vmatprep.mubr.f32.mxu0 %v2643
      %2735 = vmatmul.mubr.f32.gmra.mrb[0].mxu0 %v2642
      %v2736 = vpop.f32.mrb[0].mxu0
      %v2737 = vadd.f32 0.0, %v2736
      %v2738 = vpop.f32.mrb[0].mxu0
      %2739 = vmatprep.mubr.f32.mxu0 %v2645
      %2740 = vmatmul.mubr.f32.gmra.mrb[0].mxu0 %v2644
      %v2741 = vpop.f32.mrb[0].mxu0
      %v2742 = vadd.f32 0.0, %v2741
      %v2743 = vpop.f32.mrb[0].mxu0
      %2744 = vmatprep.mubr.f32.mxu0 %v2647
      %2745 = vmatmul.mubr.f32.gmra.mrb[0].mxu0 %v2646
      %v2746 = vpop.f32.mrb[0].mxu0
      %v2747 = vadd.f32 0.0, %v2746
      %v2748 = vpop.f32.mrb[0].mxu0
      %2749 = vmatprep.mubr.f32.mxu0 %v2649
      %2750 = vmatmul.mubr.f32.gmra.mrb[0].mxu0 %v2648
      %v2751 = vpop.f32.mrb[0].mxu0
      %v2752 = vadd.f32 0.0, %v2751
      %v2753 = vpop.f32.mrb[0].mxu0
      %2754 = vdwg.mxu0
      %v2755 = vrcp.pop %v2633
      %v2756 = vmul.f32 %v2717, %v2755
      %v2757 = vmul.f32 %v2722, %v2755
      %v2758 = vmul.f32 %v2727, %v2755
      %v2759 = vmul.f32 %v2732, %v2755
      %v2760 = vmul.f32 %v2737, %v2755
      %v2761 = vmul.f32 %v2742, %v2755
      %v2762 = vmul.f32 %v2747, %v2755
      %v2763 = vmul.f32 %v2752, %v2755
      %2764 = vst [vmem:[#allocation4 + $0x8] sm:$0xff] %v2756
      %2765 = vst [vmem:[#allocation4 + $0x18] sm:$0xff] %v2757
      %2766 = vst [vmem:[#allocation4 + $0x28] sm:$0xff] %v2758
      %2767 = vst [vmem:[#allocation4 + $0x38] sm:$0xff] %v2759
      %2768 = vst [vmem:[#allocation4 + $0x48] sm:$0xff] %v2760
      %2769 = vst [vmem:[#allocation4 + $0x58] sm:$0xff] %v2761
      %2770 = vst [vmem:[#allocation4 + $0x68] sm:$0xff] %v2762
      %2771 = vst [vmem:[#allocation4 + $0x78] sm:$0xff] %v2763
      %v2772 = vld [vmem:[#allocation3 + $0x80] sm:$0xff]
      %v2773 = vld [vmem:[#allocation3 + $0x88] sm:$0xff]
      %v2774 = vld [vmem:[#allocation3 + $0x90] sm:$0xff]
      %v2775 = vld [vmem:[#allocation3 + $0x98] sm:$0xff]
      %v2776 = vld [vmem:[#allocation3 + $0xa0] sm:$0xff]
      %v2777 = vld [vmem:[#allocation3 + $0xa8] sm:$0xff]
      %v2778 = vld [vmem:[#allocation3 + $0xb0] sm:$0xff]
      %v2779 = vld [vmem:[#allocation3 + $0xb8] sm:$0xff]
      %v2780 = vld [vmem:[#allocation3 + $0xc0] sm:$0xff]
      %v2781 = vld [vmem:[#allocation3 + $0xc8] sm:$0xff]
      %v2782 = vld [vmem:[#allocation3 + $0xd0] sm:$0xff]
      %v2783 = vld [vmem:[#allocation3 + $0xd8] sm:$0xff]
      %v2784 = vld [vmem:[#allocation3 + $0xe0] sm:$0xff]
      %v2785 = vld [vmem:[#allocation3 + $0xe8] sm:$0xff]
      %v2786 = vld [vmem:[#allocation3 + $0xf0] sm:$0xff]
      %v2787 = vld [vmem:[#allocation3 + $0xf8] sm:$0xff]
      %v2788 = vld [vmem:[#allocation2 + $0x80] sm:$0xff]
      %v2789 = vld [vmem:[#allocation2 + $0x90] sm:$0xff]
      %v2790 = vld [vmem:[#allocation2 + $0xa0] sm:$0xff]
      %v2791 = vld [vmem:[#allocation2 + $0xb0] sm:$0xff]
      %v2792 = vld [vmem:[#allocation2 + $0xc0] sm:$0xff]
      %v2793 = vld [vmem:[#allocation2 + $0xd0] sm:$0xff]
      %v2794 = vld [vmem:[#allocation2 + $0xe0] sm:$0xff]
      %v2795 = vld [vmem:[#allocation2 + $0xf0] sm:$0xff]
      %2796 = vxpose.xlu0.b32.start [1/16] %v2772, 128
      %2797 = vxpose.xlu0.b32.cont [2/16] %v2774, 128
      %2798 = vxpose.xlu0.b32.cont [3/16] %v2776, 128
      %2799 = vxpose.xlu0.b32.cont [4/16] %v2778, 128
      %2800 = vxpose.xlu0.b32.cont [5/16] %v2780, 128
      %2801 = vxpose.xlu0.b32.cont [6/16] %v2782, 128
      %2802 = vxpose.xlu0.b32.cont [7/16] %v2784, 128
      %2803 = vxpose.xlu0.b32.cont [8/16] %v2786, 128
      %2804 = vxpose.xlu0.b32.cont [9/16] 0.0, 128
      %2805 = vxpose.xlu0.b32.cont [10/16] 0.0, 128
      %2806 = vxpose.xlu0.b32.cont [11/16] 0.0, 128
      %2807 = vxpose.xlu0.b32.cont [12/16] 0.0, 128
      %2808 = vxpose.xlu0.b32.cont [13/16] 0.0, 128
      %2809 = vxpose.xlu0.b32.cont [14/16] 0.0, 128
      %2810 = vxpose.xlu0.b32.cont [15/16] 0.0, 128
      %2811 = vxpose.xlu0.b32.end [16/16] 0.0, 128
      %v2812 = vpop.trf.xlu0
      %v2813 = vpop.trf.xlu0
      %v2814 = vpop.trf.xlu0
      %v2815 = vpop.trf.xlu0
      %v2816 = vpop.trf.xlu0
      %v2817 = vpop.trf.xlu0
      %v2818 = vpop.trf.xlu0
      %v2819 = vpop.trf.xlu0
      %v2820 = vpop.trf.xlu0
      %v2821 = vpop.trf.xlu0
      %v2822 = vpop.trf.xlu0
      %v2823 = vpop.trf.xlu0
      %v2824 = vpop.trf.xlu0
      %v2825 = vpop.trf.xlu0
      %v2826 = vpop.trf.xlu0
      %v2827 = vpop.trf.xlu0
      %2828 = vxpose.xlu0.b32.start [1/16] %v2773, 128
      %2829 = vxpose.xlu0.b32.cont [2/16] %v2775, 128
      %2830 = vxpose.xlu0.b32.cont [3/16] %v2777, 128
      %2831 = vxpose.xlu0.b32.cont [4/16] %v2779, 128
      %2832 = vxpose.xlu0.b32.cont [5/16] %v2781, 128
      %2833 = vxpose.xlu0.b32.cont [6/16] %v2783, 128
      %2834 = vxpose.xlu0.b32.cont [7/16] %v2785, 128
      %2835 = vxpose.xlu0.b32.cont [8/16] %v2787, 128
      %2836 = vxpose.xlu0.b32.cont [9/16] 0.0, 128
      %2837 = vxpose.xlu0.b32.cont [10/16] 0.0, 128
      %2838 = vxpose.xlu0.b32.cont [11/16] 0.0, 128
      %2839 = vxpose.xlu0.b32.cont [12/16] 0.0, 128
      %2840 = vxpose.xlu0.b32.cont [13/16] 0.0, 128
      %2841 = vxpose.xlu0.b32.cont [14/16] 0.0, 128
      %2842 = vxpose.xlu0.b32.cont [15/16] 0.0, 128
      %2843 = vxpose.xlu0.b32.end [16/16] 0.0, 128
      %v2844 = vpop.trf.xlu0
      %v2845 = vpop.trf.xlu0
      %v2846 = vpop.trf.xlu0
      %v2847 = vpop.trf.xlu0
      %v2848 = vpop.trf.xlu0
      %v2849 = vpop.trf.xlu0
      %v2850 = vpop.trf.xlu0
      %v2851 = vpop.trf.xlu0
      %v2852 = vpop.trf.xlu0
      %v2853 = vpop.trf.xlu0
      %v2854 = vpop.trf.xlu0
      %v2855 = vpop.trf.xlu0
      %v2856 = vpop.trf.xlu0
      %v2857 = vpop.trf.xlu0
      %v2858 = vpop.trf.xlu0
      %v2859 = vpop.trf.xlu0
      %v2861 = vsel %vm1425, %v2812, 0
      %v2864 = vsel %vm1425, %v2813, 0
      %v2867 = vsel %vm1425, %v2814, 0
      %v2870 = vsel %vm1425, %v2815, 0
      %v2873 = vsel %vm1425, %v2816, 0
      %v2876 = vsel %vm1425, %v2817, 0
      %v2879 = vsel %vm1425, %v2818, 0
      %v2882 = vsel %vm1425, %v2819, 0
      %v2885 = vsel %vm1425, %v2820, 0
      %v2888 = vsel %vm1425, %v2821, 0
      %v2891 = vsel %vm1425, %v2822, 0
      %v2894 = vsel %vm1425, %v2823, 0
      %v2897 = vsel %vm1425, %v2824, 0
      %v2900 = vsel %vm1425, %v2825, 0
      %v2903 = vsel %vm1425, %v2826, 0
      %v2906 = vsel %vm1425, %v2827, 0
      %v2909 = vsel %vm1425, %v2844, 0
      %v2912 = vsel %vm1425, %v2845, 0
      %v2915 = vsel %vm1425, %v2846, 0
      %v2918 = vsel %vm1425, %v2847, 0
      %v2921 = vsel %vm1425, %v2848, 0
      %v2924 = vsel %vm1425, %v2849, 0
      %v2927 = vsel %vm1425, %v2850, 0
      %v2930 = vsel %vm1425, %v2851, 0
      %v2933 = vsel %vm1425, %v2852, 0
      %v2936 = vsel %vm1425, %v2853, 0
      %v2939 = vsel %vm1425, %v2854, 0
      %v2942 = vsel %vm1425, %v2855, 0
      %v2945 = vsel %vm1425, %v2856, 0
      %v2948 = vsel %vm1425, %v2857, 0
      %v2951 = vsel %vm1425, %v2858, 0
      %v2954 = vsel %vm1425, %v2859, 0
      %2956 = vmatprep.subr.mxu0 0.0
      %2957 = vmatpush1.msra.mxu0 %v2788
      %2958 = vmatprep.subr.mxu0 0.0
      %2959 = vmatpush1.msra.mxu0 %v2789
      %2960 = vmatprep.subr.mxu0 0.0
      %2961 = vmatpush1.msra.mxu0 %v2790
      %2962 = vmatprep.subr.mxu0 0.0
      %2963 = vmatpush1.msra.mxu0 %v2791
      %2964 = vmatprep.subr.mxu0 0.0
      %2965 = vmatpush1.msra.mxu0 %v2792
      %2966 = vmatprep.subr.mxu0 0.0
      %2967 = vmatpush1.msra.mxu0 %v2793
      %2968 = vmatprep.subr.mxu0 0.0
      %2969 = vmatpush1.msra.mxu0 %v2794
      %2970 = vmatprep.subr.mxu0 0.0
      %2971 = vmatpush1.msra.mxu0 %v2795
      %2972 = vmatprep.subr.mxu0 0.0
      %2973 = vmatpush1.msra.mxu0 0.0
      %2974 = vmatprep.subr.mxu0 0.0
      %2975 = vmatpush1.msra.mxu0 0.0
      %2976 = vmatprep.subr.mxu0 0.0
      %2977 = vmatpush1.msra.mxu0 0.0
      %2978 = vmatprep.subr.mxu0 0.0
      %2979 = vmatpush1.msra.mxu0 0.0
      %2980 = vmatprep.subr.mxu0 0.0
      %2981 = vmatpush1.msra.mxu0 0.0
      %2982 = vmatprep.subr.mxu0 0.0
      %2983 = vmatpush1.msra.mxu0 0.0
      %2984 = vmatprep.subr.mxu0 0.0
      %2985 = vmatpush1.msra.mxu0 0.0
      %2986 = vmatprep.subr.mxu0 0.0
      %2987 = vmatpush1.msra.mxu0 0.0
      %2988 = vmatprep.subr.mxu0 0.0
      %2989 = vmatpush1.msra.mxu0 0.0
      %2990 = vmatprep.subr.mxu0 0.0
      %2991 = vmatpush1.msra.mxu0 0.0
      %2992 = vmatprep.subr.mxu0 0.0
      %2993 = vmatpush1.msra.mxu0 0.0
      %2994 = vmatprep.subr.mxu0 0.0
      %2995 = vmatpush1.msra.mxu0 0.0
      %2996 = vmatprep.subr.mxu0 0.0
      %2997 = vmatpush1.msra.mxu0 0.0
      %2998 = vmatprep.subr.mxu0 0.0
      %2999 = vmatpush1.msra.mxu0 0.0
      %3000 = vmatprep.subr.mxu0 0.0
      %3001 = vmatpush1.msra.mxu0 0.0
      %3002 = vmatprep.subr.mxu0 0.0
      %3003 = vmatpush1.msra.mxu0 0.0
      %3004 = vmatprep.subr.mxu0 0.0
      %3005 = vmatpush1.msra.mxu0 0.0
      %3006 = vmatprep.subr.mxu0 0.0
      %3007 = vmatpush1.msra.mxu0 0.0
      %3008 = vmatprep.subr.mxu0 0.0
      %3009 = vmatpush1.msra.mxu0 0.0
      %3010 = vmatprep.subr.mxu0 0.0
      %3011 = vmatpush1.msra.mxu0 0.0
      %3012 = vmatprep.subr.mxu0 0.0
      %3013 = vmatpush1.msra.mxu0 0.0
      %3014 = vmatprep.subr.mxu0 0.0
      %3015 = vmatpush1.msra.mxu0 0.0
      %3016 = vmatprep.subr.mxu0 0.0
      %3017 = vmatpush1.msra.mxu0 0.0
      %3018 = vmatprep.subr.mxu0 0.0
      %3019 = vmatpush1.msra.mxu0 0.0
      %3020 = vmatprep.mubr.f32.mxu0 0.0
      %3021 = vmatmul.mubr.f32.gmra.mrb[0].mxu0 %v2861
      %v3022 = vpop.f32.mrb[0].mxu0
      %v3023 = vadd.f32 0.0, %v3022
      %v3024 = vpop.f32.mrb[0].mxu0
      %3025 = vmatprep.mubr.f32.mxu0 0.0
      %3026 = vmatmul.mubr.f32.gmra.mrb[0].mxu0 %v2864
      %v3027 = vpop.f32.mrb[0].mxu0
      %v3028 = vadd.f32 0.0, %v3027
      %v3029 = vpop.f32.mrb[0].mxu0
      %3030 = vmatprep.mubr.f32.mxu0 0.0
      %3031 = vmatmul.mubr.f32.gmra.mrb[0].mxu0 %v2867
      %v3032 = vpop.f32.mrb[0].mxu0
      %v3033 = vadd.f32 0.0, %v3032
      %v3034 = vpop.f32.mrb[0].mxu0
      %3035 = vmatprep.mubr.f32.mxu0 0.0
      %3036 = vmatmul.mubr.f32.gmra.mrb[0].mxu0 %v2870
      %v3037 = vpop.f32.mrb[0].mxu0
      %v3038 = vadd.f32 0.0, %v3037
      %v3039 = vpop.f32.mrb[0].mxu0
      %3040 = vmatprep.mubr.f32.mxu0 0.0
      %3041 = vmatmul.mubr.f32.gmra.mrb[0].mxu0 %v2873
      %v3042 = vpop.f32.mrb[0].mxu0
      %v3043 = vadd.f32 0.0, %v3042
      %v3044 = vpop.f32.mrb[0].mxu0
      %3045 = vmatprep.mubr.f32.mxu0 0.0
      %3046 = vmatmul.mubr.f32.gmra.mrb[0].mxu0 %v2876
      %v3047 = vpop.f32.mrb[0].mxu0
      %v3048 = vadd.f32 0.0, %v3047
      %v3049 = vpop.f32.mrb[0].mxu0
      %3050 = vmatprep.mubr.f32.mxu0 0.0
      %3051 = vmatmul.mubr.f32.gmra.mrb[0].mxu0 %v2879
      %v3052 = vpop.f32.mrb[0].mxu0
      %v3053 = vadd.f32 0.0, %v3052
      %v3054 = vpop.f32.mrb[0].mxu0
      %3055 = vmatprep.mubr.f32.mxu0 0.0
      %3056 = vmatmul.mubr.f32.gmra.mrb[0].mxu0 %v2882
      %v3057 = vpop.f32.mrb[0].mxu0
      %v3058 = vadd.f32 0.0, %v3057
      %v3059 = vpop.f32.mrb[0].mxu0
      %3060 = vmatprep.mubr.f32.mxu0 0.0
      %3061 = vmatmul.mubr.f32.gmra.mrb[0].mxu0 %v2885
      %v3062 = vpop.f32.mrb[0].mxu0
      %v3063 = vadd.f32 0.0, %v3062
      %v3064 = vpop.f32.mrb[0].mxu0
      %3065 = vmatprep.mubr.f32.mxu0 0.0
      %3066 = vmatmul.mubr.f32.gmra.mrb[0].mxu0 %v2888
      %v3067 = vpop.f32.mrb[0].mxu0
      %v3068 = vadd.f32 0.0, %v3067
      %v3069 = vpop.f32.mrb[0].mxu0
      %3070 = vmatprep.mubr.f32.mxu0 0.0
      %3071 = vmatmul.mubr.f32.gmra.mrb[0].mxu0 %v2891
      %v3072 = vpop.f32.mrb[0].mxu0
      %v3073 = vadd.f32 0.0, %v3072
      %v3074 = vpop.f32.mrb[0].mxu0
      %3075 = vmatprep.mubr.f32.mxu0 0.0
      %3076 = vmatmul.mubr.f32.gmra.mrb[0].mxu0 %v2894
      %v3077 = vpop.f32.mrb[0].mxu0
      %v3078 = vadd.f32 0.0, %v3077
      %v3079 = vpop.f32.mrb[0].mxu0
      %3080 = vmatprep.mubr.f32.mxu0 0.0
      %3081 = vmatmul.mubr.f32.gmra.mrb[0].mxu0 %v2897
      %v3082 = vpop.f32.mrb[0].mxu0
      %v3083 = vadd.f32 0.0, %v3082
      %v3084 = vpop.f32.mrb[0].mxu0
      %3085 = vmatprep.mubr.f32.mxu0 0.0
      %3086 = vmatmul.mubr.f32.gmra.mrb[0].mxu0 %v2900
      %v3087 = vpop.f32.mrb[0].mxu0
      %v3088 = vadd.f32 0.0, %v3087
      %v3089 = vpop.f32.mrb[0].mxu0
      %3090 = vmatprep.mubr.f32.mxu0 0.0
      %3091 = vmatmul.mubr.f32.gmra.mrb[0].mxu0 %v2903
      %v3092 = vpop.f32.mrb[0].mxu0
      %v3093 = vadd.f32 0.0, %v3092
      %v3094 = vpop.f32.mrb[0].mxu0
      %3095 = vmatprep.mubr.f32.mxu0 0.0
      %3096 = vmatmul.mubr.f32.gmra.mrb[0].mxu0 %v2906
      %v3097 = vpop.f32.mrb[0].mxu0
      %v3098 = vadd.f32 0.0, %v3097
      %v3099 = vpop.f32.mrb[0].mxu0
      %3100 = vmatprep.mubr.f32.mxu0 0.0
      %3101 = vmatmul.mubr.f32.gmra.mrb[0].mxu0 %v2909
      %v3102 = vpop.f32.mrb[0].mxu0
      %v3103 = vadd.f32 0.0, %v3102
      %v3104 = vpop.f32.mrb[0].mxu0
      %3105 = vmatprep.mubr.f32.mxu0 0.0
      %3106 = vmatmul.mubr.f32.gmra.mrb[0].mxu0 %v2912
      %v3107 = vpop.f32.mrb[0].mxu0
      %v3108 = vadd.f32 0.0, %v3107
      %v3109 = vpop.f32.mrb[0].mxu0
      %3110 = vmatprep.mubr.f32.mxu0 0.0
      %3111 = vmatmul.mubr.f32.gmra.mrb[0].mxu0 %v2915
      %v3112 = vpop.f32.mrb[0].mxu0
      %v3113 = vadd.f32 0.0, %v3112
      %v3114 = vpop.f32.mrb[0].mxu0
      %3115 = vmatprep.mubr.f32.mxu0 0.0
      %3116 = vmatmul.mubr.f32.gmra.mrb[0].mxu0 %v2918
      %v3117 = vpop.f32.mrb[0].mxu0
      %v3118 = vadd.f32 0.0, %v3117
      %v3119 = vpop.f32.mrb[0].mxu0
      %3120 = vmatprep.mubr.f32.mxu0 0.0
      %3121 = vmatmul.mubr.f32.gmra.mrb[0].mxu0 %v2921
      %v3122 = vpop.f32.mrb[0].mxu0
      %v3123 = vadd.f32 0.0, %v3122
      %v3124 = vpop.f32.mrb[0].mxu0
      %3125 = vmatprep.mubr.f32.mxu0 0.0
      %3126 = vmatmul.mubr.f32.gmra.mrb[0].mxu0 %v2924
      %v3127 = vpop.f32.mrb[0].mxu0
      %v3128 = vadd.f32 0.0, %v3127
      %v3129 = vpop.f32.mrb[0].mxu0
      %3130 = vmatprep.mubr.f32.mxu0 0.0
      %3131 = vmatmul.mubr.f32.gmra.mrb[0].mxu0 %v2927
      %v3132 = vpop.f32.mrb[0].mxu0
      %v3133 = vadd.f32 0.0, %v3132
      %v3134 = vpop.f32.mrb[0].mxu0
      %3135 = vmatprep.mubr.f32.mxu0 0.0
      %3136 = vmatmul.mubr.f32.gmra.mrb[0].mxu0 %v2930
      %v3137 = vpop.f32.mrb[0].mxu0
      %v3138 = vadd.f32 0.0, %v3137
      %v3139 = vpop.f32.mrb[0].mxu0
      %3140 = vmatprep.mubr.f32.mxu0 0.0
      %3141 = vmatmul.mubr.f32.gmra.mrb[0].mxu0 %v2933
      %v3142 = vpop.f32.mrb[0].mxu0
      %v3143 = vadd.f32 0.0, %v3142
      %v3144 = vpop.f32.mrb[0].mxu0
      %3145 = vmatprep.mubr.f32.mxu0 0.0
      %3146 = vmatmul.mubr.f32.gmra.mrb[0].mxu0 %v2936
      %v3147 = vpop.f32.mrb[0].mxu0
      %v3148 = vadd.f32 0.0, %v3147
      %v3149 = vpop.f32.mrb[0].mxu0
      %3150 = vmatprep.mubr.f32.mxu0 0.0
      %3151 = vmatmul.mubr.f32.gmra.mrb[0].mxu0 %v2939
      %v3152 = vpop.f32.mrb[0].mxu0
      %v3153 = vadd.f32 0.0, %v3152
      %v3154 = vpop.f32.mrb[0].mxu0
      %3155 = vmatprep.mubr.f32.mxu0 0.0
      %3156 = vmatmul.mubr.f32.gmra.mrb[0].mxu0 %v2942
      %v3157 = vpop.f32.mrb[0].mxu0
      %v3158 = vadd.f32 0.0, %v3157
      %v3159 = vpop.f32.mrb[0].mxu0
      %3160 = vmatprep.mubr.f32.mxu0 0.0
      %3161 = vmatmul.mubr.f32.gmra.mrb[0].mxu0 %v2945
      %v3162 = vpop.f32.mrb[0].mxu0
      %v3163 = vadd.f32 0.0, %v3162
      %v3164 = vpop.f32.mrb[0].mxu0
      %3165 = vmatprep.mubr.f32.mxu0 0.0
      %3166 = vmatmul.mubr.f32.gmra.mrb[0].mxu0 %v2948
      %v3167 = vpop.f32.mrb[0].mxu0
      %v3168 = vadd.f32 0.0, %v3167
      %v3169 = vpop.f32.mrb[0].mxu0
      %3170 = vmatprep.mubr.f32.mxu0 0.0
      %3171 = vmatmul.mubr.f32.gmra.mrb[0].mxu0 %v2951
      %v3172 = vpop.f32.mrb[0].mxu0
      %v3173 = vadd.f32 0.0, %v3172
      %v3174 = vpop.f32.mrb[0].mxu0
      %3175 = vmatprep.mubr.f32.mxu0 0.0
      %3176 = vmatmul.mubr.f32.gmra.mrb[0].mxu0 %v2954
      %v3177 = vpop.f32.mrb[0].mxu0
      %v3178 = vadd.f32 0.0, %v3177
      %v3179 = vpop.f32.mrb[0].mxu0
      %3180 = vdwg.mxu0
      %v3181 = vmax.f32 %v3023, %v3043
      %v3182 = vmax.f32 %v3028, %v3048
      %v3183 = vmax.f32 %v3033, %v3053
      %v3184 = vmax.f32 %v3038, %v3058
      %v3185 = vmax.f32 %v3181, %v3063
      %v3186 = vmax.f32 %v3182, %v3068
      %v3187 = vmax.f32 %v3183, %v3073
      %v3188 = vmax.f32 %v3184, %v3078
      %v3189 = vmax.f32 %v3185, %v3083
      %v3190 = vmax.f32 %v3186, %v3088
      %v3191 = vmax.f32 %v3187, %v3093
      %v3192 = vmax.f32 %v3188, %v3098
      %v3193 = vmax.f32 %v3189, %v3103
      %v3194 = vmax.f32 %v3190, %v3108
      %v3195 = vmax.f32 %v3191, %v3113
      %v3196 = vmax.f32 %v3192, %v3118
      %v3197 = vmax.f32 %v3193, %v3123
      %v3198 = vmax.f32 %v3194, %v3128
      %v3199 = vmax.f32 %v3195, %v3133
      %v3200 = vmax.f32 %v3196, %v3138
      %v3201 = vmax.f32 %v3197, %v3143
      %v3202 = vmax.f32 %v3198, %v3148
      %v3203 = vmax.f32 %v3199, %v3153
      %v3204 = vmax.f32 %v3200, %v3158
      %v3205 = vmax.f32 %v3201, %v3163
      %v3206 = vmax.f32 %v3202, %v3168
      %v3207 = vmax.f32 %v3203, %v3173
      %v3208 = vmax.f32 %v3204, %v3178
      %v3209 = vmax.f32 %v3205, %v3206
      %v3210 = vmax.f32 %v3207, %v3208
      %v3211 = vmax.f32 %v3209, %v3210
      %v3212 = vrot.slane %v3211, 4
      %v3213 = vmax.f32 %v3211, %v3212
      %v3214 = vrot.slane %v3213, 2
      %v3215 = vmax.f32 %v3213, %v3214
      %v3216 = vrot.slane %v3215, 1
      %v3217 = vmax.f32 %v3215, %v3216
      %v3218 = vsub.f32 %v3023, %v3217
      %v3219 = vsub.f32 %v3028, %v3217
      %v3220 = vsub.f32 %v3033, %v3217
      %v3221 = vsub.f32 %v3038, %v3217
      %v3222 = vsub.f32 %v3043, %v3217
      %v3223 = vsub.f32 %v3048, %v3217
      %v3224 = vsub.f32 %v3053, %v3217
      %v3225 = vsub.f32 %v3058, %v3217
      %v3226 = vsub.f32 %v3063, %v3217
      %v3227 = vsub.f32 %v3068, %v3217
      %v3228 = vsub.f32 %v3073, %v3217
      %v3229 = vsub.f32 %v3078, %v3217
      %v3230 = vsub.f32 %v3083, %v3217
      %v3231 = vsub.f32 %v3088, %v3217
      %v3232 = vsub.f32 %v3093, %v3217
      %v3233 = vsub.f32 %v3098, %v3217
      %v3234 = vsub.f32 %v3103, %v3217
      %v3235 = vsub.f32 %v3108, %v3217
      %v3236 = vsub.f32 %v3113, %v3217
      %v3237 = vsub.f32 %v3118, %v3217
      %v3238 = vsub.f32 %v3123, %v3217
      %v3239 = vsub.f32 %v3128, %v3217
      %v3240 = vsub.f32 %v3133, %v3217
      %v3241 = vsub.f32 %v3138, %v3217
      %v3242 = vsub.f32 %v3143, %v3217
      %v3243 = vsub.f32 %v3148, %v3217
      %v3244 = vsub.f32 %v3153, %v3217
      %v3245 = vsub.f32 %v3158, %v3217
      %v3246 = vsub.f32 %v3163, %v3217
      %v3247 = vsub.f32 %v3168, %v3217
      %v3248 = vsub.f32 %v3173, %v3217
      %v3249 = vsub.f32 %v3178, %v3217
      %v3250 = vmul.f32 %v3218, 1.442695
      %v3251 = vpow.pop %v3250
      %v3252 = vmul.f32 %v3219, 1.442695
      %v3253 = vpow.pop %v3252
      %v3254 = vmul.f32 %v3220, 1.442695
      %v3255 = vpow.pop %v3254
      %v3256 = vmul.f32 %v3221, 1.442695
      %v3257 = vpow.pop %v3256
      %v3258 = vmul.f32 %v3222, 1.442695
      %v3259 = vpow.pop %v3258
      %v3260 = vmul.f32 %v3223, 1.442695
      %v3261 = vpow.pop %v3260
      %v3262 = vmul.f32 %v3224, 1.442695
      %v3263 = vpow.pop %v3262
      %v3264 = vmul.f32 %v3225, 1.442695
      %v3265 = vpow.pop %v3264
      %v3266 = vmul.f32 %v3226, 1.442695
      %v3267 = vpow.pop %v3266
      %v3268 = vmul.f32 %v3227, 1.442695
      %v3269 = vpow.pop %v3268
      %v3270 = vmul.f32 %v3228, 1.442695
      %v3271 = vpow.pop %v3270
      %v3272 = vmul.f32 %v3229, 1.442695
      %v3273 = vpow.pop %v3272
      %v3274 = vmul.f32 %v3230, 1.442695
      %v3275 = vpow.pop %v3274
      %v3276 = vmul.f32 %v3231, 1.442695
      %v3277 = vpow.pop %v3276
      %v3278 = vmul.f32 %v3232, 1.442695
      %v3279 = vpow.pop %v3278
      %v3280 = vmul.f32 %v3233, 1.442695
      %v3281 = vpow.pop %v3280
      %v3282 = vmul.f32 %v3234, 1.442695
      %v3283 = vpow.pop %v3282
      %v3284 = vmul.f32 %v3235, 1.442695
      %v3285 = vpow.pop %v3284
      %v3286 = vmul.f32 %v3236, 1.442695
      %v3287 = vpow.pop %v3286
      %v3288 = vmul.f32 %v3237, 1.442695
      %v3289 = vpow.pop %v3288
      %v3290 = vmul.f32 %v3238, 1.442695
      %v3291 = vpow.pop %v3290
      %v3292 = vmul.f32 %v3239, 1.442695
      %v3293 = vpow.pop %v3292
      %v3294 = vmul.f32 %v3240, 1.442695
      %v3295 = vpow.pop %v3294
      %v3296 = vmul.f32 %v3241, 1.442695
      %v3297 = vpow.pop %v3296
      %v3298 = vmul.f32 %v3242, 1.442695
      %v3299 = vpow.pop %v3298
      %v3300 = vmul.f32 %v3243, 1.442695
      %v3301 = vpow.pop %v3300
      %v3302 = vmul.f32 %v3244, 1.442695
      %v3303 = vpow.pop %v3302
      %v3304 = vmul.f32 %v3245, 1.442695
      %v3305 = vpow.pop %v3304
      %v3306 = vmul.f32 %v3246, 1.442695
      %v3307 = vpow.pop %v3306
      %v3308 = vmul.f32 %v3247, 1.442695
      %v3309 = vpow.pop %v3308
      %v3310 = vmul.f32 %v3248, 1.442695
      %v3311 = vpow.pop %v3310
      %v3312 = vmul.f32 %v3249, 1.442695
      %v3313 = vpow.pop %v3312
      %v3314 = vadd.f32 %v3251, %v3253
      %v3315 = vadd.f32 %v3314, %v3255
      %v3316 = vadd.f32 %v3315, %v3257
      %v3317 = vadd.f32 %v3316, %v3259
      %v3318 = vadd.f32 %v3317, %v3261
      %v3319 = vadd.f32 %v3318, %v3263
      %v3320 = vadd.f32 %v3319, %v3265
      %v3321 = vadd.f32 %v3320, %v3267
      %v3322 = vadd.f32 %v3321, %v3269
      %v3323 = vadd.f32 %v3322, %v3271
      %v3324 = vadd.f32 %v3323, %v3273
      %v3325 = vadd.f32 %v3324, %v3275
      %v3326 = vadd.f32 %v3325, %v3277
      %v3327 = vadd.f32 %v3326, %v3279
      %v3328 = vadd.f32 %v3327, %v3281
      %v3329 = vadd.f32 %v3328, %v3283
      %v3330 = vadd.f32 %v3329, %v3285
      %v3331 = vadd.f32 %v3330, %v3287
      %v3332 = vadd.f32 %v3331, %v3289
      %v3333 = vadd.f32 %v3332, %v3291
      %v3334 = vadd.f32 %v3333, %v3293
      %v3335 = vadd.f32 %v3334, %v3295
      %v3336 = vadd.f32 %v3335, %v3297
      %v3337 = vadd.f32 %v3336, %v3299
      %v3338 = vadd.f32 %v3337, %v3301
      %v3339 = vadd.f32 %v3338, %v3303
      %v3340 = vadd.f32 %v3339, %v3305
      %v3341 = vadd.f32 %v3340, %v3307
      %v3342 = vadd.f32 %v3341, %v3309
      %v3343 = vadd.f32 %v3342, %v3311
      %v3344 = vadd.f32 %v3343, %v3313
      %v3345 = vrot.slane %v3344, 4
      %v3346 = vadd.f32 %v3344, %v3345
      %v3347 = vrot.slane %v3346, 2
      %v3348 = vadd.f32 %v3346, %v3347
      %v3349 = vrot.slane %v3348, 1
      %v3350 = vadd.f32 %v3348, %v3349
      %v3351 = vld [vmem:[#allocation3 + $0x180] sm:$0xff]
      %v3352 = vld [vmem:[#allocation3 + $0x188] sm:$0xff]
      %v3353 = vld [vmem:[#allocation3 + $0x190] sm:$0xff]
      %v3354 = vld [vmem:[#allocation3 + $0x198] sm:$0xff]
      %v3355 = vld [vmem:[#allocation3 + $0x1a0] sm:$0xff]
      %v3356 = vld [vmem:[#allocation3 + $0x1a8] sm:$0xff]
      %v3357 = vld [vmem:[#allocation3 + $0x1b0] sm:$0xff]
      %v3358 = vld [vmem:[#allocation3 + $0x1b8] sm:$0xff]
      %v3359 = vld [vmem:[#allocation3 + $0x1c0] sm:$0xff]
      %v3360 = vld [vmem:[#allocation3 + $0x1c8] sm:$0xff]
      %v3361 = vld [vmem:[#allocation3 + $0x1d0] sm:$0xff]
      %v3362 = vld [vmem:[#allocation3 + $0x1d8] sm:$0xff]
      %v3363 = vld [vmem:[#allocation3 + $0x1e0] sm:$0xff]
      %v3364 = vld [vmem:[#allocation3 + $0x1e8] sm:$0xff]
      %v3365 = vld [vmem:[#allocation3 + $0x1f0] sm:$0xff]
      %v3366 = vld [vmem:[#allocation3 + $0x1f8] sm:$0xff]
      %3367 = vmatprep.subr.mxu0 0.0
      %3368 = vmatpush1.msra.mxu0 %v3251
      %3369 = vmatprep.subr.mxu0 0.0
      %3370 = vmatpush1.msra.mxu0 %v3253
      %3371 = vmatprep.subr.mxu0 0.0
      %3372 = vmatpush1.msra.mxu0 %v3255
      %3373 = vmatprep.subr.mxu0 0.0
      %3374 = vmatpush1.msra.mxu0 %v3257
      %3375 = vmatprep.subr.mxu0 0.0
      %3376 = vmatpush1.msra.mxu0 %v3259
      %3377 = vmatprep.subr.mxu0 0.0
      %3378 = vmatpush1.msra.mxu0 %v3261
      %3379 = vmatprep.subr.mxu0 0.0
      %3380 = vmatpush1.msra.mxu0 %v3263
      %3381 = vmatprep.subr.mxu0 0.0
      %3382 = vmatpush1.msra.mxu0 %v3265
      %3383 = vmatprep.subr.mxu0 0.0
      %3384 = vmatpush1.msra.mxu0 %v3267
      %3385 = vmatprep.subr.mxu0 0.0
      %3386 = vmatpush1.msra.mxu0 %v3269
      %3387 = vmatprep.subr.mxu0 0.0
      %3388 = vmatpush1.msra.mxu0 %v3271
      %3389 = vmatprep.subr.mxu0 0.0
      %3390 = vmatpush1.msra.mxu0 %v3273
      %3391 = vmatprep.subr.mxu0 0.0
      %3392 = vmatpush1.msra.mxu0 %v3275
      %3393 = vmatprep.subr.mxu0 0.0
      %3394 = vmatpush1.msra.mxu0 %v3277
      %3395 = vmatprep.subr.mxu0 0.0
      %3396 = vmatpush1.msra.mxu0 %v3279
      %3397 = vmatprep.subr.mxu0 0.0
      %3398 = vmatpush1.msra.mxu0 %v3281
      %3399 = vmatprep.subr.mxu0 0.0
      %3400 = vmatpush1.msra.mxu0 %v3283
      %3401 = vmatprep.subr.mxu0 0.0
      %3402 = vmatpush1.msra.mxu0 %v3285
      %3403 = vmatprep.subr.mxu0 0.0
      %3404 = vmatpush1.msra.mxu0 %v3287
      %3405 = vmatprep.subr.mxu0 0.0
      %3406 = vmatpush1.msra.mxu0 %v3289
      %3407 = vmatprep.subr.mxu0 0.0
      %3408 = vmatpush1.msra.mxu0 %v3291
      %3409 = vmatprep.subr.mxu0 0.0
      %3410 = vmatpush1.msra.mxu0 %v3293
      %3411 = vmatprep.subr.mxu0 0.0
      %3412 = vmatpush1.msra.mxu0 %v3295
      %3413 = vmatprep.subr.mxu0 0.0
      %3414 = vmatpush1.msra.mxu0 %v3297
      %3415 = vmatprep.subr.mxu0 0.0
      %3416 = vmatpush1.msra.mxu0 %v3299
      %3417 = vmatprep.subr.mxu0 0.0
      %3418 = vmatpush1.msra.mxu0 %v3301
      %3419 = vmatprep.subr.mxu0 0.0
      %3420 = vmatpush1.msra.mxu0 %v3303
      %3421 = vmatprep.subr.mxu0 0.0
      %3422 = vmatpush1.msra.mxu0 %v3305
      %3423 = vmatprep.subr.mxu0 0.0
      %3424 = vmatpush1.msra.mxu0 %v3307
      %3425 = vmatprep.subr.mxu0 0.0
      %3426 = vmatpush1.msra.mxu0 %v3309
      %3427 = vmatprep.subr.mxu0 0.0
      %3428 = vmatpush1.msra.mxu0 %v3311
      %3429 = vmatprep.subr.mxu0 0.0
      %3430 = vmatpush1.msra.mxu0 %v3313
      %3431 = vmatprep.mubr.f32.mxu0 %v3352
      %3432 = vmatmul.mubr.f32.gmra.mrb[0].mxu0 %v3351
      %v3433 = vpop.f32.mrb[0].mxu0
      %v3434 = vadd.f32 0.0, %v3433
      %v3435 = vpop.f32.mrb[0].mxu0
      %3436 = vmatprep.mubr.f32.mxu0 %v3354
      %3437 = vmatmul.mubr.f32.gmra.mrb[0].mxu0 %v3353
      %v3438 = vpop.f32.mrb[0].mxu0
      %v3439 = vadd.f32 0.0, %v3438
      %v3440 = vpop.f32.mrb[0].mxu0
      %3441 = vmatprep.mubr.f32.mxu0 %v3356
      %3442 = vmatmul.mubr.f32.gmra.mrb[0].mxu0 %v3355
      %v3443 = vpop.f32.mrb[0].mxu0
      %v3444 = vadd.f32 0.0, %v3443
      %v3445 = vpop.f32.mrb[0].mxu0
      %3446 = vmatprep.mubr.f32.mxu0 %v3358
      %3447 = vmatmul.mubr.f32.gmra.mrb[0].mxu0 %v3357
      %v3448 = vpop.f32.mrb[0].mxu0
      %v3449 = vadd.f32 0.0, %v3448
      %v3450 = vpop.f32.mrb[0].mxu0
      %3451 = vmatprep.mubr.f32.mxu0 %v3360
      %3452 = vmatmul.mubr.f32.gmra.mrb[0].mxu0 %v3359
      %v3453 = vpop.f32.mrb[0].mxu0
      %v3454 = vadd.f32 0.0, %v3453
      %v3455 = vpop.f32.mrb[0].mxu0
      %3456 = vmatprep.mubr.f32.mxu0 %v3362
      %3457 = vmatmul.mubr.f32.gmra.mrb[0].mxu0 %v3361
      %v3458 = vpop.f32.mrb[0].mxu0
      %v3459 = vadd.f32 0.0, %v3458
      %v3460 = vpop.f32.mrb[0].mxu0
      %3461 = vmatprep.mubr.f32.mxu0 %v3364
      %3462 = vmatmul.mubr.f32.gmra.mrb[0].mxu0 %v3363
      %v3463 = vpop.f32.mrb[0].mxu0
      %v3464 = vadd.f32 0.0, %v3463
      %v3465 = vpop.f32.mrb[0].mxu0
      %3466 = vmatprep.mubr.f32.mxu0 %v3366
      %3467 = vmatmul.mubr.f32.gmra.mrb[0].mxu0 %v3365
      %v3468 = vpop.f32.mrb[0].mxu0
      %v3469 = vadd.f32 0.0, %v3468
      %v3470 = vpop.f32.mrb[0].mxu0
      %3471 = vdwg.mxu0
      %v3472 = vrcp.pop %v3350
      %v3473 = vmul.f32 %v3434, %v3472
      %v3474 = vmul.f32 %v3439, %v3472
      %v3475 = vmul.f32 %v3444, %v3472
      %v3476 = vmul.f32 %v3449, %v3472
      %v3477 = vmul.f32 %v3454, %v3472
      %v3478 = vmul.f32 %v3459, %v3472
      %v3479 = vmul.f32 %v3464, %v3472
      %v3480 = vmul.f32 %v3469, %v3472
      %3481 = vst [vmem:[#allocation4 + $0x80] sm:$0xff] %v3473
      %3482 = vst [vmem:[#allocation4 + $0x90] sm:$0xff] %v3474
      %3483 = vst [vmem:[#allocation4 + $0xa0] sm:$0xff] %v3475
      %3484 = vst [vmem:[#allocation4 + $0xb0] sm:$0xff] %v3476
      %3485 = vst [vmem:[#allocation4 + $0xc0] sm:$0xff] %v3477
      %3486 = vst [vmem:[#allocation4 + $0xd0] sm:$0xff] %v3478
      %3487 = vst [vmem:[#allocation4 + $0xe0] sm:$0xff] %v3479
      %3488 = vst [vmem:[#allocation4 + $0xf0] sm:$0xff] %v3480
      %v3489 = vld [vmem:[#allocation3 + $0x80] sm:$0xff]
      %v3490 = vld [vmem:[#allocation3 + $0x88] sm:$0xff]
      %v3491 = vld [vmem:[#allocation3 + $0x90] sm:$0xff]
      %v3492 = vld [vmem:[#allocation3 + $0x98] sm:$0xff]
      %v3493 = vld [vmem:[#allocation3 + $0xa0] sm:$0xff]
      %v3494 = vld [vmem:[#allocation3 + $0xa8] sm:$0xff]
      %v3495 = vld [vmem:[#allocation3 + $0xb0] sm:$0xff]
      %v3496 = vld [vmem:[#allocation3 + $0xb8] sm:$0xff]
      %v3497 = vld [vmem:[#allocation3 + $0xc0] sm:$0xff]
      %v3498 = vld [vmem:[#allocation3 + $0xc8] sm:$0xff]
      %v3499 = vld [vmem:[#allocation3 + $0xd0] sm:$0xff]
      %v3500 = vld [vmem:[#allocation3 + $0xd8] sm:$0xff]
      %v3501 = vld [vmem:[#allocation3 + $0xe0] sm:$0xff]
      %v3502 = vld [vmem:[#allocation3 + $0xe8] sm:$0xff]
      %v3503 = vld [vmem:[#allocation3 + $0xf0] sm:$0xff]
      %v3504 = vld [vmem:[#allocation3 + $0xf8] sm:$0xff]
      %v3505 = vld [vmem:[#allocation2 + $0x88] sm:$0xff]
      %v3506 = vld [vmem:[#allocation2 + $0x98] sm:$0xff]
      %v3507 = vld [vmem:[#allocation2 + $0xa8] sm:$0xff]
      %v3508 = vld [vmem:[#allocation2 + $0xb8] sm:$0xff]
      %v3509 = vld [vmem:[#allocation2 + $0xc8] sm:$0xff]
      %v3510 = vld [vmem:[#allocation2 + $0xd8] sm:$0xff]
      %v3511 = vld [vmem:[#allocation2 + $0xe8] sm:$0xff]
      %v3512 = vld [vmem:[#allocation2 + $0xf8] sm:$0xff]
      %3513 = vxpose.xlu0.b32.start [1/16] %v3489, 128
      %3514 = vxpose.xlu0.b32.cont [2/16] %v3491, 128
      %3515 = vxpose.xlu0.b32.cont [3/16] %v3493, 128
      %3516 = vxpose.xlu0.b32.cont [4/16] %v3495, 128
      %3517 = vxpose.xlu0.b32.cont [5/16] %v3497, 128
      %3518 = vxpose.xlu0.b32.cont [6/16] %v3499, 128
      %3519 = vxpose.xlu0.b32.cont [7/16] %v3501, 128
      %3520 = vxpose.xlu0.b32.cont [8/16] %v3503, 128
      %3521 = vxpose.xlu0.b32.cont [9/16] 0.0, 128
      %3522 = vxpose.xlu0.b32.cont [10/16] 0.0, 128
      %3523 = vxpose.xlu0.b32.cont [11/16] 0.0, 128
      %3524 = vxpose.xlu0.b32.cont [12/16] 0.0, 128
      %3525 = vxpose.xlu0.b32.cont [13/16] 0.0, 128
      %3526 = vxpose.xlu0.b32.cont [14/16] 0.0, 128
      %3527 = vxpose.xlu0.b32.cont [15/16] 0.0, 128
      %3528 = vxpose.xlu0.b32.end [16/16] 0.0, 128
      %v3529 = vpop.trf.xlu0
      %v3530 = vpop.trf.xlu0
      %v3531 = vpop.trf.xlu0
      %v3532 = vpop.trf.xlu0
      %v3533 = vpop.trf.xlu0
      %v3534 = vpop.trf.xlu0
      %v3535 = vpop.trf.xlu0
      %v3536 = vpop.trf.xlu0
      %v3537 = vpop.trf.xlu0
      %v3538 = vpop.trf.xlu0
      %v3539 = vpop.trf.xlu0
      %v3540 = vpop.trf.xlu0
      %v3541 = vpop.trf.xlu0
      %v3542 = vpop.trf.xlu0
      %v3543 = vpop.trf.xlu0
      %v3544 = vpop.trf.xlu0
      %3545 = vxpose.xlu0.b32.start [1/16] %v3490, 128
      %3546 = vxpose.xlu0.b32.cont [2/16] %v3492, 128
      %3547 = vxpose.xlu0.b32.cont [3/16] %v3494, 128
      %3548 = vxpose.xlu0.b32.cont [4/16] %v3496, 128
      %3549 = vxpose.xlu0.b32.cont [5/16] %v3498, 128
      %3550 = vxpose.xlu0.b32.cont [6/16] %v3500, 128
      %3551 = vxpose.xlu0.b32.cont [7/16] %v3502, 128
      %3552 = vxpose.xlu0.b32.cont [8/16] %v3504, 128
      %3553 = vxpose.xlu0.b32.cont [9/16] 0.0, 128
      %3554 = vxpose.xlu0.b32.cont [10/16] 0.0, 128
      %3555 = vxpose.xlu0.b32.cont [11/16] 0.0, 128
      %3556 = vxpose.xlu0.b32.cont [12/16] 0.0, 128
      %3557 = vxpose.xlu0.b32.cont [13/16] 0.0, 128
      %3558 = vxpose.xlu0.b32.cont [14/16] 0.0, 128
      %3559 = vxpose.xlu0.b32.cont [15/16] 0.0, 128
      %3560 = vxpose.xlu0.b32.end [16/16] 0.0, 128
      %v3561 = vpop.trf.xlu0
      %v3562 = vpop.trf.xlu0
      %v3563 = vpop.trf.xlu0
      %v3564 = vpop.trf.xlu0
      %v3565 = vpop.trf.xlu0
      %v3566 = vpop.trf.xlu0
      %v3567 = vpop.trf.xlu0
      %v3568 = vpop.trf.xlu0
      %v3569 = vpop.trf.xlu0
      %v3570 = vpop.trf.xlu0
      %v3571 = vpop.trf.xlu0
      %v3572 = vpop.trf.xlu0
      %v3573 = vpop.trf.xlu0
      %v3574 = vpop.trf.xlu0
      %v3575 = vpop.trf.xlu0
      %v3576 = vpop.trf.xlu0
      %v3578 = vsel %vm1425, %v3529, 0
      %v3581 = vsel %vm1425, %v3530, 0
      %v3584 = vsel %vm1425, %v3531, 0
      %v3587 = vsel %vm1425, %v3532, 0
      %v3590 = vsel %vm1425, %v3533, 0
      %v3593 = vsel %vm1425, %v3534, 0
      %v3596 = vsel %vm1425, %v3535, 0
      %v3599 = vsel %vm1425, %v3536, 0
      %v3602 = vsel %vm1425, %v3537, 0
      %v3605 = vsel %vm1425, %v3538, 0
      %v3608 = vsel %vm1425, %v3539, 0
      %v3611 = vsel %vm1425, %v3540, 0
      %v3614 = vsel %vm1425, %v3541, 0
      %v3617 = vsel %vm1425, %v3542, 0
      %v3620 = vsel %vm1425, %v3543, 0
      %v3623 = vsel %vm1425, %v3544, 0
      %v3626 = vsel %vm1425, %v3561, 0
      %v3629 = vsel %vm1425, %v3562, 0
      %v3632 = vsel %vm1425, %v3563, 0
      %v3635 = vsel %vm1425, %v3564, 0
      %v3638 = vsel %vm1425, %v3565, 0
      %v3641 = vsel %vm1425, %v3566, 0
      %v3644 = vsel %vm1425, %v3567, 0
      %v3647 = vsel %vm1425, %v3568, 0
      %v3650 = vsel %vm1425, %v3569, 0
      %v3653 = vsel %vm1425, %v3570, 0
      %v3656 = vsel %vm1425, %v3571, 0
      %v3659 = vsel %vm1425, %v3572, 0
      %v3662 = vsel %vm1425, %v3573, 0
      %v3665 = vsel %vm1425, %v3574, 0
      %v3668 = vsel %vm1425, %v3575, 0
      %v3671 = vsel %vm1425, %v3576, 0
      %3673 = vmatprep.subr.mxu0 0.0
      %3674 = vmatpush1.msra.mxu0 %v3505
      %3675 = vmatprep.subr.mxu0 0.0
      %3676 = vmatpush1.msra.mxu0 %v3506
      %3677 = vmatprep.subr.mxu0 0.0
      %3678 = vmatpush1.msra.mxu0 %v3507
      %3679 = vmatprep.subr.mxu0 0.0
      %3680 = vmatpush1.msra.mxu0 %v3508
      %3681 = vmatprep.subr.mxu0 0.0
      %3682 = vmatpush1.msra.mxu0 %v3509
      %3683 = vmatprep.subr.mxu0 0.0
      %3684 = vmatpush1.msra.mxu0 %v3510
      %3685 = vmatprep.subr.mxu0 0.0
      %3686 = vmatpush1.msra.mxu0 %v3511
      %3687 = vmatprep.subr.mxu0 0.0
      %3688 = vmatpush1.msra.mxu0 %v3512
      %3689 = vmatprep.subr.mxu0 0.0
      %3690 = vmatpush1.msra.mxu0 0.0
      %3691 = vmatprep.subr.mxu0 0.0
      %3692 = vmatpush1.msra.mxu0 0.0
      %3693 = vmatprep.subr.mxu0 0.0
      %3694 = vmatpush1.msra.mxu0 0.0
      %3695 = vmatprep.subr.mxu0 0.0
      %3696 = vmatpush1.msra.mxu0 0.0
      %3697 = vmatprep.subr.mxu0 0.0
      %3698 = vmatpush1.msra.mxu0 0.0
      %3699 = vmatprep.subr.mxu0 0.0
      %3700 = vmatpush1.msra.mxu0 0.0
      %3701 = vmatprep.subr.mxu0 0.0
      %3702 = vmatpush1.msra.mxu0 0.0
      %3703 = vmatprep.subr.mxu0 0.0
      %3704 = vmatpush1.msra.mxu0 0.0
      %3705 = vmatprep.subr.mxu0 0.0
      %3706 = vmatpush1.msra.mxu0 0.0
      %3707 = vmatprep.subr.mxu0 0.0
      %3708 = vmatpush1.msra.mxu0 0.0
      %3709 = vmatprep.subr.mxu0 0.0
      %3710 = vmatpush1.msra.mxu0 0.0
      %3711 = vmatprep.subr.mxu0 0.0
      %3712 = vmatpush1.msra.mxu0 0.0
      %3713 = vmatprep.subr.mxu0 0.0
      %3714 = vmatpush1.msra.mxu0 0.0
      %3715 = vmatprep.subr.mxu0 0.0
      %3716 = vmatpush1.msra.mxu0 0.0
      %3717 = vmatprep.subr.mxu0 0.0
      %3718 = vmatpush1.msra.mxu0 0.0
      %3719 = vmatprep.subr.mxu0 0.0
      %3720 = vmatpush1.msra.mxu0 0.0
      %3721 = vmatprep.subr.mxu0 0.0
      %3722 = vmatpush1.msra.mxu0 0.0
      %3723 = vmatprep.subr.mxu0 0.0
      %3724 = vmatpush1.msra.mxu0 0.0
      %3725 = vmatprep.subr.mxu0 0.0
      %3726 = vmatpush1.msra.mxu0 0.0
      %3727 = vmatprep.subr.mxu0 0.0
      %3728 = vmatpush1.msra.mxu0 0.0
      %3729 = vmatprep.subr.mxu0 0.0
      %3730 = vmatpush1.msra.mxu0 0.0
      %3731 = vmatprep.subr.mxu0 0.0
      %3732 = vmatpush1.msra.mxu0 0.0
      %3733 = vmatprep.subr.mxu0 0.0
      %3734 = vmatpush1.msra.mxu0 0.0
      %3735 = vmatprep.subr.mxu0 0.0
      %3736 = vmatpush1.msra.mxu0 0.0
      %3737 = vmatprep.mubr.f32.mxu0 0.0
      %3738 = vmatmul.mubr.f32.gmra.mrb[0].mxu0 %v3578
      %v3739 = vpop.f32.mrb[0].mxu0
      %v3740 = vadd.f32 0.0, %v3739
      %v3741 = vpop.f32.mrb[0].mxu0
      %3742 = vmatprep.mubr.f32.mxu0 0.0
      %3743 = vmatmul.mubr.f32.gmra.mrb[0].mxu0 %v3581
      %v3744 = vpop.f32.mrb[0].mxu0
      %v3745 = vadd.f32 0.0, %v3744
      %v3746 = vpop.f32.mrb[0].mxu0
      %3747 = vmatprep.mubr.f32.mxu0 0.0
      %3748 = vmatmul.mubr.f32.gmra.mrb[0].mxu0 %v3584
      %v3749 = vpop.f32.mrb[0].mxu0
      %v3750 = vadd.f32 0.0, %v3749
      %v3751 = vpop.f32.mrb[0].mxu0
      %3752 = vmatprep.mubr.f32.mxu0 0.0
      %3753 = vmatmul.mubr.f32.gmra.mrb[0].mxu0 %v3587
      %v3754 = vpop.f32.mrb[0].mxu0
      %v3755 = vadd.f32 0.0, %v3754
      %v3756 = vpop.f32.mrb[0].mxu0
      %3757 = vmatprep.mubr.f32.mxu0 0.0
      %3758 = vmatmul.mubr.f32.gmra.mrb[0].mxu0 %v3590
      %v3759 = vpop.f32.mrb[0].mxu0
      %v3760 = vadd.f32 0.0, %v3759
      %v3761 = vpop.f32.mrb[0].mxu0
      %3762 = vmatprep.mubr.f32.mxu0 0.0
      %3763 = vmatmul.mubr.f32.gmra.mrb[0].mxu0 %v3593
      %v3764 = vpop.f32.mrb[0].mxu0
      %v3765 = vadd.f32 0.0, %v3764
      %v3766 = vpop.f32.mrb[0].mxu0
      %3767 = vmatprep.mubr.f32.mxu0 0.0
      %3768 = vmatmul.mubr.f32.gmra.mrb[0].mxu0 %v3596
      %v3769 = vpop.f32.mrb[0].mxu0
      %v3770 = vadd.f32 0.0, %v3769
      %v3771 = vpop.f32.mrb[0].mxu0
      %3772 = vmatprep.mubr.f32.mxu0 0.0
      %3773 = vmatmul.mubr.f32.gmra.mrb[0].mxu0 %v3599
      %v3774 = vpop.f32.mrb[0].mxu0
      %v3775 = vadd.f32 0.0, %v3774
      %v3776 = vpop.f32.mrb[0].mxu0
      %3777 = vmatprep.mubr.f32.mxu0 0.0
      %3778 = vmatmul.mubr.f32.gmra.mrb[0].mxu0 %v3602
      %v3779 = vpop.f32.mrb[0].mxu0
      %v3780 = vadd.f32 0.0, %v3779
      %v3781 = vpop.f32.mrb[0].mxu0
      %3782 = vmatprep.mubr.f32.mxu0 0.0
      %3783 = vmatmul.mubr.f32.gmra.mrb[0].mxu0 %v3605
      %v3784 = vpop.f32.mrb[0].mxu0
      %v3785 = vadd.f32 0.0, %v3784
      %v3786 = vpop.f32.mrb[0].mxu0
      %3787 = vmatprep.mubr.f32.mxu0 0.0
      %3788 = vmatmul.mubr.f32.gmra.mrb[0].mxu0 %v3608
      %v3789 = vpop.f32.mrb[0].mxu0
      %v3790 = vadd.f32 0.0, %v3789
      %v3791 = vpop.f32.mrb[0].mxu0
      %3792 = vmatprep.mubr.f32.mxu0 0.0
      %3793 = vmatmul.mubr.f32.gmra.mrb[0].mxu0 %v3611
      %v3794 = vpop.f32.mrb[0].mxu0
      %v3795 = vadd.f32 0.0, %v3794
      %v3796 = vpop.f32.mrb[0].mxu0
      %3797 = vmatprep.mubr.f32.mxu0 0.0
      %3798 = vmatmul.mubr.f32.gmra.mrb[0].mxu0 %v3614
      %v3799 = vpop.f32.mrb[0].mxu0
      %v3800 = vadd.f32 0.0, %v3799
      %v3801 = vpop.f32.mrb[0].mxu0
      %3802 = vmatprep.mubr.f32.mxu0 0.0
      %3803 = vmatmul.mubr.f32.gmra.mrb[0].mxu0 %v3617
      %v3804 = vpop.f32.mrb[0].mxu0
      %v3805 = vadd.f32 0.0, %v3804
      %v3806 = vpop.f32.mrb[0].mxu0
      %3807 = vmatprep.mubr.f32.mxu0 0.0
      %3808 = vmatmul.mubr.f32.gmra.mrb[0].mxu0 %v3620
      %v3809 = vpop.f32.mrb[0].mxu0
      %v3810 = vadd.f32 0.0, %v3809
      %v3811 = vpop.f32.mrb[0].mxu0
      %3812 = vmatprep.mubr.f32.mxu0 0.0
      %3813 = vmatmul.mubr.f32.gmra.mrb[0].mxu0 %v3623
      %v3814 = vpop.f32.mrb[0].mxu0
      %v3815 = vadd.f32 0.0, %v3814
      %v3816 = vpop.f32.mrb[0].mxu0
      %3817 = vmatprep.mubr.f32.mxu0 0.0
      %3818 = vmatmul.mubr.f32.gmra.mrb[0].mxu0 %v3626
      %v3819 = vpop.f32.mrb[0].mxu0
      %v3820 = vadd.f32 0.0, %v3819
      %v3821 = vpop.f32.mrb[0].mxu0
      %3822 = vmatprep.mubr.f32.mxu0 0.0
      %3823 = vmatmul.mubr.f32.gmra.mrb[0].mxu0 %v3629
      %v3824 = vpop.f32.mrb[0].mxu0
      %v3825 = vadd.f32 0.0, %v3824
      %v3826 = vpop.f32.mrb[0].mxu0
      %3827 = vmatprep.mubr.f32.mxu0 0.0
      %3828 = vmatmul.mubr.f32.gmra.mrb[0].mxu0 %v3632
      %v3829 = vpop.f32.mrb[0].mxu0
      %v3830 = vadd.f32 0.0, %v3829
      %v3831 = vpop.f32.mrb[0].mxu0
      %3832 = vmatprep.mubr.f32.mxu0 0.0
      %3833 = vmatmul.mubr.f32.gmra.mrb[0].mxu0 %v3635
      %v3834 = vpop.f32.mrb[0].mxu0
      %v3835 = vadd.f32 0.0, %v3834
      %v3836 = vpop.f32.mrb[0].mxu0
      %3837 = vmatprep.mubr.f32.mxu0 0.0
      %3838 = vmatmul.mubr.f32.gmra.mrb[0].mxu0 %v3638
      %v3839 = vpop.f32.mrb[0].mxu0
      %v3840 = vadd.f32 0.0, %v3839
      %v3841 = vpop.f32.mrb[0].mxu0
      %3842 = vmatprep.mubr.f32.mxu0 0.0
      %3843 = vmatmul.mubr.f32.gmra.mrb[0].mxu0 %v3641
      %v3844 = vpop.f32.mrb[0].mxu0
      %v3845 = vadd.f32 0.0, %v3844
      %v3846 = vpop.f32.mrb[0].mxu0
      %3847 = vmatprep.mubr.f32.mxu0 0.0
      %3848 = vmatmul.mubr.f32.gmra.mrb[0].mxu0 %v3644
      %v3849 = vpop.f32.mrb[0].mxu0
      %v3850 = vadd.f32 0.0, %v3849
      %v3851 = vpop.f32.mrb[0].mxu0
      %3852 = vmatprep.mubr.f32.mxu0 0.0
      %3853 = vmatmul.mubr.f32.gmra.mrb[0].mxu0 %v3647
      %v3854 = vpop.f32.mrb[0].mxu0
      %v3855 = vadd.f32 0.0, %v3854
      %v3856 = vpop.f32.mrb[0].mxu0
      %3857 = vmatprep.mubr.f32.mxu0 0.0
      %3858 = vmatmul.mubr.f32.gmra.mrb[0].mxu0 %v3650
      %v3859 = vpop.f32.mrb[0].mxu0
      %v3860 = vadd.f32 0.0, %v3859
      %v3861 = vpop.f32.mrb[0].mxu0
      %3862 = vmatprep.mubr.f32.mxu0 0.0
      %3863 = vmatmul.mubr.f32.gmra.mrb[0].mxu0 %v3653
      %v3864 = vpop.f32.mrb[0].mxu0
      %v3865 = vadd.f32 0.0, %v3864
      %v3866 = vpop.f32.mrb[0].mxu0
      %3867 = vmatprep.mubr.f32.mxu0 0.0
      %3868 = vmatmul.mubr.f32.gmra.mrb[0].mxu0 %v3656
      %v3869 = vpop.f32.mrb[0].mxu0
      %v3870 = vadd.f32 0.0, %v3869
      %v3871 = vpop.f32.mrb[0].mxu0
      %3872 = vmatprep.mubr.f32.mxu0 0.0
      %3873 = vmatmul.mubr.f32.gmra.mrb[0].mxu0 %v3659
      %v3874 = vpop.f32.mrb[0].mxu0
      %v3875 = vadd.f32 0.0, %v3874
      %v3876 = vpop.f32.mrb[0].mxu0
      %3877 = vmatprep.mubr.f32.mxu0 0.0
      %3878 = vmatmul.mubr.f32.gmra.mrb[0].mxu0 %v3662
      %v3879 = vpop.f32.mrb[0].mxu0
      %v3880 = vadd.f32 0.0, %v3879
      %v3881 = vpop.f32.mrb[0].mxu0
      %3882 = vmatprep.mubr.f32.mxu0 0.0
      %3883 = vmatmul.mubr.f32.gmra.mrb[0].mxu0 %v3665
      %v3884 = vpop.f32.mrb[0].mxu0
      %v3885 = vadd.f32 0.0, %v3884
      %v3886 = vpop.f32.mrb[0].mxu0
      %3887 = vmatprep.mubr.f32.mxu0 0.0
      %3888 = vmatmul.mubr.f32.gmra.mrb[0].mxu0 %v3668
      %v3889 = vpop.f32.mrb[0].mxu0
      %v3890 = vadd.f32 0.0, %v3889
      %v3891 = vpop.f32.mrb[0].mxu0
      %3892 = vmatprep.mubr.f32.mxu0 0.0
      %3893 = vmatmul.mubr.f32.gmra.mrb[0].mxu0 %v3671
      %v3894 = vpop.f32.mrb[0].mxu0
      %v3895 = vadd.f32 0.0, %v3894
      %v3896 = vpop.f32.mrb[0].mxu0
      %3897 = vdwg.mxu0
      %v3898 = vmax.f32 %v3740, %v3760
      %v3899 = vmax.f32 %v3745, %v3765
      %v3900 = vmax.f32 %v3750, %v3770
      %v3901 = vmax.f32 %v3755, %v3775
      %v3902 = vmax.f32 %v3898, %v3780
      %v3903 = vmax.f32 %v3899, %v3785
      %v3904 = vmax.f32 %v3900, %v3790
      %v3905 = vmax.f32 %v3901, %v3795
      %v3906 = vmax.f32 %v3902, %v3800
      %v3907 = vmax.f32 %v3903, %v3805
      %v3908 = vmax.f32 %v3904, %v3810
      %v3909 = vmax.f32 %v3905, %v3815
      %v3910 = vmax.f32 %v3906, %v3820
      %v3911 = vmax.f32 %v3907, %v3825
      %v3912 = vmax.f32 %v3908, %v3830
      %v3913 = vmax.f32 %v3909, %v3835
      %v3914 = vmax.f32 %v3910, %v3840
      %v3915 = vmax.f32 %v3911, %v3845
      %v3916 = vmax.f32 %v3912, %v3850
      %v3917 = vmax.f32 %v3913, %v3855
      %v3918 = vmax.f32 %v3914, %v3860
      %v3919 = vmax.f32 %v3915, %v3865
      %v3920 = vmax.f32 %v3916, %v3870
      %v3921 = vmax.f32 %v3917, %v3875
      %v3922 = vmax.f32 %v3918, %v3880
      %v3923 = vmax.f32 %v3919, %v3885
      %v3924 = vmax.f32 %v3920, %v3890
      %v3925 = vmax.f32 %v3921, %v3895
      %v3926 = vmax.f32 %v3922, %v3923
      %v3927 = vmax.f32 %v3924, %v3925
      %v3928 = vmax.f32 %v3926, %v3927
      %v3929 = vrot.slane %v3928, 4
      %v3930 = vmax.f32 %v3928, %v3929
      %v3931 = vrot.slane %v3930, 2
      %v3932 = vmax.f32 %v3930, %v3931
      %v3933 = vrot.slane %v3932, 1
      %v3934 = vmax.f32 %v3932, %v3933
      %v3935 = vsub.f32 %v3740, %v3934
      %v3936 = vsub.f32 %v3745, %v3934
      %v3937 = vsub.f32 %v3750, %v3934
      %v3938 = vsub.f32 %v3755, %v3934
      %v3939 = vsub.f32 %v3760, %v3934
      %v3940 = vsub.f32 %v3765, %v3934
      %v3941 = vsub.f32 %v3770, %v3934
      %v3942 = vsub.f32 %v3775, %v3934
      %v3943 = vsub.f32 %v3780, %v3934
      %v3944 = vsub.f32 %v3785, %v3934
      %v3945 = vsub.f32 %v3790, %v3934
      %v3946 = vsub.f32 %v3795, %v3934
      %v3947 = vsub.f32 %v3800, %v3934
      %v3948 = vsub.f32 %v3805, %v3934
      %v3949 = vsub.f32 %v3810, %v3934
      %v3950 = vsub.f32 %v3815, %v3934
      %v3951 = vsub.f32 %v3820, %v3934
      %v3952 = vsub.f32 %v3825, %v3934
      %v3953 = vsub.f32 %v3830, %v3934
      %v3954 = vsub.f32 %v3835, %v3934
      %v3955 = vsub.f32 %v3840, %v3934
      %v3956 = vsub.f32 %v3845, %v3934
      %v3957 = vsub.f32 %v3850, %v3934
      %v3958 = vsub.f32 %v3855, %v3934
      %v3959 = vsub.f32 %v3860, %v3934
      %v3960 = vsub.f32 %v3865, %v3934
      %v3961 = vsub.f32 %v3870, %v3934
      %v3962 = vsub.f32 %v3875, %v3934
      %v3963 = vsub.f32 %v3880, %v3934
      %v3964 = vsub.f32 %v3885, %v3934
      %v3965 = vsub.f32 %v3890, %v3934
      %v3966 = vsub.f32 %v3895, %v3934
      %v3967 = vmul.f32 %v3935, 1.442695
      %v3968 = vpow.pop %v3967
      %v3969 = vmul.f32 %v3936, 1.442695
      %v3970 = vpow.pop %v3969
      %v3971 = vmul.f32 %v3937, 1.442695
      %v3972 = vpow.pop %v3971
      %v3973 = vmul.f32 %v3938, 1.442695
      %v3974 = vpow.pop %v3973
      %v3975 = vmul.f32 %v3939, 1.442695
      %v3976 = vpow.pop %v3975
      %v3977 = vmul.f32 %v3940, 1.442695
      %v3978 = vpow.pop %v3977
      %v3979 = vmul.f32 %v3941, 1.442695
      %v3980 = vpow.pop %v3979
      %v3981 = vmul.f32 %v3942, 1.442695
      %v3982 = vpow.pop %v3981
      %v3983 = vmul.f32 %v3943, 1.442695
      %v3984 = vpow.pop %v3983
      %v3985 = vmul.f32 %v3944, 1.442695
      %v3986 = vpow.pop %v3985
      %v3987 = vmul.f32 %v3945, 1.442695
      %v3988 = vpow.pop %v3987
      %v3989 = vmul.f32 %v3946, 1.442695
      %v3990 = vpow.pop %v3989
      %v3991 = vmul.f32 %v3947, 1.442695
      %v3992 = vpow.pop %v3991
      %v3993 = vmul.f32 %v3948, 1.442695
      %v3994 = vpow.pop %v3993
      %v3995 = vmul.f32 %v3949, 1.442695
      %v3996 = vpow.pop %v3995
      %v3997 = vmul.f32 %v3950, 1.442695
      %v3998 = vpow.pop %v3997
      %v3999 = vmul.f32 %v3951, 1.442695
      %v4000 = vpow.pop %v3999
      %v4001 = vmul.f32 %v3952, 1.442695
      %v4002 = vpow.pop %v4001
      %v4003 = vmul.f32 %v3953, 1.442695
      %v4004 = vpow.pop %v4003
      %v4005 = vmul.f32 %v3954, 1.442695
      %v4006 = vpow.pop %v4005
      %v4007 = vmul.f32 %v3955, 1.442695
      %v4008 = vpow.pop %v4007
      %v4009 = vmul.f32 %v3956, 1.442695
      %v4010 = vpow.pop %v4009
      %v4011 = vmul.f32 %v3957, 1.442695
      %v4012 = vpow.pop %v4011
      %v4013 = vmul.f32 %v3958, 1.442695
      %v4014 = vpow.pop %v4013
      %v4015 = vmul.f32 %v3959, 1.442695
      %v4016 = vpow.pop %v4015
      %v4017 = vmul.f32 %v3960, 1.442695
      %v4018 = vpow.pop %v4017
      %v4019 = vmul.f32 %v3961, 1.442695
      %v4020 = vpow.pop %v4019
      %v4021 = vmul.f32 %v3962, 1.442695
      %v4022 = vpow.pop %v4021
      %v4023 = vmul.f32 %v3963, 1.442695
      %v4024 = vpow.pop %v4023
      %v4025 = vmul.f32 %v3964, 1.442695
      %v4026 = vpow.pop %v4025
      %v4027 = vmul.f32 %v3965, 1.442695
      %v4028 = vpow.pop %v4027
      %v4029 = vmul.f32 %v3966, 1.442695
      %v4030 = vpow.pop %v4029
      %v4031 = vadd.f32 %v3968, %v3970
      %v4032 = vadd.f32 %v4031, %v3972
      %v4033 = vadd.f32 %v4032, %v3974
      %v4034 = vadd.f32 %v4033, %v3976
      %v4035 = vadd.f32 %v4034, %v3978
      %v4036 = vadd.f32 %v4035, %v3980
      %v4037 = vadd.f32 %v4036, %v3982
      %v4038 = vadd.f32 %v4037, %v3984
      %v4039 = vadd.f32 %v4038, %v3986
      %v4040 = vadd.f32 %v4039, %v3988
      %v4041 = vadd.f32 %v4040, %v3990
      %v4042 = vadd.f32 %v4041, %v3992
      %v4043 = vadd.f32 %v4042, %v3994
      %v4044 = vadd.f32 %v4043, %v3996
      %v4045 = vadd.f32 %v4044, %v3998
      %v4046 = vadd.f32 %v4045, %v4000
      %v4047 = vadd.f32 %v4046, %v4002
      %v4048 = vadd.f32 %v4047, %v4004
      %v4049 = vadd.f32 %v4048, %v4006
      %v4050 = vadd.f32 %v4049, %v4008
      %v4051 = vadd.f32 %v4050, %v4010
      %v4052 = vadd.f32 %v4051, %v4012
      %v4053 = vadd.f32 %v4052, %v4014
      %v4054 = vadd.f32 %v4053, %v4016
      %v4055 = vadd.f32 %v4054, %v4018
      %v4056 = vadd.f32 %v4055, %v4020
      %v4057 = vadd.f32 %v4056, %v4022
      %v4058 = vadd.f32 %v4057, %v4024
      %v4059 = vadd.f32 %v4058, %v4026
      %v4060 = vadd.f32 %v4059, %v4028
      %v4061 = vadd.f32 %v4060, %v4030
      %v4062 = vrot.slane %v4061, 4
      %v4063 = vadd.f32 %v4061, %v4062
      %v4064 = vrot.slane %v4063, 2
      %v4065 = vadd.f32 %v4063, %v4064
      %v4066 = vrot.slane %v4065, 1
      %v4067 = vadd.f32 %v4065, %v4066
      %v4068 = vld [vmem:[#allocation3 + $0x180] sm:$0xff]
      %v4069 = vld [vmem:[#allocation3 + $0x188] sm:$0xff]
      %v4070 = vld [vmem:[#allocation3 + $0x190] sm:$0xff]
      %v4071 = vld [vmem:[#allocation3 + $0x198] sm:$0xff]
      %v4072 = vld [vmem:[#allocation3 + $0x1a0] sm:$0xff]
      %v4073 = vld [vmem:[#allocation3 + $0x1a8] sm:$0xff]
      %v4074 = vld [vmem:[#allocation3 + $0x1b0] sm:$0xff]
      %v4075 = vld [vmem:[#allocation3 + $0x1b8] sm:$0xff]
      %v4076 = vld [vmem:[#allocation3 + $0x1c0] sm:$0xff]
      %v4077 = vld [vmem:[#allocation3 + $0x1c8] sm:$0xff]
      %v4078 = vld [vmem:[#allocation3 + $0x1d0] sm:$0xff]
      %v4079 = vld [vmem:[#allocation3 + $0x1d8] sm:$0xff]
      %v4080 = vld [vmem:[#allocation3 + $0x1e0] sm:$0xff]
      %v4081 = vld [vmem:[#allocation3 + $0x1e8] sm:$0xff]
      %v4082 = vld [vmem:[#allocation3 + $0x1f0] sm:$0xff]
      %v4083 = vld [vmem:[#allocation3 + $0x1f8] sm:$0xff]
      %4084 = vmatprep.subr.mxu0 0.0
      %4085 = vmatpush1.msra.mxu0 %v3968
      %4086 = vmatprep.subr.mxu0 0.0
      %4087 = vmatpush1.msra.mxu0 %v3970
      %4088 = vmatprep.subr.mxu0 0.0
      %4089 = vmatpush1.msra.mxu0 %v3972
      %4090 = vmatprep.subr.mxu0 0.0
      %4091 = vmatpush1.msra.mxu0 %v3974
      %4092 = vmatprep.subr.mxu0 0.0
      %4093 = vmatpush1.msra.mxu0 %v3976
      %4094 = vmatprep.subr.mxu0 0.0
      %4095 = vmatpush1.msra.mxu0 %v3978
      %4096 = vmatprep.subr.mxu0 0.0
      %4097 = vmatpush1.msra.mxu0 %v3980
      %4098 = vmatprep.subr.mxu0 0.0
      %4099 = vmatpush1.msra.mxu0 %v3982
      %4100 = vmatprep.subr.mxu0 0.0
      %4101 = vmatpush1.msra.mxu0 %v3984
      %4102 = vmatprep.subr.mxu0 0.0
      %4103 = vmatpush1.msra.mxu0 %v3986
      %4104 = vmatprep.subr.mxu0 0.0
      %4105 = vmatpush1.msra.mxu0 %v3988
      %4106 = vmatprep.subr.mxu0 0.0
      %4107 = vmatpush1.msra.mxu0 %v3990
      %4108 = vmatprep.subr.mxu0 0.0
      %4109 = vmatpush1.msra.mxu0 %v3992
      %4110 = vmatprep.subr.mxu0 0.0
      %4111 = vmatpush1.msra.mxu0 %v3994
      %4112 = vmatprep.subr.mxu0 0.0
      %4113 = vmatpush1.msra.mxu0 %v3996
      %4114 = vmatprep.subr.mxu0 0.0
      %4115 = vmatpush1.msra.mxu0 %v3998
      %4116 = vmatprep.subr.mxu0 0.0
      %4117 = vmatpush1.msra.mxu0 %v4000
      %4118 = vmatprep.subr.mxu0 0.0
      %4119 = vmatpush1.msra.mxu0 %v4002
      %4120 = vmatprep.subr.mxu0 0.0
      %4121 = vmatpush1.msra.mxu0 %v4004
      %4122 = vmatprep.subr.mxu0 0.0
      %4123 = vmatpush1.msra.mxu0 %v4006
      %4124 = vmatprep.subr.mxu0 0.0
      %4125 = vmatpush1.msra.mxu0 %v4008
      %4126 = vmatprep.subr.mxu0 0.0
      %4127 = vmatpush1.msra.mxu0 %v4010
      %4128 = vmatprep.subr.mxu0 0.0
      %4129 = vmatpush1.msra.mxu0 %v4012
      %4130 = vmatprep.subr.mxu0 0.0
      %4131 = vmatpush1.msra.mxu0 %v4014
      %4132 = vmatprep.subr.mxu0 0.0
      %4133 = vmatpush1.msra.mxu0 %v4016
      %4134 = vmatprep.subr.mxu0 0.0
      %4135 = vmatpush1.msra.mxu0 %v4018
      %4136 = vmatprep.subr.mxu0 0.0
      %4137 = vmatpush1.msra.mxu0 %v4020
      %4138 = vmatprep.subr.mxu0 0.0
      %4139 = vmatpush1.msra.mxu0 %v4022
      %4140 = vmatprep.subr.mxu0 0.0
      %4141 = vmatpush1.msra.mxu0 %v4024
      %4142 = vmatprep.subr.mxu0 0.0
      %4143 = vmatpush1.msra.mxu0 %v4026
      %4144 = vmatprep.subr.mxu0 0.0
      %4145 = vmatpush1.msra.mxu0 %v4028
      %4146 = vmatprep.subr.mxu0 0.0
      %4147 = vmatpush1.msra.mxu0 %v4030
      %4148 = vmatprep.mubr.f32.mxu0 %v4069
      %4149 = vmatmul.mubr.f32.gmra.mrb[0].mxu0 %v4068
      %v4150 = vpop.f32.mrb[0].mxu0
      %v4151 = vadd.f32 0.0, %v4150
      %v4152 = vpop.f32.mrb[0].mxu0
      %4153 = vmatprep.mubr.f32.mxu0 %v4071
      %4154 = vmatmul.mubr.f32.gmra.mrb[0].mxu0 %v4070
      %v4155 = vpop.f32.mrb[0].mxu0
      %v4156 = vadd.f32 0.0, %v4155
      %v4157 = vpop.f32.mrb[0].mxu0
      %4158 = vmatprep.mubr.f32.mxu0 %v4073
      %4159 = vmatmul.mubr.f32.gmra.mrb[0].mxu0 %v4072
      %v4160 = vpop.f32.mrb[0].mxu0
      %v4161 = vadd.f32 0.0, %v4160
      %v4162 = vpop.f32.mrb[0].mxu0
      %4163 = vmatprep.mubr.f32.mxu0 %v4075
      %4164 = vmatmul.mubr.f32.gmra.mrb[0].mxu0 %v4074
      %v4165 = vpop.f32.mrb[0].mxu0
      %v4166 = vadd.f32 0.0, %v4165
      %v4167 = vpop.f32.mrb[0].mxu0
      %4168 = vmatprep.mubr.f32.mxu0 %v4077
      %4169 = vmatmul.mubr.f32.gmra.mrb[0].mxu0 %v4076
      %v4170 = vpop.f32.mrb[0].mxu0
      %v4171 = vadd.f32 0.0, %v4170
      %v4172 = vpop.f32.mrb[0].mxu0
      %4173 = vmatprep.mubr.f32.mxu0 %v4079
      %4174 = vmatmul.mubr.f32.gmra.mrb[0].mxu0 %v4078
      %v4175 = vpop.f32.mrb[0].mxu0
      %v4176 = vadd.f32 0.0, %v4175
      %v4177 = vpop.f32.mrb[0].mxu0
      %4178 = vmatprep.mubr.f32.mxu0 %v4081
      %4179 = vmatmul.mubr.f32.gmra.mrb[0].mxu0 %v4080
      %v4180 = vpop.f32.mrb[0].mxu0
      %v4181 = vadd.f32 0.0, %v4180
      %v4182 = vpop.f32.mrb[0].mxu0
      %4183 = vmatprep.mubr.f32.mxu0 %v4083
      %4184 = vmatmul.mubr.f32.gmra.mrb[0].mxu0 %v4082
      %v4185 = vpop.f32.mrb[0].mxu0
      %v4186 = vadd.f32 0.0, %v4185
      %v4187 = vpop.f32.mrb[0].mxu0
      %4188 = vdwg.mxu0
      %v4189 = vrcp.pop %v4067
      %v4190 = vmul.f32 %v4151, %v4189
      %v4191 = vmul.f32 %v4156, %v4189
      %v4192 = vmul.f32 %v4161, %v4189
      %v4193 = vmul.f32 %v4166, %v4189
      %v4194 = vmul.f32 %v4171, %v4189
      %v4195 = vmul.f32 %v4176, %v4189
      %v4196 = vmul.f32 %v4181, %v4189
      %v4197 = vmul.f32 %v4186, %v4189
      %4198 = vst [vmem:[#allocation4 + $0x88] sm:$0xff] %v4190
      %4199 = vst [vmem:[#allocation4 + $0x98] sm:$0xff] %v4191
      %4200 = vst [vmem:[#allocation4 + $0xa8] sm:$0xff] %v4192
      %4201 = vst [vmem:[#allocation4 + $0xb8] sm:$0xff] %v4193
      %4202 = vst [vmem:[#allocation4 + $0xc8] sm:$0xff] %v4194
      %4203 = vst [vmem:[#allocation4 + $0xd8] sm:$0xff] %v4195
      %4204 = vst [vmem:[#allocation4 + $0xe8] sm:$0xff] %v4196
      %4205 = vst [vmem:[#allocation4 + $0xf8] sm:$0xff] %v4197
      %v4206 = vld [vmem:[%s6] sm:$0xff]
      %v4207 = vld [vmem:[%s6 + $0x8] sm:$0xff]
      %v4208 = vld [vmem:[%s6 + $0x10] sm:$0xff]
      %v4209 = vld [vmem:[%s6 + $0x18] sm:$0xff]
      %v4210 = vld [vmem:[#allocation4] sm:$0xff]
      %v4211 = vld [vmem:[#allocation4 + $0x8] sm:$0xff]
      %v4212 = vld [vmem:[#allocation4 + $0x10] sm:$0xff]
      %v4213 = vld [vmem:[#allocation4 + $0x18] sm:$0xff]
      %v4214 = vld [vmem:[#allocation4 + $0x20] sm:$0xff]
      %v4215 = vld [vmem:[#allocation4 + $0x28] sm:$0xff]
      %v4216 = vld [vmem:[#allocation4 + $0x30] sm:$0xff]
      %v4217 = vld [vmem:[#allocation4 + $0x38] sm:$0xff]
      %v4218 = vld [vmem:[#allocation4 + $0x40] sm:$0xff]
      %v4219 = vld [vmem:[#allocation4 + $0x48] sm:$0xff]
      %v4220 = vld [vmem:[#allocation4 + $0x50] sm:$0xff]
      %v4221 = vld [vmem:[#allocation4 + $0x58] sm:$0xff]
      %v4222 = vld [vmem:[#allocation4 + $0x60] sm:$0xff]
      %v4223 = vld [vmem:[#allocation4 + $0x68] sm:$0xff]
      %v4224 = vld [vmem:[#allocation4 + $0x70] sm:$0xff]
      %v4225 = vld [vmem:[#allocation4 + $0x78] sm:$0xff]
      %v4226 = vld [vmem:[#allocation4 + $0x80] sm:$0xff]
      %v4227 = vld [vmem:[#allocation4 + $0x88] sm:$0xff]
      %v4228 = vld [vmem:[#allocation4 + $0x90] sm:$0xff]
      %v4229 = vld [vmem:[#allocation4 + $0x98] sm:$0xff]
      %v4230 = vld [vmem:[#allocation4 + $0xa0] sm:$0xff]
      %v4231 = vld [vmem:[#allocation4 + $0xa8] sm:$0xff]
      %v4232 = vld [vmem:[#allocation4 + $0xb0] sm:$0xff]
      %v4233 = vld [vmem:[#allocation4 + $0xb8] sm:$0xff]
      %v4234 = vld [vmem:[#allocation4 + $0xc0] sm:$0xff]
      %v4235 = vld [vmem:[#allocation4 + $0xc8] sm:$0xff]
      %v4236 = vld [vmem:[#allocation4 + $0xd0] sm:$0xff]
      %v4237 = vld [vmem:[#allocation4 + $0xd8] sm:$0xff]
      %v4238 = vld [vmem:[#allocation4 + $0xe0] sm:$0xff]
      %v4239 = vld [vmem:[#allocation4 + $0xe8] sm:$0xff]
      %v4240 = vld [vmem:[#allocation4 + $0xf0] sm:$0xff]
      %v4241 = vld [vmem:[#allocation4 + $0xf8] sm:$0xff]
      %v4242 = vld [vmem:[%s7] sm:$0xff]
      %v4243 = vld [vmem:[%s7 + $0x8] sm:$0xff]
      %v4244 = vld [vmem:[%s7 + $0x10] sm:$0xff]
      %v4245 = vld [vmem:[%s7 + $0x18] sm:$0xff]
      %4247 = vset.pattern.permute.xlu0 0
      %4248 = vperm.xlu0 %4247, %v4242
      %v4249 = vpop.permute.xlu0 %4248
      %4252 = vset.pattern.permute.xlu0 0
      %4253 = vperm.xlu0 %4252, %v4243
      %v4254 = vpop.permute.xlu0 %4253
      %4257 = vset.pattern.permute.xlu0 0
      %4258 = vperm.xlu0 %4257, %v4244
      %v4259 = vpop.permute.xlu0 %4258
      %4262 = vset.pattern.permute.xlu0 0
      %4263 = vperm.xlu0 %4262, %v4245
      %v4264 = vpop.permute.xlu0 %4263
      %4266 = vmatprep.subr.mxu0 %v4211
      %4267 = vmatpush1.msra.mxu0 %v4210
      %4268 = vmatprep.subr.mxu0 %v4213
      %4269 = vmatpush1.msra.mxu0 %v4212
      %4270 = vmatprep.subr.mxu0 %v4215
      %4271 = vmatpush1.msra.mxu0 %v4214
      %4272 = vmatprep.subr.mxu0 %v4217
      %4273 = vmatpush1.msra.mxu0 %v4216
      %4274 = vmatprep.subr.mxu0 %v4219
      %4275 = vmatpush1.msra.mxu0 %v4218
      %4276 = vmatprep.subr.mxu0 %v4221
      %4277 = vmatpush1.msra.mxu0 %v4220
      %4278 = vmatprep.subr.mxu0 %v4223
      %4279 = vmatpush1.msra.mxu0 %v4222
      %4280 = vmatprep.subr.mxu0 %v4225
      %4281 = vmatpush1.msra.mxu0 %v4224
      %4282 = vmatprep.subr.mxu0 %v4227
      %4283 = vmatpush1.msra.mxu0 %v4226
      %4284 = vmatprep.subr.mxu0 %v4229
      %4285 = vmatpush1.msra.mxu0 %v4228
      %4286 = vmatprep.subr.mxu0 %v4231
      %4287 = vmatpush1.msra.mxu0 %v4230
      %4288 = vmatprep.subr.mxu0 %v4233
      %4289 = vmatpush1.msra.mxu0 %v4232
      %4290 = vmatprep.subr.mxu0 %v4235
      %4291 = vmatpush1.msra.mxu0 %v4234
      %4292 = vmatprep.subr.mxu0 %v4237
      %4293 = vmatpush1.msra.mxu0 %v4236
      %4294 = vmatprep.subr.mxu0 %v4239
      %4295 = vmatpush1.msra.mxu0 %v4238
      %4296 = vmatprep.subr.mxu0 %v4241
      %4297 = vmatpush1.msra.mxu0 %v4240
      %4298 = vmatprep.subr.mxu0 0.0
      %4299 = vmatpush1.msra.mxu0 0.0
      %4300 = vmatprep.subr.mxu0 0.0
      %4301 = vmatpush1.msra.mxu0 0.0
      %4302 = vmatprep.subr.mxu0 0.0
      %4303 = vmatpush1.msra.mxu0 0.0
      %4304 = vmatprep.subr.mxu0 0.0
      %4305 = vmatpush1.msra.mxu0 0.0
      %4306 = vmatprep.subr.mxu0 0.0
      %4307 = vmatpush1.msra.mxu0 0.0
      %4308 = vmatprep.subr.mxu0 0.0
      %4309 = vmatpush1.msra.mxu0 0.0
      %4310 = vmatprep.subr.mxu0 0.0
      %4311 = vmatpush1.msra.mxu0 0.0
      %4312 = vmatprep.subr.mxu0 0.0
      %4313 = vmatpush1.msra.mxu0 0.0
      %4314 = vmatprep.subr.mxu0 0.0
      %4315 = vmatpush1.msra.mxu0 0.0
      %4316 = vmatprep.subr.mxu0 0.0
      %4317 = vmatpush1.msra.mxu0 0.0
      %4318 = vmatprep.subr.mxu0 0.0
      %4319 = vmatpush1.msra.mxu0 0.0
      %4320 = vmatprep.subr.mxu0 0.0
      %4321 = vmatpush1.msra.mxu0 0.0
      %4322 = vmatprep.subr.mxu0 0.0
      %4323 = vmatpush1.msra.mxu0 0.0
      %4324 = vmatprep.subr.mxu0 0.0
      %4325 = vmatpush1.msra.mxu0 0.0
      %4326 = vmatprep.subr.mxu0 0.0
      %4327 = vmatpush1.msra.mxu0 0.0
      %4328 = vmatprep.subr.mxu0 0.0
      %4329 = vmatpush1.msra.mxu0 0.0
      %4330 = vmatprep.mubr.f32.mxu0 0.0
      %4331 = vmatmul.mubr.f32.gmra.mrb[0].mxu0 %v4206
      %v4332 = vpop.f32.mrb[0].mxu0
      %v4333 = vadd.f32 %v4249, %v4332
      %v4334 = vpop.f32.mrb[0].mxu0
      %v4335 = vadd.f32 %v4249, %v4334
      %4336 = vmatprep.mubr.f32.mxu0 0.0
      %4337 = vmatmul.mubr.f32.gmra.mrb[0].mxu0 %v4207
      %v4338 = vpop.f32.mrb[0].mxu0
      %v4339 = vadd.f32 %v4254, %v4338
      %v4340 = vpop.f32.mrb[0].mxu0
      %v4341 = vadd.f32 %v4254, %v4340
      %4342 = vmatprep.mubr.f32.mxu0 0.0
      %4343 = vmatmul.mubr.f32.gmra.mrb[0].mxu0 %v4208
      %v4344 = vpop.f32.mrb[0].mxu0
      %v4345 = vadd.f32 %v4259, %v4344
      %v4346 = vpop.f32.mrb[0].mxu0
      %v4347 = vadd.f32 %v4259, %v4346
      %4348 = vmatprep.mubr.f32.mxu0 0.0
      %4349 = vmatmul.mubr.f32.gmra.mrb[0].mxu0 %v4209
      %v4350 = vpop.f32.mrb[0].mxu0
      %v4351 = vadd.f32 %v4264, %v4350
      %v4352 = vpop.f32.mrb[0].mxu0
      %v4353 = vadd.f32 %v4264, %v4352
      %4354 = vdwg.mxu0
      %4355 = vst [vmem:[%s325] sm:$0xff] %v4333
      %4356 = vst [vmem:[%s325 + $0x8] sm:$0xff] %v4335
      %4357 = vst [vmem:[%s325 + $0x10] sm:$0xff] %v4339
      %4358 = vst [vmem:[%s325 + $0x18] sm:$0xff] %v4341
      %4359 = vst [vmem:[%s325 + $0x20] sm:$0xff] %v4345
      %4360 = vst [vmem:[%s325 + $0x28] sm:$0xff] %v4347
      %4361 = vst [vmem:[%s325 + $0x30] sm:$0xff] %v4351
      %4362 = vst [vmem:[%s325 + $0x38] sm:$0xff] %v4353
      %p4363 = scmp.lt.s32.totalorder %s19, 1
      %s4364 = scalar_select %p4363, %s19, 1
      %s4365 = smul.addr %s4364, 8
      %s4366 = smul.addr %s4365, 8
      %s4367 = scalar_lea.vmem %s8, %s4366
      // Predicated region
      $region53: #{cross_attention.1} parent=51 // pred_check
        %p4368 = pneg %p215
      $region54: #{cross_attention.1} parent=51 // pred_check_branch
        %4370 = sbr.rel (%p4368) target = $region56
      $region55: #{cross_attention.1} parent=51 // pred_region
        _
      $region56: #{cross_attention.1} parent=51 // pred_fallthru
        _
    $region52: #{cross_attention.1} parent=5 // pred_fallthru
      _
    %p4371 = scmp.le.s32.totalorder 2, %s14
    // Predicated region
    $region57: #{cross_attention.1} parent=5 // pred_check
      %p4372 = pneg %p4371
    $region58: #{cross_attention.1} parent=5 // pred_check_branch
      %4374 = sbr.rel (%p4372) target = $region60
    $region59: #{cross_attention.1} parent=5 // pred_region
      %s4375 = ssub.s32 %s14, 2
      // Predicated region
      $region61: #{cross_attention.1} parent=59 // pred_check
        %p4376 = pneg %p221
      $region62: #{cross_attention.1} parent=59 // pred_check_branch
        %4378 = sbr.rel (%p4376) target = $region64
      $region63: #{cross_attention.1} parent=59 // pred_region
        %p4379 = scmp.lt.s32.totalorder %s20, 1
        %s4380 = scalar_select %p4379, %s20, 1
        %s4381 = smul.addr %s4380, 8
        %s4382 = smul.addr %s4381, 8
        %s4383 = scalar_lea.vmem %s8, %s4382
      $region64: #{cross_attention.1} parent=59 // pred_fallthru
        _
    $region60: #{cross_attention.1} parent=5 // pred_fallthru
      _
  $region6: #{cross_attention.1} parent=0 // loop_footer
    %s18 = sadd.s32 1, %s14
  $region7: #{cross_attention.1} parent=0 // loop_footer_branch
    %13 = sbr.rel target = $region3
  $region8: #{cross_attention.1} parent=0 // loop_exit
    _

</llo_original>
